<compile_context>
chip_gen: v7x
topology: tpu7x:2x2x1
jax: 0.10.0
libtpu: 0.0.40
codegen_flags: <defaults>
</compile_context>

<pallas_src>
import functools

import jax
import jax.numpy as jnp
from jax import lax
from jax.experimental import pallas as pl
from jax.experimental.pallas import tpu as pltpu


def birdnet_head_kernel(x_ref, wc_ref, shift_ref, wf_ref, bf_ref, o_ref,
                        pooled_ref, *, inv_hw, tb):
    """One grid step = `tb` batch elements, full spatial extent.

    x_ref:      [tb, Cin, HW]  f32 feature map tile (natural NCHW layout)
    wc_ref:     [Cin, 128]     bf16 conv weight (transposed, BN scale folded in)
    shift_ref:  [1, 128]       f32 folded BN shift
    wf_ref:     [128, NCpad]   f32 fc weight (transposed, zero-padded to 128 lanes)
    bf_ref:     [1, NCpad]     f32 fc bias (zero-padded)
    o_ref:      [tb, NCpad]    f32 logits (padded)
    pooled_ref: [tb, 128]      f32 VMEM scratch for pooled activations
    """
    for b in range(tb):  # static, fully unrolled
        xb = x_ref[b].astype(jnp.bfloat16)                        # [Cin, HW]
        # 1x1 conv == per-pixel channel matmul.  Contract over Cin (dim 0 of
        # both operands): the "transpose" to channels-last happens inside the
        # MXU op instead of as an HBM round-trip in the wrapper.
        yb = lax.dot_general(
            xb, wc_ref[...],
            dimension_numbers=(((0,), (0,)), ((), ())),
            preferred_element_type=jnp.float32)                   # [HW, 128]
        # Eval-mode BatchNorm (scale already folded into wc) + ReLU.
        yb = jnp.maximum(yb + shift_ref[...], 0.0)
        # AdaptiveAvgPool2d(1): sum over spatial, scale by constant 1/HW.
        pooled_ref[pl.ds(b, 1), :] = (
            jnp.sum(yb, axis=0, keepdims=True) * inv_hw)          # [1, 128]

    # Dropout(p=0.3) is identity in eval mode.
    # Linear(128 -> num_classes), padded to a lane-dense 128-wide output.
    o_ref[...] = (
        jnp.dot(pooled_ref[...], wf_ref[...], preferred_element_type=jnp.float32)
        + bf_ref[...])


def _pick_batch_tile(batch, bytes_per_batch, cap_bytes=2 << 20):
    """Batch tile that divides `batch`, keeps the per-step input buffer small
    (~2 MiB -> ~4 MiB double-buffered, v7x-safe), and keeps the output block
    sublane-aligned (tile == batch or tile % 8 == 0)."""
    if batch * bytes_per_batch <= cap_bytes:
        return batch
    tile = 0
    t = 8
    while t < batch:
        if batch % t == 0 and t * bytes_per_batch <= cap_bytes:
            tile = t
        t += 8
    if tile:
        return tile
    t = 8
    while t < batch:          # smallest aligned divisor (may exceed soft cap)
        if batch % t == 0:
            return t
        t += 8
    return batch


def make_params(key, in_features, num_classes, mid=128, eps=1e-5):
    """Deterministic synthetic parameters with the shapes BirdNet.__init__ implies."""
    ks = jax.random.split(key, 8)
    conv_w = jax.random.normal(ks[0], (mid, in_features), jnp.float32) * 0.02
    conv_b = jax.random.normal(ks[1], (mid,), jnp.float32) * 0.02
    bn_gamma = 1.0 + 0.1 * jax.random.normal(ks[2], (mid,), jnp.float32)
    bn_beta = 0.1 * jax.random.normal(ks[3], (mid,), jnp.float32)
    bn_mean = 0.1 * jax.random.normal(ks[4], (mid,), jnp.float32)
    bn_var = jnp.abs(jax.random.normal(ks[5], (mid,), jnp.float32)) + 0.5
    fc_w = jax.random.normal(ks[6], (num_classes, mid), jnp.float32) * 0.05
    fc_b = jax.random.normal(ks[7], (num_classes,), jnp.float32) * 0.05
    return dict(
        conv_w=conv_w, conv_b=conv_b,
        bn_gamma=bn_gamma, bn_beta=bn_beta, bn_mean=bn_mean, bn_var=bn_var,
        fc_w=fc_w, fc_b=fc_b, eps=eps,
    )


@functools.partial(jax.jit, static_argnames=("num_classes",))
def birdnet_forward(x_nchw, params, num_classes=10):
    """BirdNet.forward (eval semantics) as a single Pallas TPU kernel."""
    B, Cin, H, W = x_nchw.shape
    HW = H * W
    mid = params["conv_w"].shape[0]  # 128

    # Fold conv bias + eval-mode BatchNorm: scale into weight, shift separate.
    #   scale*(x@W.T + b - mean) + beta == x@(W.T*scale) + (scale*b + beta - mean*scale)
    scale = params["bn_gamma"] / jnp.sqrt(params["bn_var"] + params["eps"])
    shift = scale * params["conv_b"] + params["bn_beta"] - params["bn_mean"] * scale
    wc = (params["conv_w"].T * scale[None, :]).astype(jnp.bfloat16)   # [Cin, mid]
    shift2d = shift.reshape(1, mid).astype(jnp.float32)

    # Pad the FC output dim to 128 lanes (unmasked stores, clean MXU shape).
    ncp = max(128, ((num_classes + 127) // 128) * 128)
    wf = jnp.zeros((mid, ncp), jnp.float32).at[:, :num_classes].set(params["fc_w"].T)
    bf = jnp.zeros((1, ncp), jnp.float32).at[:, :num_classes].set(params["fc_b"][None, :])

    # Natural NCHW layout; this reshape is free (no HBM transpose pass).
    x = x_nchw.reshape(B, Cin, HW)

    tb = _pick_batch_tile(B, Cin * HW * 4)
    grid = (B // tb,)
    kernel = functools.partial(birdnet_head_kernel, inv_hw=1.0 / HW, tb=tb)

    out_padded = pl.pallas_call(
        kernel,
        out_shape=jax.ShapeDtypeStruct((B, ncp), jnp.float32),
        grid=grid,
        in_specs=[
            pl.BlockSpec((tb, Cin, HW), lambda i: (i, 0, 0)),   # feature map tile
            pl.BlockSpec((Cin, mid), lambda i: (0, 0)),         # resident conv weight
            pl.BlockSpec((1, mid), lambda i: (0, 0)),           # resident BN shift
            pl.BlockSpec((mid, ncp), lambda i: (0, 0)),         # resident fc weight
            pl.BlockSpec((1, ncp), lambda i: (0, 0)),           # resident fc bias
        ],
        out_specs=pl.BlockSpec((tb, ncp), lambda i: (i, 0)),
        scratch_shapes=[pltpu.VMEM((tb, mid), jnp.float32)],
        compiler_params=pltpu.CompilerParams(
            dimension_semantics=("parallel",)),
    )(x, wc, shift2d, wf, bf)

    return out_padded[:, :num_classes]


def birdnet_reference(x_nchw, params, num_classes):
    """Pure-JAX f32 reference of BirdNet.forward (eval) for a sanity check."""
    B, Cin, H, W = x_nchw.shape
    x = jnp.transpose(x_nchw, (0, 2, 3, 1)).reshape(B * H * W, Cin)
    y = x @ params["conv_w"].T + params["conv_b"]
    scale = params["bn_gamma"] / jnp.sqrt(params["bn_var"] + params["eps"])
    y = scale * (y - params["bn_mean"]) + params["bn_beta"]
    y = jnp.maximum(y, 0.0)
    pooled = jnp.mean(y.reshape(B, H * W, -1), axis=1)
    return pooled @ params["fc_w"].T + params["fc_b"]


if __name__ == "__main__":
    key = jax.random.PRNGKey(0)
    k_x, k_p = jax.random.split(key)

    # Small shapes consistent with the module: 1x1 conv over an
    # [B, in_features, H, W] feature map.  B=16 gives a 2-step grid (tb=8)
    # so the batch-tiled pipeline is actually exercised.
    B, Cin, H, W = 16, 256, 16, 16
    NUM_CLASSES = 10

    x = jax.random.normal(k_x, (B, Cin, H, W), jnp.float32)
    params = make_params(k_p, in_features=Cin, num_classes=NUM_CLASSES)

    out = jax.block_until_ready(birdnet_forward(x, params, num_classes=NUM_CLASSES))
    ref = birdnet_reference(x, params, NUM_CLASSES)

    assert out.shape == (B, NUM_CLASSES)
    assert jnp.allclose(out, ref, atol=2e-2, rtol=2e-2), "mismatch vs JAX reference"

    print("KERNEL_OK")
</pallas_src>

<mosaic_0001>
module attributes {stable_mosaic.version = 11 : i64} {
  func.func @birdnet_head_kernel(%arg0: i32, %arg1: memref<8x256x256xf32, #tpu.memory_space<vmem>>, %arg2: memref<256x128xbf16, #tpu.memory_space<vmem>>, %arg3: memref<1x128xf32, #tpu.memory_space<vmem>>, %arg4: memref<128x128xf32, #tpu.memory_space<vmem>>, %arg5: memref<1x128xf32, #tpu.memory_space<vmem>>, %arg6: memref<8x128xf32, #tpu.memory_space<vmem>>, %arg7: memref<8x128xf32, #tpu.memory_space<vmem>>) attributes {dimension_semantics = [#tpu.dimension_semantics<parallel>], iteration_bounds = array<i64: 2>, scalar_prefetch = 0 : i64, scratch_operands = 1 : i64, tpu.core_type = #tpu.core_type<tc>, window_params = [{transform_indices = @transform_0, window_bounds = array<i64: 8, 256, 256>}, {pipeline_mode = #tpu.pipeline_mode<synchronous>, transform_indices = @transform_1, window_bounds = array<i64: 256, 128>}, {pipeline_mode = #tpu.pipeline_mode<synchronous>, transform_indices = @transform_2, window_bounds = array<i64: 1, 128>}, {pipeline_mode = #tpu.pipeline_mode<synchronous>, transform_indices = @transform_3, window_bounds = array<i64: 128, 128>}, {pipeline_mode = #tpu.pipeline_mode<synchronous>, transform_indices = @transform_4, window_bounds = array<i64: 1, 128>}, {transform_indices = @transform_5, window_bounds = array<i64: 8, 128>}]} {
    %c0 = arith.constant 0 : index
    %c0_0 = arith.constant 0 : index
    %c0_1 = arith.constant 0 : index
    %0 = vector.load %arg1[%c0, %c0_0, %c0_1] : memref<8x256x256xf32, #tpu.memory_space<vmem>>, vector<1x256x256xf32>
    %1 = vector.shape_cast %0 : vector<1x256x256xf32> to vector<256x256xf32>
    %2 = arith.truncf %1 : vector<256x256xf32> to vector<256x256xbf16>
    %c0_2 = arith.constant 0 : index
    %c0_3 = arith.constant 0 : index
    %3 = vector.load %arg2[%c0_2, %c0_3] : memref<256x128xbf16, #tpu.memory_space<vmem>>, vector<256x128xbf16>
    %cst = arith.constant dense<0.000000e+00> : vector<256x128xf32>
    %4 = tpu.matmul %2, %3, %cst {dimension_numbers = #tpu.dot_dimension_numbers<[0], [0], [1], [1], [0, 1, 1, 1], [], []>} : vector<256x256xbf16>, vector<256x128xbf16>, vector<256x128xf32> -> vector<256x128xf32>
    %c0_4 = arith.constant 0 : index
    %c0_5 = arith.constant 0 : index
    %5 = vector.load %arg3[%c0_4, %c0_5] : memref<1x128xf32, #tpu.memory_space<vmem>>, vector<1x128xf32>
    %6 = vector.broadcast %5 : vector<1x128xf32> to vector<256x128xf32>
    %7 = arith.addf %4, %6 : vector<256x128xf32>
    %cst_6 = arith.constant 0.000000e+00 : f32
    %8 = vector.broadcast %cst_6 : f32 to vector<256x128xf32>
    %9 = arith.maximumf %7, %8 : vector<256x128xf32>
    %cst_7 = arith.constant dense<0.000000e+00> : vector<128xf32>
    %10 = vector.multi_reduction <add>, %9, %cst_7 [0] : vector<256x128xf32> to vector<128xf32>
    %11 = vector.shape_cast %10 : vector<128xf32> to vector<1x128xf32>
    %cst_8 = arith.constant 3.906250e-03 : f32
    %12 = vector.broadcast %cst_8 : f32 to vector<1x128xf32>
    %13 = arith.mulf %11, %12 : vector<1x128xf32>
    %c0_9 = arith.constant 0 : index
    %c0_10 = arith.constant 0 : index
    %14 = vector.load %arg7[%c0_9, %c0_10] : memref<8x128xf32, #tpu.memory_space<vmem>>, vector<1x128xf32>
    tpu.vector_store %arg7[%c0_9, %c0_10], %13 {strides = array<i32>} : memref<8x128xf32, #tpu.memory_space<vmem>>, vector<1x128xf32>,
    %c1 = arith.constant 1 : index
    %c0_11 = arith.constant 0 : index
    %c0_12 = arith.constant 0 : index
    %15 = vector.load %arg1[%c1, %c0_11, %c0_12] : memref<8x256x256xf32, #tpu.memory_space<vmem>>, vector<1x256x256xf32>
    %16 = vector.shape_cast %15 : vector<1x256x256xf32> to vector<256x256xf32>
    %17 = arith.truncf %16 : vector<256x256xf32> to vector<256x256xbf16>
    %c0_13 = arith.constant 0 : index
    %c0_14 = arith.constant 0 : index
    %18 = vector.load %arg2[%c0_13, %c0_14] : memref<256x128xbf16, #tpu.memory_space<vmem>>, vector<256x128xbf16>
    %cst_15 = arith.constant dense<0.000000e+00> : vector<256x128xf32>
    %19 = tpu.matmul %17, %18, %cst_15 {dimension_numbers = #tpu.dot_dimension_numbers<[0], [0], [1], [1], [0, 1, 1, 1], [], []>} : vector<256x256xbf16>, vector<256x128xbf16>, vector<256x128xf32> -> vector<256x128xf32>
    %c0_16 = arith.constant 0 : index
    %c0_17 = arith.constant 0 : index
    %20 = vector.load %arg3[%c0_16, %c0_17] : memref<1x128xf32, #tpu.memory_space<vmem>>, vector<1x128xf32>
    %21 = vector.broadcast %20 : vector<1x128xf32> to vector<256x128xf32>
    %22 = arith.addf %19, %21 : vector<256x128xf32>
    %cst_18 = arith.constant 0.000000e+00 : f32
    %23 = vector.broadcast %cst_18 : f32 to vector<256x128xf32>
    %24 = arith.maximumf %22, %23 : vector<256x128xf32>
    %cst_19 = arith.constant dense<0.000000e+00> : vector<128xf32>
    %25 = vector.multi_reduction <add>, %24, %cst_19 [0] : vector<256x128xf32> to vector<128xf32>
    %26 = vector.shape_cast %25 : vector<128xf32> to vector<1x128xf32>
    %cst_20 = arith.constant 3.906250e-03 : f32
    %27 = vector.broadcast %cst_20 : f32 to vector<1x128xf32>
    %28 = arith.mulf %26, %27 : vector<1x128xf32>
    %c1_21 = arith.constant 1 : index
    %c0_22 = arith.constant 0 : index
    %29 = vector.load %arg7[%c1_21, %c0_22] : memref<8x128xf32, #tpu.memory_space<vmem>>, vector<1x128xf32>
    tpu.vector_store %arg7[%c1_21, %c0_22], %28 {strides = array<i32>} : memref<8x128xf32, #tpu.memory_space<vmem>>, vector<1x128xf32>,
    %c2 = arith.constant 2 : index
    %c0_23 = arith.constant 0 : index
    %c0_24 = arith.constant 0 : index
    %30 = vector.load %arg1[%c2, %c0_23, %c0_24] : memref<8x256x256xf32, #tpu.memory_space<vmem>>, vector<1x256x256xf32>
    %31 = vector.shape_cast %30 : vector<1x256x256xf32> to vector<256x256xf32>
    %32 = arith.truncf %31 : vector<256x256xf32> to vector<256x256xbf16>
    %c0_25 = arith.constant 0 : index
    %c0_26 = arith.constant 0 : index
    %33 = vector.load %arg2[%c0_25, %c0_26] : memref<256x128xbf16, #tpu.memory_space<vmem>>, vector<256x128xbf16>
    %cst_27 = arith.constant dense<0.000000e+00> : vector<256x128xf32>
    %34 = tpu.matmul %32, %33, %cst_27 {dimension_numbers = #tpu.dot_dimension_numbers<[0], [0], [1], [1], [0, 1, 1, 1], [], []>} : vector<256x256xbf16>, vector<256x128xbf16>, vector<256x128xf32> -> vector<256x128xf32>
    %c0_28 = arith.constant 0 : index
    %c0_29 = arith.constant 0 : index
    %35 = vector.load %arg3[%c0_28, %c0_29] : memref<1x128xf32, #tpu.memory_space<vmem>>, vector<1x128xf32>
    %36 = vector.broadcast %35 : vector<1x128xf32> to vector<256x128xf32>
    %37 = arith.addf %34, %36 : vector<256x128xf32>
    %cst_30 = arith.constant 0.000000e+00 : f32
    %38 = vector.broadcast %cst_30 : f32 to vector<256x128xf32>
    %39 = arith.maximumf %37, %38 : vector<256x128xf32>
    %cst_31 = arith.constant dense<0.000000e+00> : vector<128xf32>
    %40 = vector.multi_reduction <add>, %39, %cst_31 [0] : vector<256x128xf32> to vector<128xf32>
    %41 = vector.shape_cast %40 : vector<128xf32> to vector<1x128xf32>
    %cst_32 = arith.constant 3.906250e-03 : f32
    %42 = vector.broadcast %cst_32 : f32 to vector<1x128xf32>
    %43 = arith.mulf %41, %42 : vector<1x128xf32>
    %c2_33 = arith.constant 2 : index
    %c0_34 = arith.constant 0 : index
    %44 = vector.load %arg7[%c2_33, %c0_34] : memref<8x128xf32, #tpu.memory_space<vmem>>, vector<1x128xf32>
    tpu.vector_store %arg7[%c2_33, %c0_34], %43 {strides = array<i32>} : memref<8x128xf32, #tpu.memory_space<vmem>>, vector<1x128xf32>,
    %c3 = arith.constant 3 : index
    %c0_35 = arith.constant 0 : index
    %c0_36 = arith.constant 0 : index
    %45 = vector.load %arg1[%c3, %c0_35, %c0_36] : memref<8x256x256xf32, #tpu.memory_space<vmem>>, vector<1x256x256xf32>
    %46 = vector.shape_cast %45 : vector<1x256x256xf32> to vector<256x256xf32>
    %47 = arith.truncf %46 : vector<256x256xf32> to vector<256x256xbf16>
    %c0_37 = arith.constant 0 : index
    %c0_38 = arith.constant 0 : index
    %48 = vector.load %arg2[%c0_37, %c0_38] : memref<256x128xbf16, #tpu.memory_space<vmem>>, vector<256x128xbf16>
    %cst_39 = arith.constant dense<0.000000e+00> : vector<256x128xf32>
    %49 = tpu.matmul %47, %48, %cst_39 {dimension_numbers = #tpu.dot_dimension_numbers<[0], [0], [1], [1], [0, 1, 1, 1], [], []>} : vector<256x256xbf16>, vector<256x128xbf16>, vector<256x128xf32> -> vector<256x128xf32>
    %c0_40 = arith.constant 0 : index
    %c0_41 = arith.constant 0 : index
    %50 = vector.load %arg3[%c0_40, %c0_41] : memref<1x128xf32, #tpu.memory_space<vmem>>, vector<1x128xf32>
    %51 = vector.broadcast %50 : vector<1x128xf32> to vector<256x128xf32>
    %52 = arith.addf %49, %51 : vector<256x128xf32>
    %cst_42 = arith.constant 0.000000e+00 : f32
    %53 = vector.broadcast %cst_42 : f32 to vector<256x128xf32>
    %54 = arith.maximumf %52, %53 : vector<256x128xf32>
    %cst_43 = arith.constant dense<0.000000e+00> : vector<128xf32>
    %55 = vector.multi_reduction <add>, %54, %cst_43 [0] : vector<256x128xf32> to vector<128xf32>
    %56 = vector.shape_cast %55 : vector<128xf32> to vector<1x128xf32>
    %cst_44 = arith.constant 3.906250e-03 : f32
    %57 = vector.broadcast %cst_44 : f32 to vector<1x128xf32>
    %58 = arith.mulf %56, %57 : vector<1x128xf32>
    %c3_45 = arith.constant 3 : index
    %c0_46 = arith.constant 0 : index
    %59 = vector.load %arg7[%c3_45, %c0_46] : memref<8x128xf32, #tpu.memory_space<vmem>>, vector<1x128xf32>
    tpu.vector_store %arg7[%c3_45, %c0_46], %58 {strides = array<i32>} : memref<8x128xf32, #tpu.memory_space<vmem>>, vector<1x128xf32>,
    %c4 = arith.constant 4 : index
    %c0_47 = arith.constant 0 : index
    %c0_48 = arith.constant 0 : index
    %60 = vector.load %arg1[%c4, %c0_47, %c0_48] : memref<8x256x256xf32, #tpu.memory_space<vmem>>, vector<1x256x256xf32>
    %61 = vector.shape_cast %60 : vector<1x256x256xf32> to vector<256x256xf32>
    %62 = arith.truncf %61 : vector<256x256xf32> to vector<256x256xbf16>
    %c0_49 = arith.constant 0 : index
    %c0_50 = arith.constant 0 : index
    %63 = vector.load %arg2[%c0_49, %c0_50] : memref<256x128xbf16, #tpu.memory_space<vmem>>, vector<256x128xbf16>
    %cst_51 = arith.constant dense<0.000000e+00> : vector<256x128xf32>
    %64 = tpu.matmul %62, %63, %cst_51 {dimension_numbers = #tpu.dot_dimension_numbers<[0], [0], [1], [1], [0, 1, 1, 1], [], []>} : vector<256x256xbf16>, vector<256x128xbf16>, vector<256x128xf32> -> vector<256x128xf32>
    %c0_52 = arith.constant 0 : index
    %c0_53 = arith.constant 0 : index
    %65 = vector.load %arg3[%c0_52, %c0_53] : memref<1x128xf32, #tpu.memory_space<vmem>>, vector<1x128xf32>
    %66 = vector.broadcast %65 : vector<1x128xf32> to vector<256x128xf32>
    %67 = arith.addf %64, %66 : vector<256x128xf32>
    %cst_54 = arith.constant 0.000000e+00 : f32
    %68 = vector.broadcast %cst_54 : f32 to vector<256x128xf32>
    %69 = arith.maximumf %67, %68 : vector<256x128xf32>
    %cst_55 = arith.constant dense<0.000000e+00> : vector<128xf32>
    %70 = vector.multi_reduction <add>, %69, %cst_55 [0] : vector<256x128xf32> to vector<128xf32>
    %71 = vector.shape_cast %70 : vector<128xf32> to vector<1x128xf32>
    %cst_56 = arith.constant 3.906250e-03 : f32
    %72 = vector.broadcast %cst_56 : f32 to vector<1x128xf32>
    %73 = arith.mulf %71, %72 : vector<1x128xf32>
    %c4_57 = arith.constant 4 : index
    %c0_58 = arith.constant 0 : index
    %74 = vector.load %arg7[%c4_57, %c0_58] : memref<8x128xf32, #tpu.memory_space<vmem>>, vector<1x128xf32>
    tpu.vector_store %arg7[%c4_57, %c0_58], %73 {strides = array<i32>} : memref<8x128xf32, #tpu.memory_space<vmem>>, vector<1x128xf32>,
    %c5 = arith.constant 5 : index
    %c0_59 = arith.constant 0 : index
    %c0_60 = arith.constant 0 : index
    %75 = vector.load %arg1[%c5, %c0_59, %c0_60] : memref<8x256x256xf32, #tpu.memory_space<vmem>>, vector<1x256x256xf32>
    %76 = vector.shape_cast %75 : vector<1x256x256xf32> to vector<256x256xf32>
    %77 = arith.truncf %76 : vector<256x256xf32> to vector<256x256xbf16>
    %c0_61 = arith.constant 0 : index
    %c0_62 = arith.constant 0 : index
    %78 = vector.load %arg2[%c0_61, %c0_62] : memref<256x128xbf16, #tpu.memory_space<vmem>>, vector<256x128xbf16>
    %cst_63 = arith.constant dense<0.000000e+00> : vector<256x128xf32>
    %79 = tpu.matmul %77, %78, %cst_63 {dimension_numbers = #tpu.dot_dimension_numbers<[0], [0], [1], [1], [0, 1, 1, 1], [], []>} : vector<256x256xbf16>, vector<256x128xbf16>, vector<256x128xf32> -> vector<256x128xf32>
    %c0_64 = arith.constant 0 : index
    %c0_65 = arith.constant 0 : index
    %80 = vector.load %arg3[%c0_64, %c0_65] : memref<1x128xf32, #tpu.memory_space<vmem>>, vector<1x128xf32>
    %81 = vector.broadcast %80 : vector<1x128xf32> to vector<256x128xf32>
    %82 = arith.addf %79, %81 : vector<256x128xf32>
    %cst_66 = arith.constant 0.000000e+00 : f32
    %83 = vector.broadcast %cst_66 : f32 to vector<256x128xf32>
    %84 = arith.maximumf %82, %83 : vector<256x128xf32>
    %cst_67 = arith.constant dense<0.000000e+00> : vector<128xf32>
    %85 = vector.multi_reduction <add>, %84, %cst_67 [0] : vector<256x128xf32> to vector<128xf32>
    %86 = vector.shape_cast %85 : vector<128xf32> to vector<1x128xf32>
    %cst_68 = arith.constant 3.906250e-03 : f32
    %87 = vector.broadcast %cst_68 : f32 to vector<1x128xf32>
    %88 = arith.mulf %86, %87 : vector<1x128xf32>
    %c5_69 = arith.constant 5 : index
    %c0_70 = arith.constant 0 : index
    %89 = vector.load %arg7[%c5_69, %c0_70] : memref<8x128xf32, #tpu.memory_space<vmem>>, vector<1x128xf32>
    tpu.vector_store %arg7[%c5_69, %c0_70], %88 {strides = array<i32>} : memref<8x128xf32, #tpu.memory_space<vmem>>, vector<1x128xf32>,
    %c6 = arith.constant 6 : index
    %c0_71 = arith.constant 0 : index
    %c0_72 = arith.constant 0 : index
    %90 = vector.load %arg1[%c6, %c0_71, %c0_72] : memref<8x256x256xf32, #tpu.memory_space<vmem>>, vector<1x256x256xf32>
    %91 = vector.shape_cast %90 : vector<1x256x256xf32> to vector<256x256xf32>
    %92 = arith.truncf %91 : vector<256x256xf32> to vector<256x256xbf16>
    %c0_73 = arith.constant 0 : index
    %c0_74 = arith.constant 0 : index
    %93 = vector.load %arg2[%c0_73, %c0_74] : memref<256x128xbf16, #tpu.memory_space<vmem>>, vector<256x128xbf16>
    %cst_75 = arith.constant dense<0.000000e+00> : vector<256x128xf32>
    %94 = tpu.matmul %92, %93, %cst_75 {dimension_numbers = #tpu.dot_dimension_numbers<[0], [0], [1], [1], [0, 1, 1, 1], [], []>} : vector<256x256xbf16>, vector<256x128xbf16>, vector<256x128xf32> -> vector<256x128xf32>
    %c0_76 = arith.constant 0 : index
    %c0_77 = arith.constant 0 : index
    %95 = vector.load %arg3[%c0_76, %c0_77] : memref<1x128xf32, #tpu.memory_space<vmem>>, vector<1x128xf32>
    %96 = vector.broadcast %95 : vector<1x128xf32> to vector<256x128xf32>
    %97 = arith.addf %94, %96 : vector<256x128xf32>
    %cst_78 = arith.constant 0.000000e+00 : f32
    %98 = vector.broadcast %cst_78 : f32 to vector<256x128xf32>
    %99 = arith.maximumf %97, %98 : vector<256x128xf32>
    %cst_79 = arith.constant dense<0.000000e+00> : vector<128xf32>
    %100 = vector.multi_reduction <add>, %99, %cst_79 [0] : vector<256x128xf32> to vector<128xf32>
    %101 = vector.shape_cast %100 : vector<128xf32> to vector<1x128xf32>
    %cst_80 = arith.constant 3.906250e-03 : f32
    %102 = vector.broadcast %cst_80 : f32 to vector<1x128xf32>
    %103 = arith.mulf %101, %102 : vector<1x128xf32>
    %c6_81 = arith.constant 6 : index
    %c0_82 = arith.constant 0 : index
    %104 = vector.load %arg7[%c6_81, %c0_82] : memref<8x128xf32, #tpu.memory_space<vmem>>, vector<1x128xf32>
    tpu.vector_store %arg7[%c6_81, %c0_82], %103 {strides = array<i32>} : memref<8x128xf32, #tpu.memory_space<vmem>>, vector<1x128xf32>,
    %c7 = arith.constant 7 : index
    %c0_83 = arith.constant 0 : index
    %c0_84 = arith.constant 0 : index
    %105 = vector.load %arg1[%c7, %c0_83, %c0_84] : memref<8x256x256xf32, #tpu.memory_space<vmem>>, vector<1x256x256xf32>
    %106 = vector.shape_cast %105 : vector<1x256x256xf32> to vector<256x256xf32>
    %107 = arith.truncf %106 : vector<256x256xf32> to vector<256x256xbf16>
    %c0_85 = arith.constant 0 : index
    %c0_86 = arith.constant 0 : index
    %108 = vector.load %arg2[%c0_85, %c0_86] : memref<256x128xbf16, #tpu.memory_space<vmem>>, vector<256x128xbf16>
    %cst_87 = arith.constant dense<0.000000e+00> : vector<256x128xf32>
    %109 = tpu.matmul %107, %108, %cst_87 {dimension_numbers = #tpu.dot_dimension_numbers<[0], [0], [1], [1], [0, 1, 1, 1], [], []>} : vector<256x256xbf16>, vector<256x128xbf16>, vector<256x128xf32> -> vector<256x128xf32>
    %c0_88 = arith.constant 0 : index
    %c0_89 = arith.constant 0 : index
    %110 = vector.load %arg3[%c0_88, %c0_89] : memref<1x128xf32, #tpu.memory_space<vmem>>, vector<1x128xf32>
    %111 = vector.broadcast %110 : vector<1x128xf32> to vector<256x128xf32>
    %112 = arith.addf %109, %111 : vector<256x128xf32>
    %cst_90 = arith.constant 0.000000e+00 : f32
    %113 = vector.broadcast %cst_90 : f32 to vector<256x128xf32>
    %114 = arith.maximumf %112, %113 : vector<256x128xf32>
    %cst_91 = arith.constant dense<0.000000e+00> : vector<128xf32>
    %115 = vector.multi_reduction <add>, %114, %cst_91 [0] : vector<256x128xf32> to vector<128xf32>
    %116 = vector.shape_cast %115 : vector<128xf32> to vector<1x128xf32>
    %cst_92 = arith.constant 3.906250e-03 : f32
    %117 = vector.broadcast %cst_92 : f32 to vector<1x128xf32>
    %118 = arith.mulf %116, %117 : vector<1x128xf32>
    %c7_93 = arith.constant 7 : index
    %c0_94 = arith.constant 0 : index
    %119 = vector.load %arg7[%c7_93, %c0_94] : memref<8x128xf32, #tpu.memory_space<vmem>>, vector<1x128xf32>
    tpu.vector_store %arg7[%c7_93, %c0_94], %118 {strides = array<i32>} : memref<8x128xf32, #tpu.memory_space<vmem>>, vector<1x128xf32>,
    %c0_95 = arith.constant 0 : index
    %c0_96 = arith.constant 0 : index
    %120 = vector.load %arg7[%c0_95, %c0_96] : memref<8x128xf32, #tpu.memory_space<vmem>>, vector<8x128xf32>
    %c0_97 = arith.constant 0 : index
    %c0_98 = arith.constant 0 : index
    %121 = vector.load %arg4[%c0_97, %c0_98] : memref<128x128xf32, #tpu.memory_space<vmem>>, vector<128x128xf32>
    %cst_99 = arith.constant dense<0.000000e+00> : vector<8x128xf32>
    %122 = tpu.matmul %120, %121, %cst_99 {dimension_numbers = #tpu.dot_dimension_numbers<[1], [0], [0], [1], [0, 0, 1, 1], [], []>} : vector<8x128xf32>, vector<128x128xf32>, vector<8x128xf32> -> vector<8x128xf32>
    %c0_100 = arith.constant 0 : index
    %c0_101 = arith.constant 0 : index
    %123 = vector.load %arg5[%c0_100, %c0_101] : memref<1x128xf32, #tpu.memory_space<vmem>>, vector<1x128xf32>
    %124 = vector.broadcast %123 : vector<1x128xf32> to vector<8x128xf32>
    %125 = arith.addf %122, %124 : vector<8x128xf32>
    %c0_102 = arith.constant 0 : index
    %c0_103 = arith.constant 0 : index
    %126 = vector.load %arg6[%c0_102, %c0_103] : memref<8x128xf32, #tpu.memory_space<vmem>>, vector<8x128xf32>
    tpu.vector_store %arg6[%c0_102, %c0_103], %125 {strides = array<i32>} : memref<8x128xf32, #tpu.memory_space<vmem>>, vector<8x128xf32>,
    return
  }
  func.func @transform_0(%arg0: i32) -> (i32, i32, i32) {
    %c0_i32 = arith.constant 0 : i32
    %c0_i32_0 = arith.constant 0 : i32
    %c0_i32_1 = arith.constant 0 : i32
    return %arg0, %c0_i32, %c0_i32_0 : i32, i32, i32
  }
  func.func @transform_1(%arg0: i32) -> (i32, i32) {
    %c0_i32 = arith.constant 0 : i32
    %c0_i32_0 = arith.constant 0 : i32
    %c0_i32_1 = arith.constant 0 : i32
    return %c0_i32, %c0_i32_0 : i32, i32
  }
  func.func @transform_2(%arg0: i32) -> (i32, i32) {
    %c0_i32 = arith.constant 0 : i32
    %c0_i32_0 = arith.constant 0 : i32
    %c0_i32_1 = arith.constant 0 : i32
    return %c0_i32, %c0_i32_0 : i32, i32
  }
  func.func @transform_3(%arg0: i32) -> (i32, i32) {
    %c0_i32 = arith.constant 0 : i32
    %c0_i32_0 = arith.constant 0 : i32
    %c0_i32_1 = arith.constant 0 : i32
    return %c0_i32, %c0_i32_0 : i32, i32
  }
  func.func @transform_4(%arg0: i32) -> (i32, i32) {
    %c0_i32 = arith.constant 0 : i32
    %c0_i32_0 = arith.constant 0 : i32
    %c0_i32_1 = arith.constant 0 : i32
    return %c0_i32, %c0_i32_0 : i32, i32
  }
  func.func @transform_5(%arg0: i32) -> (i32, i32) {
    %c0_i32 = arith.constant 0 : i32
    %c0_i32_0 = arith.constant 0 : i32
    return %arg0, %c0_i32 : i32, i32
  }
}

</mosaic_0001>

<llo_original>
// kernel: birdnet_forward.1
$region0: #{birdnet_forward.1}
  #allocation0 [shape = 'u32[]', space=smem, size = 0x4, offset = 0x4, fixed_abs, tag = 'smem constant byte address 0x4 - core index']
  #allocation1 [shape = 'u32[144,128]{1,0:T(1,128)}', space=vmem, size = 0x12000, scoped, tag = 'internal scratch']
  #allocation2 [shape = 'f32[8,128]{1,0:T(8,128)}', space=vmem, size = 0x1000, scoped, tag = 'scratch operand']
  %s0 = inlined_call_operand.vmem [shape: f32[16,256,256], index: 0, kind: input, shape index: {}]
  %s1 = inlined_call_operand.vmem [shape: bf16[256,128], index: 1, kind: input, shape index: {}]
  %s2 = inlined_call_operand.vmem [shape: f32[1,128], index: 2, kind: input, shape index: {}]
  %s3 = inlined_call_operand.vmem [shape: f32[128,128], index: 3, kind: input, shape index: {}]
  %s4 = inlined_call_operand.vmem [shape: f32[1,128], index: 4, kind: input, shape index: {}]
  %s5 = inlined_call_operand.hbm [shape: f32[16,128], index: 5, kind: output, shape index: {}]
  %s6 = sld [smem:[#allocation0]]
  $region53: #{birdnet_forward.1} parent=0
    _
  %s8 = ssub.s32 1, %s6
  %s9 = scalar_select 0, %s8, %s6
  $region1: #{birdnet_forward.1} parent=0
    #allocation3 [shape = 'u8[8192]{0}', space=vmem, size = 0x2000, scoped, tag = 'output window, operand 0']
    #allocation4 [shape = 's32[2]{0}', space=sflag, size = 0x8, scoped, tag = 'scoped memory for birdnet_forward.1']
    %10 = vsyncpa [#allocation4], 0
    %s11 = scalar_lea.sflag [#allocation4], 1
    %12 = vsyncpa %s11, 0
    loop: start=0, step=1, limit=4
    $region2: #{birdnet_forward.1} parent=1 // loop_pre_header
      _
    $region3: #{birdnet_forward.1} parent=1 // loop_header
      %s14 = sphi 0, %s18
      %p15 = scmp.ge.s32.totalorder %s14, 4
      %s24 = sphi 0, %s26
      %s27 = sphi 0, %s24
      %s28 = sphi 0, %s27
      %s44 = sphi 0, %s28
      %s48 = sphi 0, %s48
      %s50 = sphi 0, %s48
      %s51 = sphi 0, %s50
      %s65 = sphi 0, %s51
      %s69 = sphi 0, %s69
      %s71 = sphi 0, %s69
      %s72 = sphi 0, %s71
      %s86 = sphi 0, %s72
      %s90 = sphi 0, %s90
      %s92 = sphi 0, %s90
      %s93 = sphi 0, %s92
      %s107 = sphi 0, %s93
      %s111 = sphi 0, %s111
      %s113 = sphi 0, %s111
      %s114 = sphi 0, %s113
      %s128 = sphi 0, %s114
      %s134 = sphi 0, %s136
      %s137 = sphi 0, %s134
      %s138 = sphi 0, %s137
      %s154 = sphi 0, %s138
    $region4: #{birdnet_forward.1} parent=1 // loop_header_branch
      %17 = sbr.rel (%p15) target = $region8
    $region5: #{birdnet_forward.1} parent=1 // loop_body
      %s19 = ssub.s32 %s14, 1
      %s20 = ssub.s32 %s14, 2
      %s21 = sadd.s32 %s14, 1
      %s22 = ssub.s32 %s14, %s21
      %p23 = scmp.eq.s32.totalorder %s22, 0
      %s25 = sadd.s32 %s24, 1
      %s26 = scalar_select %p23, %s24, %s25
      %p29 = pneg %p23
      %p30 = scmp.eq.s32.totalorder %s14, 1
      %p31 = por %p29, %p30
      %p32 = scmp.ne.s32.totalorder %s24, %s27
      %p33 = scmp.eq.s32.totalorder %s14, 0
      %p34 = por %p32, %p33
      %p35 = scmp.ne.s32.totalorder %s24, %s27
      %p36 = scmp.eq.s32.totalorder %s19, 1
      %p37 = por %p35, %p36
      %p38 = scmp.ne.s32.totalorder %s27, %s28
      %p39 = scmp.eq.s32.totalorder %s19, 0
      %p40 = por %p38, %p39
      %p41 = scmp.ne.s32.totalorder %s27, %s28
      %p42 = scmp.eq.s32.totalorder %s20, 1
      %p43 = por %p41, %p42
      %p45 = scmp.ne.s32.totalorder %s28, %s44
      %p46 = scmp.eq.s32.totalorder %s20, 0
      %p47 = por %p45, %p46
      %s49 = sadd.s32 %s48, 1
      %p52 = scmp.eq.s32.totalorder %s14, 1
      %p53 = scmp.ne.s32.totalorder %s48, %s50
      %p54 = scmp.eq.s32.totalorder %s14, 0
      %p55 = por %p53, %p54
      %p56 = scmp.ne.s32.totalorder %s48, %s50
      %p57 = scmp.eq.s32.totalorder %s19, 1
      %p58 = por %p56, %p57
      %p59 = scmp.ne.s32.totalorder %s50, %s51
      %p60 = scmp.eq.s32.totalorder %s19, 0
      %p61 = por %p59, %p60
      %p62 = scmp.ne.s32.totalorder %s50, %s51
      %p63 = scmp.eq.s32.totalorder %s20, 1
      %p64 = por %p62, %p63
      %p66 = scmp.ne.s32.totalorder %s51, %s65
      %p67 = scmp.eq.s32.totalorder %s20, 0
      %p68 = por %p66, %p67
      %s70 = sadd.s32 %s69, 1
      %p73 = scmp.eq.s32.totalorder %s14, 1
      %p74 = scmp.ne.s32.totalorder %s69, %s71
      %p75 = scmp.eq.s32.totalorder %s14, 0
      %p76 = por %p74, %p75
      %p77 = scmp.ne.s32.totalorder %s69, %s71
      %p78 = scmp.eq.s32.totalorder %s19, 1
      %p79 = por %p77, %p78
      %p80 = scmp.ne.s32.totalorder %s71, %s72
      %p81 = scmp.eq.s32.totalorder %s19, 0
      %p82 = por %p80, %p81
      %p83 = scmp.ne.s32.totalorder %s71, %s72
      %p84 = scmp.eq.s32.totalorder %s20, 1
      %p85 = por %p83, %p84
      %p87 = scmp.ne.s32.totalorder %s72, %s86
      %p88 = scmp.eq.s32.totalorder %s20, 0
      %p89 = por %p87, %p88
      %s91 = sadd.s32 %s90, 1
      %p94 = scmp.eq.s32.totalorder %s14, 1
      %p95 = scmp.ne.s32.totalorder %s90, %s92
      %p96 = scmp.eq.s32.totalorder %s14, 0
      %p97 = por %p95, %p96
      %p98 = scmp.ne.s32.totalorder %s90, %s92
      %p99 = scmp.eq.s32.totalorder %s19, 1
      %p100 = por %p98, %p99
      %p101 = scmp.ne.s32.totalorder %s92, %s93
      %p102 = scmp.eq.s32.totalorder %s19, 0
      %p103 = por %p101, %p102
      %p104 = scmp.ne.s32.totalorder %s92, %s93
      %p105 = scmp.eq.s32.totalorder %s20, 1
      %p106 = por %p104, %p105
      %p108 = scmp.ne.s32.totalorder %s93, %s107
      %p109 = scmp.eq.s32.totalorder %s20, 0
      %p110 = por %p108, %p109
      %s112 = sadd.s32 %s111, 1
      %p115 = scmp.eq.s32.totalorder %s14, 1
      %p116 = scmp.ne.s32.totalorder %s111, %s113
      %p117 = scmp.eq.s32.totalorder %s14, 0
      %p118 = por %p116, %p117
      %p119 = scmp.ne.s32.totalorder %s111, %s113
      %p120 = scmp.eq.s32.totalorder %s19, 1
      %p121 = por %p119, %p120
      %p122 = scmp.ne.s32.totalorder %s113, %s114
      %p123 = scmp.eq.s32.totalorder %s19, 0
      %p124 = por %p122, %p123
      %p125 = scmp.ne.s32.totalorder %s113, %s114
      %p126 = scmp.eq.s32.totalorder %s20, 1
      %p127 = por %p125, %p126
      %p129 = scmp.ne.s32.totalorder %s114, %s128
      %p130 = scmp.eq.s32.totalorder %s20, 0
      %p131 = por %p129, %p130
      %s132 = ssub.s32 %s14, %s21
      %p133 = scmp.eq.s32.totalorder %s132, 0
      %s135 = sadd.s32 %s134, 1
      %s136 = scalar_select %p133, %s134, %s135
      %p139 = pneg %p133
      %p140 = scmp.eq.s32.totalorder %s14, 1
      %p141 = por %p139, %p140
      %p142 = scmp.ne.s32.totalorder %s134, %s137
      %p143 = scmp.eq.s32.totalorder %s14, 0
      %p144 = por %p142, %p143
      %p145 = scmp.ne.s32.totalorder %s134, %s137
      %p146 = scmp.eq.s32.totalorder %s19, 1
      %p147 = por %p145, %p146
      %p148 = scmp.ne.s32.totalorder %s137, %s138
      %p149 = scmp.eq.s32.totalorder %s19, 0
      %p150 = por %p148, %p149
      %p151 = scmp.ne.s32.totalorder %s137, %s138
      %p152 = scmp.eq.s32.totalorder %s20, 1
      %p153 = por %p151, %p152
      %p155 = scmp.ne.s32.totalorder %s138, %s154
      %p156 = scmp.eq.s32.totalorder %s20, 0
      %p157 = por %p155, %p156
      %p158 = scmp.le.s32.totalorder 1, %s14
      %p159 = scmp.lt.s32.totalorder %s14, 3
      %p160 = pnand %p158, %p159
      %p161 = pneg %p160
      // Predicated region
      $region9: #{birdnet_forward.1} parent=5 // pred_check
        _
      $region10: #{birdnet_forward.1} parent=5 // pred_check_branch
        %163 = sbr.rel (%p160) target = $region12
      $region11: #{birdnet_forward.1} parent=5 // pred_region
        %s164 = ssub.s32 %s14, 1
        // Predicated region
        $region13: #{birdnet_forward.1} parent=11 // pred_check
          %p165 = pneg %p61
        $region14: #{birdnet_forward.1} parent=11 // pred_check_branch
          %167 = sbr.rel (%p165) target = $region16
        $region15: #{birdnet_forward.1} parent=11 // pred_region
          _
        $region16: #{birdnet_forward.1} parent=11 // pred_fallthru
          _
        // Predicated region
        $region17: #{birdnet_forward.1} parent=11 // pred_check
          %p168 = pneg %p82
        $region18: #{birdnet_forward.1} parent=11 // pred_check_branch
          %170 = sbr.rel (%p168) target = $region20
        $region19: #{birdnet_forward.1} parent=11 // pred_region
          _
        $region20: #{birdnet_forward.1} parent=11 // pred_fallthru
          _
        // Predicated region
        $region21: #{birdnet_forward.1} parent=11 // pred_check
          %p171 = pneg %p103
        $region22: #{birdnet_forward.1} parent=11 // pred_check_branch
          %173 = sbr.rel (%p171) target = $region24
        $region23: #{birdnet_forward.1} parent=11 // pred_region
          _
        $region24: #{birdnet_forward.1} parent=11 // pred_fallthru
          _
        // Predicated region
        $region25: #{birdnet_forward.1} parent=11 // pred_check
          %p174 = pneg %p124
        $region26: #{birdnet_forward.1} parent=11 // pred_check_branch
          %176 = sbr.rel (%p174) target = $region28
        $region27: #{birdnet_forward.1} parent=11 // pred_region
          _
        $region28: #{birdnet_forward.1} parent=11 // pred_fallthru
          _
      $region12: #{birdnet_forward.1} parent=5 // pred_fallthru
        _
      %p177 = scmp.lt.s32.totalorder %s14, 2
      // Predicated region
      $region29: #{birdnet_forward.1} parent=5 // pred_check
        %p178 = pneg %p177
      $region30: #{birdnet_forward.1} parent=5 // pred_check_branch
        %180 = sbr.rel (%p178) target = $region32
      $region31: #{birdnet_forward.1} parent=5 // pred_region
        // Predicated region
        $region33: #{birdnet_forward.1} parent=31 // pred_check
          %p181 = pneg %p34
        $region34: #{birdnet_forward.1} parent=31 // pred_check_branch
          %183 = sbr.rel (%p181) target = $region36
        $region35: #{birdnet_forward.1} parent=31 // pred_region
          %s184 = smul.u32 8, %s14
          %p185 = scmp.lt.s32.totalorder %s184, 15
          %s186 = scalar_select %p185, %s184, 15
          %s187 = smul.addr %s186, 64
          %s188 = smul.addr %s187, 8
          %s189 = scalar_lea.vmem %s0, %s188
          %s190 = smul.u32 8, %s14
        $region36: #{birdnet_forward.1} parent=31 // pred_fallthru
          _
      $region32: #{birdnet_forward.1} parent=5 // pred_fallthru
        _
      %p191 = scmp.le.s32.totalorder 1, %s14
      %p192 = scmp.lt.s32.totalorder %s14, 3
      %p193 = pnand %p191, %p192
      %p194 = pneg %p193
      // Predicated region
      $region37: #{birdnet_forward.1} parent=5 // pred_check
        _
      $region38: #{birdnet_forward.1} parent=5 // pred_check_branch
        %196 = sbr.rel (%p193) target = $region40
      $region39: #{birdnet_forward.1} parent=5 // pred_region
        %s197 = ssub.s32 %s14, 1
        %s198 = smul.u32 8, %s19
        %p199 = scmp.lt.s32.totalorder %s198, 15
        %s200 = scalar_select %p199, %s198, 15
        %s201 = smul.addr %s200, 64
        %s202 = smul.addr %s201, 8
        %s203 = scalar_lea.vmem %s0, %s202
        %p204 = pneg %p40
        %p205 = pneg %p37
        %p206 = pneg %p61
        %p207 = pneg %p58
        %p208 = pneg %p82
        %p209 = pneg %p79
        %p210 = pneg %p103
        %p211 = pneg %p100
        %p212 = pneg %p124
        %p213 = pneg %p121
        %p214 = pneg %p150
        %p215 = pneg %p147
        %s216 = sand.u32 %s137, 1
        %s217 = scalar_lea.sflag [#allocation4], %s216
        %s218 = sand.u32 %s137, 1
        %s219 = smul.addr %s218, 8
        %s220 = scalar_lea.vmem [#allocation3], %s219
        %s221 = smul.u32 8, %s19
        %p222 = scmp.lt.s32.totalorder %s221, 15
        %s223 = scalar_select %p222, %s221, 15
        %s224 = smul.addr %s223, 64
        %s225 = smul.addr %s224, 8
        %s226 = scalar_lea.vmem %s0, %s225
        %s227 = smul.u32 8, %s19
        %v229 = vld [vmem:[%s226] sm:$0xff]
        %v230 = vld [vmem:[%s226 + $0x8] sm:$0xff]
        %v231 = vld [vmem:[%s226 + $0x10] sm:$0xff]
        %v232 = vld [vmem:[%s226 + $0x18] sm:$0xff]
        %v233 = vld [vmem:[%s226 + $0x20] sm:$0xff]
        %v234 = vld [vmem:[%s226 + $0x28] sm:$0xff]
        %v235 = vld [vmem:[%s226 + $0x30] sm:$0xff]
        %v236 = vld [vmem:[%s226 + $0x38] sm:$0xff]
        %v237 = vld [vmem:[%s226 + $0x40] sm:$0xff]
        %v238 = vld [vmem:[%s226 + $0x48] sm:$0xff]
        %v239 = vld [vmem:[%s226 + $0x50] sm:$0xff]
        %v240 = vld [vmem:[%s226 + $0x58] sm:$0xff]
        %v241 = vld [vmem:[%s226 + $0x60] sm:$0xff]
        %v242 = vld [vmem:[%s226 + $0x68] sm:$0xff]
        %v243 = vld [vmem:[%s226 + $0x70] sm:$0xff]
        %v244 = vld [vmem:[%s226 + $0x78] sm:$0xff]
        %v245 = vld [vmem:[%s226 + $0x80] sm:$0xff]
        %v246 = vld [vmem:[%s226 + $0x88] sm:$0xff]
        %v247 = vld [vmem:[%s226 + $0x90] sm:$0xff]
        %v248 = vld [vmem:[%s226 + $0x98] sm:$0xff]
        %v249 = vld [vmem:[%s226 + $0xa0] sm:$0xff]
        %v250 = vld [vmem:[%s226 + $0xa8] sm:$0xff]
        %v251 = vld [vmem:[%s226 + $0xb0] sm:$0xff]
        %v252 = vld [vmem:[%s226 + $0xb8] sm:$0xff]
        %v253 = vld [vmem:[%s226 + $0xc0] sm:$0xff]
        %v254 = vld [vmem:[%s226 + $0xc8] sm:$0xff]
        %v255 = vld [vmem:[%s226 + $0xd0] sm:$0xff]
        %v256 = vld [vmem:[%s226 + $0xd8] sm:$0xff]
        %v257 = vld [vmem:[%s226 + $0xe0] sm:$0xff]
        %v258 = vld [vmem:[%s226 + $0xe8] sm:$0xff]
        %v259 = vld [vmem:[%s226 + $0xf0] sm:$0xff]
        %v260 = vld [vmem:[%s226 + $0xf8] sm:$0xff]
        %v261 = vld [vmem:[%s226 + $0x100] sm:$0xff]
        %v262 = vld [vmem:[%s226 + $0x108] sm:$0xff]
        %v263 = vld [vmem:[%s226 + $0x110] sm:$0xff]
        %v264 = vld [vmem:[%s226 + $0x118] sm:$0xff]
        %v265 = vld [vmem:[%s226 + $0x120] sm:$0xff]
        %v266 = vld [vmem:[%s226 + $0x128] sm:$0xff]
        %v267 = vld [vmem:[%s226 + $0x130] sm:$0xff]
        %v268 = vld [vmem:[%s226 + $0x138] sm:$0xff]
        %v269 = vld [vmem:[%s226 + $0x140] sm:$0xff]
        %v270 = vld [vmem:[%s226 + $0x148] sm:$0xff]
        %v271 = vld [vmem:[%s226 + $0x150] sm:$0xff]
        %v272 = vld [vmem:[%s226 + $0x158] sm:$0xff]
        %v273 = vld [vmem:[%s226 + $0x160] sm:$0xff]
        %v274 = vld [vmem:[%s226 + $0x168] sm:$0xff]
        %v275 = vld [vmem:[%s226 + $0x170] sm:$0xff]
        %v276 = vld [vmem:[%s226 + $0x178] sm:$0xff]
        %v277 = vld [vmem:[%s226 + $0x180] sm:$0xff]
        %v278 = vld [vmem:[%s226 + $0x188] sm:$0xff]
        %v279 = vld [vmem:[%s226 + $0x190] sm:$0xff]
        %v280 = vld [vmem:[%s226 + $0x198] sm:$0xff]
        %v281 = vld [vmem:[%s226 + $0x1a0] sm:$0xff]
        %v282 = vld [vmem:[%s226 + $0x1a8] sm:$0xff]
        %v283 = vld [vmem:[%s226 + $0x1b0] sm:$0xff]
        %v284 = vld [vmem:[%s226 + $0x1b8] sm:$0xff]
        %v285 = vld [vmem:[%s226 + $0x1c0] sm:$0xff]
        %v286 = vld [vmem:[%s226 + $0x1c8] sm:$0xff]
        %v287 = vld [vmem:[%s226 + $0x1d0] sm:$0xff]
        %v288 = vld [vmem:[%s226 + $0x1d8] sm:$0xff]
        %v289 = vld [vmem:[%s226 + $0x1e0] sm:$0xff]
        %v290 = vld [vmem:[%s226 + $0x1e8] sm:$0xff]
        %v291 = vld [vmem:[%s226 + $0x1f0] sm:$0xff]
        %v292 = vld [vmem:[%s226 + $0x1f8] sm:$0xff]
        %v293 = vpack.c.bf16 %v231, %v229
        %v294 = vpack.c.bf16 %v232, %v230
        %v295 = vpack.c.bf16 %v235, %v233
        %v296 = vpack.c.bf16 %v236, %v234
        %v297 = vpack.c.bf16 %v239, %v237
        %v298 = vpack.c.bf16 %v240, %v238
        %v299 = vpack.c.bf16 %v243, %v241
        %v300 = vpack.c.bf16 %v244, %v242
        %v301 = vpack.c.bf16 %v247, %v245
        %v302 = vpack.c.bf16 %v248, %v246
        %v303 = vpack.c.bf16 %v251, %v249
        %v304 = vpack.c.bf16 %v252, %v250
        %v305 = vpack.c.bf16 %v255, %v253
        %v306 = vpack.c.bf16 %v256, %v254
        %v307 = vpack.c.bf16 %v259, %v257
        %v308 = vpack.c.bf16 %v260, %v258
        %v309 = vpack.c.bf16 %v263, %v261
        %v310 = vpack.c.bf16 %v264, %v262
        %v311 = vpack.c.bf16 %v267, %v265
        %v312 = vpack.c.bf16 %v268, %v266
        %v313 = vpack.c.bf16 %v271, %v269
        %v314 = vpack.c.bf16 %v272, %v270
        %v315 = vpack.c.bf16 %v275, %v273
        %v316 = vpack.c.bf16 %v276, %v274
        %v317 = vpack.c.bf16 %v279, %v277
        %v318 = vpack.c.bf16 %v280, %v278
        %v319 = vpack.c.bf16 %v283, %v281
        %v320 = vpack.c.bf16 %v284, %v282
        %v321 = vpack.c.bf16 %v287, %v285
        %v322 = vpack.c.bf16 %v288, %v286
        %v323 = vpack.c.bf16 %v291, %v289
        %v324 = vpack.c.bf16 %v292, %v290
        %v325 = vld [vmem:[%s1] sm:$0xf]
        %v326 = vld [vmem:[%s1 + $0x4] sm:$0xf]
        %v327 = vld [vmem:[%s1 + $0x8] sm:$0xf]
        %v328 = vld [vmem:[%s1 + $0xc] sm:$0xf]
        %v329 = vld [vmem:[%s1 + $0x10] sm:$0xf]
        %v330 = vld [vmem:[%s1 + $0x14] sm:$0xf]
        %v331 = vld [vmem:[%s1 + $0x18] sm:$0xf]
        %v332 = vld [vmem:[%s1 + $0x1c] sm:$0xf]
        %v333 = vld [vmem:[%s1 + $0x20] sm:$0xf]
        %v334 = vld [vmem:[%s1 + $0x24] sm:$0xf]
        %v335 = vld [vmem:[%s1 + $0x28] sm:$0xf]
        %v336 = vld [vmem:[%s1 + $0x2c] sm:$0xf]
        %v337 = vld [vmem:[%s1 + $0x30] sm:$0xf]
        %v338 = vld [vmem:[%s1 + $0x34] sm:$0xf]
        %v339 = vld [vmem:[%s1 + $0x38] sm:$0xf]
        %v340 = vld [vmem:[%s1 + $0x3c] sm:$0xf]
        %v341 = vld [vmem:[%s1 + $0x40] sm:$0xf]
        %v342 = vld [vmem:[%s1 + $0x44] sm:$0xf]
        %v343 = vld [vmem:[%s1 + $0x48] sm:$0xf]
        %v344 = vld [vmem:[%s1 + $0x4c] sm:$0xf]
        %v345 = vld [vmem:[%s1 + $0x50] sm:$0xf]
        %v346 = vld [vmem:[%s1 + $0x54] sm:$0xf]
        %v347 = vld [vmem:[%s1 + $0x58] sm:$0xf]
        %v348 = vld [vmem:[%s1 + $0x5c] sm:$0xf]
        %v349 = vld [vmem:[%s1 + $0x60] sm:$0xf]
        %v350 = vld [vmem:[%s1 + $0x64] sm:$0xf]
        %v351 = vld [vmem:[%s1 + $0x68] sm:$0xf]
        %v352 = vld [vmem:[%s1 + $0x6c] sm:$0xf]
        %v353 = vld [vmem:[%s1 + $0x70] sm:$0xf]
        %v354 = vld [vmem:[%s1 + $0x74] sm:$0xf]
        %v355 = vld [vmem:[%s1 + $0x78] sm:$0xf]
        %v356 = vld [vmem:[%s1 + $0x7c] sm:$0xf]
        %v357 = vld [vmem:[%s2] sm:$0x1]
        %v359 = vlaneseq
        %v360 = vshrl.u32 %v359, 7
        %v361 = vsub.s32 0, %v360
        %v362 = vrot.slane %v357, %v361
        %364 = vxpose.xlu0.c.b16.start [1/8] %v293, 128
        %365 = vxpose.xlu0.c.b16.cont [2/8] %v295, 128
        %366 = vxpose.xlu0.c.b16.cont [3/8] %v297, 128
        %367 = vxpose.xlu0.c.b16.cont [4/8] %v299, 128
        %368 = vxpose.xlu0.c.b16.cont [5/8] %v301, 128
        %369 = vxpose.xlu0.c.b16.cont [6/8] %v303, 128
        %370 = vxpose.xlu0.c.b16.cont [7/8] %v305, 128
        %371 = vxpose.xlu0.c.b16.end [8/8] %v307, 128
        %v372 = vpop.trf.xlu0
        %v373 = vpop.trf.xlu0
        %v374 = vpop.trf.xlu0
        %v375 = vpop.trf.xlu0
        %v376 = vpop.trf.xlu0
        %v377 = vpop.trf.xlu0
        %v378 = vpop.trf.xlu0
        %v379 = vpop.trf.xlu0
        %380 = vxpose.xlu0.c.b16.start [1/8] %v294, 128
        %381 = vxpose.xlu0.c.b16.cont [2/8] %v296, 128
        %382 = vxpose.xlu0.c.b16.cont [3/8] %v298, 128
        %383 = vxpose.xlu0.c.b16.cont [4/8] %v300, 128
        %384 = vxpose.xlu0.c.b16.cont [5/8] %v302, 128
        %385 = vxpose.xlu0.c.b16.cont [6/8] %v304, 128
        %386 = vxpose.xlu0.c.b16.cont [7/8] %v306, 128
        %387 = vxpose.xlu0.c.b16.end [8/8] %v308, 128
        %v388 = vpop.trf.xlu0
        %v389 = vpop.trf.xlu0
        %v390 = vpop.trf.xlu0
        %v391 = vpop.trf.xlu0
        %v392 = vpop.trf.xlu0
        %v393 = vpop.trf.xlu0
        %v394 = vpop.trf.xlu0
        %v395 = vpop.trf.xlu0
        %396 = vxpose.xlu0.c.b16.start [1/8] %v309, 128
        %397 = vxpose.xlu0.c.b16.cont [2/8] %v311, 128
        %398 = vxpose.xlu0.c.b16.cont [3/8] %v313, 128
        %399 = vxpose.xlu0.c.b16.cont [4/8] %v315, 128
        %400 = vxpose.xlu0.c.b16.cont [5/8] %v317, 128
        %401 = vxpose.xlu0.c.b16.cont [6/8] %v319, 128
        %402 = vxpose.xlu0.c.b16.cont [7/8] %v321, 128
        %403 = vxpose.xlu0.c.b16.end [8/8] %v323, 128
        %v404 = vpop.trf.xlu0
        %v405 = vpop.trf.xlu0
        %v406 = vpop.trf.xlu0
        %v407 = vpop.trf.xlu0
        %v408 = vpop.trf.xlu0
        %v409 = vpop.trf.xlu0
        %v410 = vpop.trf.xlu0
        %v411 = vpop.trf.xlu0
        %412 = vxpose.xlu0.c.b16.start [1/8] %v310, 128
        %413 = vxpose.xlu0.c.b16.cont [2/8] %v312, 128
        %414 = vxpose.xlu0.c.b16.cont [3/8] %v314, 128
        %415 = vxpose.xlu0.c.b16.cont [4/8] %v316, 128
        %416 = vxpose.xlu0.c.b16.cont [5/8] %v318, 128
        %417 = vxpose.xlu0.c.b16.cont [6/8] %v320, 128
        %418 = vxpose.xlu0.c.b16.cont [7/8] %v322, 128
        %419 = vxpose.xlu0.c.b16.end [8/8] %v324, 128
        %v420 = vpop.trf.xlu0
        %v421 = vpop.trf.xlu0
        %v422 = vpop.trf.xlu0
        %v423 = vpop.trf.xlu0
        %v424 = vpop.trf.xlu0
        %v425 = vpop.trf.xlu0
        %v426 = vpop.trf.xlu0
        %v427 = vpop.trf.xlu0
        %v460 = vunpack.c.l.b16 %v325
        %v461 = vunpack.c.l.b16 %v326
        %v462 = vunpack.c.l.b16 %v327
        %v463 = vunpack.c.l.b16 %v328
        %v464 = vunpack.c.l.b16 %v329
        %v465 = vunpack.c.l.b16 %v330
        %v466 = vunpack.c.l.b16 %v331
        %v467 = vunpack.c.l.b16 %v332
        %v468 = vunpack.c.l.b16 %v333
        %v469 = vunpack.c.l.b16 %v334
        %v470 = vunpack.c.l.b16 %v335
        %v471 = vunpack.c.l.b16 %v336
        %v472 = vunpack.c.l.b16 %v337
        %v473 = vunpack.c.l.b16 %v338
        %v474 = vunpack.c.l.b16 %v339
        %v475 = vunpack.c.l.b16 %v340
        %v476 = vunpack.c.l.b16 %v341
        %v477 = vunpack.c.l.b16 %v342
        %v478 = vunpack.c.l.b16 %v343
        %v479 = vunpack.c.l.b16 %v344
        %v480 = vunpack.c.l.b16 %v345
        %v481 = vunpack.c.l.b16 %v346
        %v482 = vunpack.c.l.b16 %v347
        %v483 = vunpack.c.l.b16 %v348
        %v484 = vunpack.c.l.b16 %v349
        %v485 = vunpack.c.l.b16 %v350
        %v486 = vunpack.c.l.b16 %v351
        %v487 = vunpack.c.l.b16 %v352
        %v488 = vunpack.c.l.b16 %v353
        %v489 = vunpack.c.l.b16 %v354
        %v490 = vunpack.c.l.b16 %v355
        %v491 = vunpack.c.l.b16 %v356
        %v492 = vpack.c.b16 %v461, %v460
        %v493 = vpack.c.b16 %v463, %v462
        %v494 = vpack.c.b16 %v465, %v464
        %v495 = vpack.c.b16 %v467, %v466
        %v496 = vpack.c.b16 %v469, %v468
        %v497 = vpack.c.b16 %v471, %v470
        %v498 = vpack.c.b16 %v473, %v472
        %v499 = vpack.c.b16 %v475, %v474
        %v500 = vpack.c.b16 %v477, %v476
        %v501 = vpack.c.b16 %v479, %v478
        %v502 = vpack.c.b16 %v481, %v480
        %v503 = vpack.c.b16 %v483, %v482
        %v504 = vpack.c.b16 %v485, %v484
        %v505 = vpack.c.b16 %v487, %v486
        %v506 = vpack.c.b16 %v489, %v488
        %v507 = vpack.c.b16 %v491, %v490
        %524 = vmatprep.subr.bf16.mxu0 0
        %525 = vmatpush1.bf16.msra.mxu0 %v492
        %526 = vmatprep.subr.bf16.mxu0 0
        %527 = vmatpush1.bf16.msra.mxu0 %v493
        %528 = vmatprep.subr.bf16.mxu0 0
        %529 = vmatpush1.bf16.msra.mxu0 %v494
        %530 = vmatprep.subr.bf16.mxu0 0
        %531 = vmatpush1.bf16.msra.mxu0 %v495
        %532 = vmatprep.subr.bf16.mxu0 0
        %533 = vmatpush1.bf16.msra.mxu0 %v496
        %534 = vmatprep.subr.bf16.mxu0 0
        %535 = vmatpush1.bf16.msra.mxu0 %v497
        %536 = vmatprep.subr.bf16.mxu0 0
        %537 = vmatpush1.bf16.msra.mxu0 %v498
        %538 = vmatprep.subr.bf16.mxu0 0
        %539 = vmatpush1.bf16.msra.mxu0 %v499
        %540 = vmatprep.subr.bf16.mxu0 0
        %541 = vmatpush1.bf16.msra.mxu0 %v500
        %542 = vmatprep.subr.bf16.mxu0 0
        %543 = vmatpush1.bf16.msra.mxu0 %v501
        %544 = vmatprep.subr.bf16.mxu0 0
        %545 = vmatpush1.bf16.msra.mxu0 %v502
        %546 = vmatprep.subr.bf16.mxu0 0
        %547 = vmatpush1.bf16.msra.mxu0 %v503
        %548 = vmatprep.subr.bf16.mxu0 0
        %549 = vmatpush1.bf16.msra.mxu0 %v504
        %550 = vmatprep.subr.bf16.mxu0 0
        %551 = vmatpush1.bf16.msra.mxu0 %v505
        %552 = vmatprep.subr.bf16.mxu0 0
        %553 = vmatpush1.bf16.msra.mxu0 %v506
        %554 = vmatprep.subr.bf16.mxu0 0
        %555 = vmatpush1.bf16.msra.mxu0 %v507
        %556 = vmatprep.mubr.bf16.mxu0 %v404
        %557 = vmatmul.mubr.bf16.gmra.mrb[0].mxu0 %v372
        %v558 = vpop.f32.mrb[0].mxu0
        %v559 = vadd.f32 %v362, %v558
        %v560 = vpop.f32.mrb[0].mxu0
        %v561 = vpop.f32.mrb[0].mxu0
        %v562 = vadd.f32 %v362, %v561
        %v563 = vpop.f32.mrb[0].mxu0
        %564 = vmatprep.mubr.bf16.mxu0 %v405
        %565 = vmatmul.mubr.bf16.gmra.mrb[0].mxu0 %v373
        %v566 = vpop.f32.mrb[0].mxu0
        %v567 = vadd.f32 %v362, %v566
        %v568 = vpop.f32.mrb[0].mxu0
        %v569 = vpop.f32.mrb[0].mxu0
        %v570 = vadd.f32 %v362, %v569
        %v571 = vpop.f32.mrb[0].mxu0
        %572 = vmatprep.mubr.bf16.mxu0 %v406
        %573 = vmatmul.mubr.bf16.gmra.mrb[0].mxu0 %v374
        %v574 = vpop.f32.mrb[0].mxu0
        %v575 = vadd.f32 %v362, %v574
        %v576 = vpop.f32.mrb[0].mxu0
        %v577 = vpop.f32.mrb[0].mxu0
        %v578 = vadd.f32 %v362, %v577
        %v579 = vpop.f32.mrb[0].mxu0
        %580 = vmatprep.mubr.bf16.mxu0 %v407
        %581 = vmatmul.mubr.bf16.gmra.mrb[0].mxu0 %v375
        %v582 = vpop.f32.mrb[0].mxu0
        %v583 = vadd.f32 %v362, %v582
        %v584 = vpop.f32.mrb[0].mxu0
        %v585 = vpop.f32.mrb[0].mxu0
        %v586 = vadd.f32 %v362, %v585
        %v587 = vpop.f32.mrb[0].mxu0
        %588 = vmatprep.mubr.bf16.mxu0 %v408
        %589 = vmatmul.mubr.bf16.gmra.mrb[0].mxu0 %v376
        %v590 = vpop.f32.mrb[0].mxu0
        %v591 = vadd.f32 %v362, %v590
        %v592 = vpop.f32.mrb[0].mxu0
        %v593 = vpop.f32.mrb[0].mxu0
        %v594 = vadd.f32 %v362, %v593
        %v595 = vpop.f32.mrb[0].mxu0
        %596 = vmatprep.mubr.bf16.mxu0 %v409
        %597 = vmatmul.mubr.bf16.gmra.mrb[0].mxu0 %v377
        %v598 = vpop.f32.mrb[0].mxu0
        %v599 = vadd.f32 %v362, %v598
        %v600 = vpop.f32.mrb[0].mxu0
        %v601 = vpop.f32.mrb[0].mxu0
        %v602 = vadd.f32 %v362, %v601
        %v603 = vpop.f32.mrb[0].mxu0
        %604 = vmatprep.mubr.bf16.mxu0 %v410
        %605 = vmatmul.mubr.bf16.gmra.mrb[0].mxu0 %v378
        %v606 = vpop.f32.mrb[0].mxu0
        %v607 = vadd.f32 %v362, %v606
        %v608 = vpop.f32.mrb[0].mxu0
        %v609 = vpop.f32.mrb[0].mxu0
        %v610 = vadd.f32 %v362, %v609
        %v611 = vpop.f32.mrb[0].mxu0
        %612 = vmatprep.mubr.bf16.mxu0 %v411
        %613 = vmatmul.mubr.bf16.gmra.mrb[0].mxu0 %v379
        %v614 = vpop.f32.mrb[0].mxu0
        %v615 = vadd.f32 %v362, %v614
        %v616 = vpop.f32.mrb[0].mxu0
        %v617 = vpop.f32.mrb[0].mxu0
        %v618 = vadd.f32 %v362, %v617
        %v619 = vpop.f32.mrb[0].mxu0
        %620 = vmatprep.mubr.bf16.mxu0 %v420
        %621 = vmatmul.mubr.bf16.gmra.mrb[0].mxu0 %v388
        %v622 = vpop.f32.mrb[0].mxu0
        %v623 = vadd.f32 %v362, %v622
        %v624 = vpop.f32.mrb[0].mxu0
        %v625 = vpop.f32.mrb[0].mxu0
        %v626 = vadd.f32 %v362, %v625
        %v627 = vpop.f32.mrb[0].mxu0
        %628 = vmatprep.mubr.bf16.mxu0 %v421
        %629 = vmatmul.mubr.bf16.gmra.mrb[0].mxu0 %v389
        %v630 = vpop.f32.mrb[0].mxu0
        %v631 = vadd.f32 %v362, %v630
        %v632 = vpop.f32.mrb[0].mxu0
        %v633 = vpop.f32.mrb[0].mxu0
        %v634 = vadd.f32 %v362, %v633
        %v635 = vpop.f32.mrb[0].mxu0
        %636 = vmatprep.mubr.bf16.mxu0 %v422
        %637 = vmatmul.mubr.bf16.gmra.mrb[0].mxu0 %v390
        %v638 = vpop.f32.mrb[0].mxu0
        %v639 = vadd.f32 %v362, %v638
        %v640 = vpop.f32.mrb[0].mxu0
        %v641 = vpop.f32.mrb[0].mxu0
        %v642 = vadd.f32 %v362, %v641
        %v643 = vpop.f32.mrb[0].mxu0
        %644 = vmatprep.mubr.bf16.mxu0 %v423
        %645 = vmatmul.mubr.bf16.gmra.mrb[0].mxu0 %v391
        %v646 = vpop.f32.mrb[0].mxu0
        %v647 = vadd.f32 %v362, %v646
        %v648 = vpop.f32.mrb[0].mxu0
        %v649 = vpop.f32.mrb[0].mxu0
        %v650 = vadd.f32 %v362, %v649
        %v651 = vpop.f32.mrb[0].mxu0
        %652 = vmatprep.mubr.bf16.mxu0 %v424
        %653 = vmatmul.mubr.bf16.gmra.mrb[0].mxu0 %v392
        %v654 = vpop.f32.mrb[0].mxu0
        %v655 = vadd.f32 %v362, %v654
        %v656 = vpop.f32.mrb[0].mxu0
        %v657 = vpop.f32.mrb[0].mxu0
        %v658 = vadd.f32 %v362, %v657
        %v659 = vpop.f32.mrb[0].mxu0
        %660 = vmatprep.mubr.bf16.mxu0 %v425
        %661 = vmatmul.mubr.bf16.gmra.mrb[0].mxu0 %v393
        %v662 = vpop.f32.mrb[0].mxu0
        %v663 = vadd.f32 %v362, %v662
        %v664 = vpop.f32.mrb[0].mxu0
        %v665 = vpop.f32.mrb[0].mxu0
        %v666 = vadd.f32 %v362, %v665
        %v667 = vpop.f32.mrb[0].mxu0
        %668 = vmatprep.mubr.bf16.mxu0 %v426
        %669 = vmatmul.mubr.bf16.gmra.mrb[0].mxu0 %v394
        %v670 = vpop.f32.mrb[0].mxu0
        %v671 = vadd.f32 %v362, %v670
        %v672 = vpop.f32.mrb[0].mxu0
        %v673 = vpop.f32.mrb[0].mxu0
        %v674 = vadd.f32 %v362, %v673
        %v675 = vpop.f32.mrb[0].mxu0
        %676 = vmatprep.mubr.bf16.mxu0 %v427
        %677 = vmatmul.mubr.bf16.gmra.mrb[0].mxu0 %v395
        %v678 = vpop.f32.mrb[0].mxu0
        %v679 = vadd.f32 %v362, %v678
        %v680 = vpop.f32.mrb[0].mxu0
        %v681 = vpop.f32.mrb[0].mxu0
        %v682 = vadd.f32 %v362, %v681
        %v683 = vpop.f32.mrb[0].mxu0
        %684 = vdwg.mxu0
        %v685 = vmax.f32 %v559, 0.0
        %v686 = vmax.f32 %v562, 0.0
        %v687 = vmax.f32 %v567, 0.0
        %v688 = vmax.f32 %v570, 0.0
        %v689 = vmax.f32 %v575, 0.0
        %v690 = vmax.f32 %v578, 0.0
        %v691 = vmax.f32 %v583, 0.0
        %v692 = vmax.f32 %v586, 0.0
        %v693 = vmax.f32 %v591, 0.0
        %v694 = vmax.f32 %v594, 0.0
        %v695 = vmax.f32 %v599, 0.0
        %v696 = vmax.f32 %v602, 0.0
        %v697 = vmax.f32 %v607, 0.0
        %v698 = vmax.f32 %v610, 0.0
        %v699 = vmax.f32 %v615, 0.0
        %v700 = vmax.f32 %v618, 0.0
        %v701 = vmax.f32 %v623, 0.0
        %v702 = vmax.f32 %v626, 0.0
        %v703 = vmax.f32 %v631, 0.0
        %v704 = vmax.f32 %v634, 0.0
        %v705 = vmax.f32 %v639, 0.0
        %v706 = vmax.f32 %v642, 0.0
        %v707 = vmax.f32 %v647, 0.0
        %v708 = vmax.f32 %v650, 0.0
        %v709 = vmax.f32 %v655, 0.0
        %v710 = vmax.f32 %v658, 0.0
        %v711 = vmax.f32 %v663, 0.0
        %v712 = vmax.f32 %v666, 0.0
        %v713 = vmax.f32 %v671, 0.0
        %v714 = vmax.f32 %v674, 0.0
        %v715 = vmax.f32 %v679, 0.0
        %v716 = vmax.f32 %v682, 0.0
        %v717 = vadd.f32 %v685, %v686
        %v718 = vadd.f32 %v717, %v687
        %v719 = vadd.f32 %v718, %v688
        %v720 = vadd.f32 %v719, %v689
        %v721 = vadd.f32 %v720, %v690
        %v722 = vadd.f32 %v721, %v691
        %v723 = vadd.f32 %v722, %v692
        %v724 = vadd.f32 %v723, %v693
        %v725 = vadd.f32 %v724, %v694
        %v726 = vadd.f32 %v725, %v695
        %v727 = vadd.f32 %v726, %v696
        %v728 = vadd.f32 %v727, %v697
        %v729 = vadd.f32 %v728, %v698
        %v730 = vadd.f32 %v729, %v699
        %v731 = vadd.f32 %v730, %v700
        %v732 = vadd.f32 %v731, %v701
        %v733 = vadd.f32 %v732, %v702
        %v734 = vadd.f32 %v733, %v703
        %v735 = vadd.f32 %v734, %v704
        %v736 = vadd.f32 %v735, %v705
        %v737 = vadd.f32 %v736, %v706
        %v738 = vadd.f32 %v737, %v707
        %v739 = vadd.f32 %v738, %v708
        %v740 = vadd.f32 %v739, %v709
        %v741 = vadd.f32 %v740, %v710
        %v742 = vadd.f32 %v741, %v711
        %v743 = vadd.f32 %v742, %v712
        %v744 = vadd.f32 %v743, %v713
        %v745 = vadd.f32 %v744, %v714
        %v746 = vadd.f32 %v745, %v715
        %v747 = vadd.f32 %v746, %v716
        %v748 = vrot.slane %v747, 4
        %v749 = vadd.f32 %v747, %v748
        %v750 = vrot.slane %v749, 2
        %v751 = vadd.f32 %v749, %v750
        %v752 = vrot.slane %v751, 1
        %v753 = vadd.f32 %v751, %v752
        %v754 = vmul.f32 %v753, 0.00390625
        %755 = vst [vmem:[#allocation2] sm:$0x1] %v754
        %s756 = scalar_lea.vmem %s226, 512
        %v757 = vld [vmem:[%s756] sm:$0xff]
        %v758 = vld [vmem:[%s756 + $0x8] sm:$0xff]
        %v759 = vld [vmem:[%s756 + $0x10] sm:$0xff]
        %v760 = vld [vmem:[%s756 + $0x18] sm:$0xff]
        %v761 = vld [vmem:[%s756 + $0x20] sm:$0xff]
        %v762 = vld [vmem:[%s756 + $0x28] sm:$0xff]
        %v763 = vld [vmem:[%s756 + $0x30] sm:$0xff]
        %v764 = vld [vmem:[%s756 + $0x38] sm:$0xff]
        %v765 = vld [vmem:[%s756 + $0x40] sm:$0xff]
        %v766 = vld [vmem:[%s756 + $0x48] sm:$0xff]
        %v767 = vld [vmem:[%s756 + $0x50] sm:$0xff]
        %v768 = vld [vmem:[%s756 + $0x58] sm:$0xff]
        %v769 = vld [vmem:[%s756 + $0x60] sm:$0xff]
        %v770 = vld [vmem:[%s756 + $0x68] sm:$0xff]
        %v771 = vld [vmem:[%s756 + $0x70] sm:$0xff]
        %v772 = vld [vmem:[%s756 + $0x78] sm:$0xff]
        %v773 = vld [vmem:[%s756 + $0x80] sm:$0xff]
        %v774 = vld [vmem:[%s756 + $0x88] sm:$0xff]
        %v775 = vld [vmem:[%s756 + $0x90] sm:$0xff]
        %v776 = vld [vmem:[%s756 + $0x98] sm:$0xff]
        %v777 = vld [vmem:[%s756 + $0xa0] sm:$0xff]
        %v778 = vld [vmem:[%s756 + $0xa8] sm:$0xff]
        %v779 = vld [vmem:[%s756 + $0xb0] sm:$0xff]
        %v780 = vld [vmem:[%s756 + $0xb8] sm:$0xff]
        %v781 = vld [vmem:[%s756 + $0xc0] sm:$0xff]
        %v782 = vld [vmem:[%s756 + $0xc8] sm:$0xff]
        %v783 = vld [vmem:[%s756 + $0xd0] sm:$0xff]
        %v784 = vld [vmem:[%s756 + $0xd8] sm:$0xff]
        %v785 = vld [vmem:[%s756 + $0xe0] sm:$0xff]
        %v786 = vld [vmem:[%s756 + $0xe8] sm:$0xff]
        %v787 = vld [vmem:[%s756 + $0xf0] sm:$0xff]
        %v788 = vld [vmem:[%s756 + $0xf8] sm:$0xff]
        %v789 = vld [vmem:[%s756 + $0x100] sm:$0xff]
        %v790 = vld [vmem:[%s756 + $0x108] sm:$0xff]
        %v791 = vld [vmem:[%s756 + $0x110] sm:$0xff]
        %v792 = vld [vmem:[%s756 + $0x118] sm:$0xff]
        %v793 = vld [vmem:[%s756 + $0x120] sm:$0xff]
        %v794 = vld [vmem:[%s756 + $0x128] sm:$0xff]
        %v795 = vld [vmem:[%s756 + $0x130] sm:$0xff]
        %v796 = vld [vmem:[%s756 + $0x138] sm:$0xff]
        %v797 = vld [vmem:[%s756 + $0x140] sm:$0xff]
        %v798 = vld [vmem:[%s756 + $0x148] sm:$0xff]
        %v799 = vld [vmem:[%s756 + $0x150] sm:$0xff]
        %v800 = vld [vmem:[%s756 + $0x158] sm:$0xff]
        %v801 = vld [vmem:[%s756 + $0x160] sm:$0xff]
        %v802 = vld [vmem:[%s756 + $0x168] sm:$0xff]
        %v803 = vld [vmem:[%s756 + $0x170] sm:$0xff]
        %v804 = vld [vmem:[%s756 + $0x178] sm:$0xff]
        %v805 = vld [vmem:[%s756 + $0x180] sm:$0xff]
        %v806 = vld [vmem:[%s756 + $0x188] sm:$0xff]
        %v807 = vld [vmem:[%s756 + $0x190] sm:$0xff]
        %v808 = vld [vmem:[%s756 + $0x198] sm:$0xff]
        %v809 = vld [vmem:[%s756 + $0x1a0] sm:$0xff]
        %v810 = vld [vmem:[%s756 + $0x1a8] sm:$0xff]
        %v811 = vld [vmem:[%s756 + $0x1b0] sm:$0xff]
        %v812 = vld [vmem:[%s756 + $0x1b8] sm:$0xff]
        %v813 = vld [vmem:[%s756 + $0x1c0] sm:$0xff]
        %v814 = vld [vmem:[%s756 + $0x1c8] sm:$0xff]
        %v815 = vld [vmem:[%s756 + $0x1d0] sm:$0xff]
        %v816 = vld [vmem:[%s756 + $0x1d8] sm:$0xff]
        %v817 = vld [vmem:[%s756 + $0x1e0] sm:$0xff]
        %v818 = vld [vmem:[%s756 + $0x1e8] sm:$0xff]
        %v819 = vld [vmem:[%s756 + $0x1f0] sm:$0xff]
        %v820 = vld [vmem:[%s756 + $0x1f8] sm:$0xff]
        %v821 = vpack.c.bf16 %v759, %v757
        %v822 = vpack.c.bf16 %v760, %v758
        %v823 = vpack.c.bf16 %v763, %v761
        %v824 = vpack.c.bf16 %v764, %v762
        %v825 = vpack.c.bf16 %v767, %v765
        %v826 = vpack.c.bf16 %v768, %v766
        %v827 = vpack.c.bf16 %v771, %v769
        %v828 = vpack.c.bf16 %v772, %v770
        %v829 = vpack.c.bf16 %v775, %v773
        %v830 = vpack.c.bf16 %v776, %v774
        %v831 = vpack.c.bf16 %v779, %v777
        %v832 = vpack.c.bf16 %v780, %v778
        %v833 = vpack.c.bf16 %v783, %v781
        %v834 = vpack.c.bf16 %v784, %v782
        %v835 = vpack.c.bf16 %v787, %v785
        %v836 = vpack.c.bf16 %v788, %v786
        %v837 = vpack.c.bf16 %v791, %v789
        %v838 = vpack.c.bf16 %v792, %v790
        %v839 = vpack.c.bf16 %v795, %v793
        %v840 = vpack.c.bf16 %v796, %v794
        %v841 = vpack.c.bf16 %v799, %v797
        %v842 = vpack.c.bf16 %v800, %v798
        %v843 = vpack.c.bf16 %v803, %v801
        %v844 = vpack.c.bf16 %v804, %v802
        %v845 = vpack.c.bf16 %v807, %v805
        %v846 = vpack.c.bf16 %v808, %v806
        %v847 = vpack.c.bf16 %v811, %v809
        %v848 = vpack.c.bf16 %v812, %v810
        %v849 = vpack.c.bf16 %v815, %v813
        %v850 = vpack.c.bf16 %v816, %v814
        %v851 = vpack.c.bf16 %v819, %v817
        %v852 = vpack.c.bf16 %v820, %v818
        %v853 = vld [vmem:[%s1] sm:$0xf]
        %v854 = vld [vmem:[%s1 + $0x4] sm:$0xf]
        %v855 = vld [vmem:[%s1 + $0x8] sm:$0xf]
        %v856 = vld [vmem:[%s1 + $0xc] sm:$0xf]
        %v857 = vld [vmem:[%s1 + $0x10] sm:$0xf]
        %v858 = vld [vmem:[%s1 + $0x14] sm:$0xf]
        %v859 = vld [vmem:[%s1 + $0x18] sm:$0xf]
        %v860 = vld [vmem:[%s1 + $0x1c] sm:$0xf]
        %v861 = vld [vmem:[%s1 + $0x20] sm:$0xf]
        %v862 = vld [vmem:[%s1 + $0x24] sm:$0xf]
        %v863 = vld [vmem:[%s1 + $0x28] sm:$0xf]
        %v864 = vld [vmem:[%s1 + $0x2c] sm:$0xf]
        %v865 = vld [vmem:[%s1 + $0x30] sm:$0xf]
        %v866 = vld [vmem:[%s1 + $0x34] sm:$0xf]
        %v867 = vld [vmem:[%s1 + $0x38] sm:$0xf]
        %v868 = vld [vmem:[%s1 + $0x3c] sm:$0xf]
        %v869 = vld [vmem:[%s1 + $0x40] sm:$0xf]
        %v870 = vld [vmem:[%s1 + $0x44] sm:$0xf]
        %v871 = vld [vmem:[%s1 + $0x48] sm:$0xf]
        %v872 = vld [vmem:[%s1 + $0x4c] sm:$0xf]
        %v873 = vld [vmem:[%s1 + $0x50] sm:$0xf]
        %v874 = vld [vmem:[%s1 + $0x54] sm:$0xf]
        %v875 = vld [vmem:[%s1 + $0x58] sm:$0xf]
        %v876 = vld [vmem:[%s1 + $0x5c] sm:$0xf]
        %v877 = vld [vmem:[%s1 + $0x60] sm:$0xf]
        %v878 = vld [vmem:[%s1 + $0x64] sm:$0xf]
        %v879 = vld [vmem:[%s1 + $0x68] sm:$0xf]
        %v880 = vld [vmem:[%s1 + $0x6c] sm:$0xf]
        %v881 = vld [vmem:[%s1 + $0x70] sm:$0xf]
        %v882 = vld [vmem:[%s1 + $0x74] sm:$0xf]
        %v883 = vld [vmem:[%s1 + $0x78] sm:$0xf]
        %v884 = vld [vmem:[%s1 + $0x7c] sm:$0xf]
        %v885 = vld [vmem:[%s2] sm:$0x1]
        %v887 = vlaneseq
        %v888 = vshrl.u32 %v887, 7
        %v889 = vsub.s32 0, %v888
        %v890 = vrot.slane %v885, %v889
        %892 = vxpose.xlu0.c.b16.start [1/8] %v821, 128
        %893 = vxpose.xlu0.c.b16.cont [2/8] %v823, 128
        %894 = vxpose.xlu0.c.b16.cont [3/8] %v825, 128
        %895 = vxpose.xlu0.c.b16.cont [4/8] %v827, 128
        %896 = vxpose.xlu0.c.b16.cont [5/8] %v829, 128
        %897 = vxpose.xlu0.c.b16.cont [6/8] %v831, 128
        %898 = vxpose.xlu0.c.b16.cont [7/8] %v833, 128
        %899 = vxpose.xlu0.c.b16.end [8/8] %v835, 128
        %v900 = vpop.trf.xlu0
        %v901 = vpop.trf.xlu0
        %v902 = vpop.trf.xlu0
        %v903 = vpop.trf.xlu0
        %v904 = vpop.trf.xlu0
        %v905 = vpop.trf.xlu0
        %v906 = vpop.trf.xlu0
        %v907 = vpop.trf.xlu0
        %908 = vxpose.xlu0.c.b16.start [1/8] %v822, 128
        %909 = vxpose.xlu0.c.b16.cont [2/8] %v824, 128
        %910 = vxpose.xlu0.c.b16.cont [3/8] %v826, 128
        %911 = vxpose.xlu0.c.b16.cont [4/8] %v828, 128
        %912 = vxpose.xlu0.c.b16.cont [5/8] %v830, 128
        %913 = vxpose.xlu0.c.b16.cont [6/8] %v832, 128
        %914 = vxpose.xlu0.c.b16.cont [7/8] %v834, 128
        %915 = vxpose.xlu0.c.b16.end [8/8] %v836, 128
        %v916 = vpop.trf.xlu0
        %v917 = vpop.trf.xlu0
        %v918 = vpop.trf.xlu0
        %v919 = vpop.trf.xlu0
        %v920 = vpop.trf.xlu0
        %v921 = vpop.trf.xlu0
        %v922 = vpop.trf.xlu0
        %v923 = vpop.trf.xlu0
        %924 = vxpose.xlu0.c.b16.start [1/8] %v837, 128
        %925 = vxpose.xlu0.c.b16.cont [2/8] %v839, 128
        %926 = vxpose.xlu0.c.b16.cont [3/8] %v841, 128
        %927 = vxpose.xlu0.c.b16.cont [4/8] %v843, 128
        %928 = vxpose.xlu0.c.b16.cont [5/8] %v845, 128
        %929 = vxpose.xlu0.c.b16.cont [6/8] %v847, 128
        %930 = vxpose.xlu0.c.b16.cont [7/8] %v849, 128
        %931 = vxpose.xlu0.c.b16.end [8/8] %v851, 128
        %v932 = vpop.trf.xlu0
        %v933 = vpop.trf.xlu0
        %v934 = vpop.trf.xlu0
        %v935 = vpop.trf.xlu0
        %v936 = vpop.trf.xlu0
        %v937 = vpop.trf.xlu0
        %v938 = vpop.trf.xlu0
        %v939 = vpop.trf.xlu0
        %940 = vxpose.xlu0.c.b16.start [1/8] %v838, 128
        %941 = vxpose.xlu0.c.b16.cont [2/8] %v840, 128
        %942 = vxpose.xlu0.c.b16.cont [3/8] %v842, 128
        %943 = vxpose.xlu0.c.b16.cont [4/8] %v844, 128
        %944 = vxpose.xlu0.c.b16.cont [5/8] %v846, 128
        %945 = vxpose.xlu0.c.b16.cont [6/8] %v848, 128
        %946 = vxpose.xlu0.c.b16.cont [7/8] %v850, 128
        %947 = vxpose.xlu0.c.b16.end [8/8] %v852, 128
        %v948 = vpop.trf.xlu0
        %v949 = vpop.trf.xlu0
        %v950 = vpop.trf.xlu0
        %v951 = vpop.trf.xlu0
        %v952 = vpop.trf.xlu0
        %v953 = vpop.trf.xlu0
        %v954 = vpop.trf.xlu0
        %v955 = vpop.trf.xlu0
        %v988 = vunpack.c.l.b16 %v853
        %v989 = vunpack.c.l.b16 %v854
        %v990 = vunpack.c.l.b16 %v855
        %v991 = vunpack.c.l.b16 %v856
        %v992 = vunpack.c.l.b16 %v857
        %v993 = vunpack.c.l.b16 %v858
        %v994 = vunpack.c.l.b16 %v859
        %v995 = vunpack.c.l.b16 %v860
        %v996 = vunpack.c.l.b16 %v861
        %v997 = vunpack.c.l.b16 %v862
        %v998 = vunpack.c.l.b16 %v863
        %v999 = vunpack.c.l.b16 %v864
        %v1000 = vunpack.c.l.b16 %v865
        %v1001 = vunpack.c.l.b16 %v866
        %v1002 = vunpack.c.l.b16 %v867
        %v1003 = vunpack.c.l.b16 %v868
        %v1004 = vunpack.c.l.b16 %v869
        %v1005 = vunpack.c.l.b16 %v870
        %v1006 = vunpack.c.l.b16 %v871
        %v1007 = vunpack.c.l.b16 %v872
        %v1008 = vunpack.c.l.b16 %v873
        %v1009 = vunpack.c.l.b16 %v874
        %v1010 = vunpack.c.l.b16 %v875
        %v1011 = vunpack.c.l.b16 %v876
        %v1012 = vunpack.c.l.b16 %v877
        %v1013 = vunpack.c.l.b16 %v878
        %v1014 = vunpack.c.l.b16 %v879
        %v1015 = vunpack.c.l.b16 %v880
        %v1016 = vunpack.c.l.b16 %v881
        %v1017 = vunpack.c.l.b16 %v882
        %v1018 = vunpack.c.l.b16 %v883
        %v1019 = vunpack.c.l.b16 %v884
        %v1020 = vpack.c.b16 %v989, %v988
        %v1021 = vpack.c.b16 %v991, %v990
        %v1022 = vpack.c.b16 %v993, %v992
        %v1023 = vpack.c.b16 %v995, %v994
        %v1024 = vpack.c.b16 %v997, %v996
        %v1025 = vpack.c.b16 %v999, %v998
        %v1026 = vpack.c.b16 %v1001, %v1000
        %v1027 = vpack.c.b16 %v1003, %v1002
        %v1028 = vpack.c.b16 %v1005, %v1004
        %v1029 = vpack.c.b16 %v1007, %v1006
        %v1030 = vpack.c.b16 %v1009, %v1008
        %v1031 = vpack.c.b16 %v1011, %v1010
        %v1032 = vpack.c.b16 %v1013, %v1012
        %v1033 = vpack.c.b16 %v1015, %v1014
        %v1034 = vpack.c.b16 %v1017, %v1016
        %v1035 = vpack.c.b16 %v1019, %v1018
        %1052 = vmatprep.subr.bf16.mxu0 0
        %1053 = vmatpush1.bf16.msra.mxu0 %v1020
        %1054 = vmatprep.subr.bf16.mxu0 0
        %1055 = vmatpush1.bf16.msra.mxu0 %v1021
        %1056 = vmatprep.subr.bf16.mxu0 0
        %1057 = vmatpush1.bf16.msra.mxu0 %v1022
        %1058 = vmatprep.subr.bf16.mxu0 0
        %1059 = vmatpush1.bf16.msra.mxu0 %v1023
        %1060 = vmatprep.subr.bf16.mxu0 0
        %1061 = vmatpush1.bf16.msra.mxu0 %v1024
        %1062 = vmatprep.subr.bf16.mxu0 0
        %1063 = vmatpush1.bf16.msra.mxu0 %v1025
        %1064 = vmatprep.subr.bf16.mxu0 0
        %1065 = vmatpush1.bf16.msra.mxu0 %v1026
        %1066 = vmatprep.subr.bf16.mxu0 0
        %1067 = vmatpush1.bf16.msra.mxu0 %v1027
        %1068 = vmatprep.subr.bf16.mxu0 0
        %1069 = vmatpush1.bf16.msra.mxu0 %v1028
        %1070 = vmatprep.subr.bf16.mxu0 0
        %1071 = vmatpush1.bf16.msra.mxu0 %v1029
        %1072 = vmatprep.subr.bf16.mxu0 0
        %1073 = vmatpush1.bf16.msra.mxu0 %v1030
        %1074 = vmatprep.subr.bf16.mxu0 0
        %1075 = vmatpush1.bf16.msra.mxu0 %v1031
        %1076 = vmatprep.subr.bf16.mxu0 0
        %1077 = vmatpush1.bf16.msra.mxu0 %v1032
        %1078 = vmatprep.subr.bf16.mxu0 0
        %1079 = vmatpush1.bf16.msra.mxu0 %v1033
        %1080 = vmatprep.subr.bf16.mxu0 0
        %1081 = vmatpush1.bf16.msra.mxu0 %v1034
        %1082 = vmatprep.subr.bf16.mxu0 0
        %1083 = vmatpush1.bf16.msra.mxu0 %v1035
        %1084 = vmatprep.mubr.bf16.mxu0 %v932
        %1085 = vmatmul.mubr.bf16.gmra.mrb[0].mxu0 %v900
        %v1086 = vpop.f32.mrb[0].mxu0
        %v1087 = vadd.f32 %v890, %v1086
        %v1088 = vpop.f32.mrb[0].mxu0
        %v1089 = vpop.f32.mrb[0].mxu0
        %v1090 = vadd.f32 %v890, %v1089
        %v1091 = vpop.f32.mrb[0].mxu0
        %1092 = vmatprep.mubr.bf16.mxu0 %v933
        %1093 = vmatmul.mubr.bf16.gmra.mrb[0].mxu0 %v901
        %v1094 = vpop.f32.mrb[0].mxu0
        %v1095 = vadd.f32 %v890, %v1094
        %v1096 = vpop.f32.mrb[0].mxu0
        %v1097 = vpop.f32.mrb[0].mxu0
        %v1098 = vadd.f32 %v890, %v1097
        %v1099 = vpop.f32.mrb[0].mxu0
        %1100 = vmatprep.mubr.bf16.mxu0 %v934
        %1101 = vmatmul.mubr.bf16.gmra.mrb[0].mxu0 %v902
        %v1102 = vpop.f32.mrb[0].mxu0
        %v1103 = vadd.f32 %v890, %v1102
        %v1104 = vpop.f32.mrb[0].mxu0
        %v1105 = vpop.f32.mrb[0].mxu0
        %v1106 = vadd.f32 %v890, %v1105
        %v1107 = vpop.f32.mrb[0].mxu0
        %1108 = vmatprep.mubr.bf16.mxu0 %v935
        %1109 = vmatmul.mubr.bf16.gmra.mrb[0].mxu0 %v903
        %v1110 = vpop.f32.mrb[0].mxu0
        %v1111 = vadd.f32 %v890, %v1110
        %v1112 = vpop.f32.mrb[0].mxu0
        %v1113 = vpop.f32.mrb[0].mxu0
        %v1114 = vadd.f32 %v890, %v1113
        %v1115 = vpop.f32.mrb[0].mxu0
        %1116 = vmatprep.mubr.bf16.mxu0 %v936
        %1117 = vmatmul.mubr.bf16.gmra.mrb[0].mxu0 %v904
        %v1118 = vpop.f32.mrb[0].mxu0
        %v1119 = vadd.f32 %v890, %v1118
        %v1120 = vpop.f32.mrb[0].mxu0
        %v1121 = vpop.f32.mrb[0].mxu0
        %v1122 = vadd.f32 %v890, %v1121
        %v1123 = vpop.f32.mrb[0].mxu0
        %1124 = vmatprep.mubr.bf16.mxu0 %v937
        %1125 = vmatmul.mubr.bf16.gmra.mrb[0].mxu0 %v905
        %v1126 = vpop.f32.mrb[0].mxu0
        %v1127 = vadd.f32 %v890, %v1126
        %v1128 = vpop.f32.mrb[0].mxu0
        %v1129 = vpop.f32.mrb[0].mxu0
        %v1130 = vadd.f32 %v890, %v1129
        %v1131 = vpop.f32.mrb[0].mxu0
        %1132 = vmatprep.mubr.bf16.mxu0 %v938
        %1133 = vmatmul.mubr.bf16.gmra.mrb[0].mxu0 %v906
        %v1134 = vpop.f32.mrb[0].mxu0
        %v1135 = vadd.f32 %v890, %v1134
        %v1136 = vpop.f32.mrb[0].mxu0
        %v1137 = vpop.f32.mrb[0].mxu0
        %v1138 = vadd.f32 %v890, %v1137
        %v1139 = vpop.f32.mrb[0].mxu0
        %1140 = vmatprep.mubr.bf16.mxu0 %v939
        %1141 = vmatmul.mubr.bf16.gmra.mrb[0].mxu0 %v907
        %v1142 = vpop.f32.mrb[0].mxu0
        %v1143 = vadd.f32 %v890, %v1142
        %v1144 = vpop.f32.mrb[0].mxu0
        %v1145 = vpop.f32.mrb[0].mxu0
        %v1146 = vadd.f32 %v890, %v1145
        %v1147 = vpop.f32.mrb[0].mxu0
        %1148 = vmatprep.mubr.bf16.mxu0 %v948
        %1149 = vmatmul.mubr.bf16.gmra.mrb[0].mxu0 %v916
        %v1150 = vpop.f32.mrb[0].mxu0
        %v1151 = vadd.f32 %v890, %v1150
        %v1152 = vpop.f32.mrb[0].mxu0
        %v1153 = vpop.f32.mrb[0].mxu0
        %v1154 = vadd.f32 %v890, %v1153
        %v1155 = vpop.f32.mrb[0].mxu0
        %1156 = vmatprep.mubr.bf16.mxu0 %v949
        %1157 = vmatmul.mubr.bf16.gmra.mrb[0].mxu0 %v917
        %v1158 = vpop.f32.mrb[0].mxu0
        %v1159 = vadd.f32 %v890, %v1158
        %v1160 = vpop.f32.mrb[0].mxu0
        %v1161 = vpop.f32.mrb[0].mxu0
        %v1162 = vadd.f32 %v890, %v1161
        %v1163 = vpop.f32.mrb[0].mxu0
        %1164 = vmatprep.mubr.bf16.mxu0 %v950
        %1165 = vmatmul.mubr.bf16.gmra.mrb[0].mxu0 %v918
        %v1166 = vpop.f32.mrb[0].mxu0
        %v1167 = vadd.f32 %v890, %v1166
        %v1168 = vpop.f32.mrb[0].mxu0
        %v1169 = vpop.f32.mrb[0].mxu0
        %v1170 = vadd.f32 %v890, %v1169
        %v1171 = vpop.f32.mrb[0].mxu0
        %1172 = vmatprep.mubr.bf16.mxu0 %v951
        %1173 = vmatmul.mubr.bf16.gmra.mrb[0].mxu0 %v919
        %v1174 = vpop.f32.mrb[0].mxu0
        %v1175 = vadd.f32 %v890, %v1174
        %v1176 = vpop.f32.mrb[0].mxu0
        %v1177 = vpop.f32.mrb[0].mxu0
        %v1178 = vadd.f32 %v890, %v1177
        %v1179 = vpop.f32.mrb[0].mxu0
        %1180 = vmatprep.mubr.bf16.mxu0 %v952
        %1181 = vmatmul.mubr.bf16.gmra.mrb[0].mxu0 %v920
        %v1182 = vpop.f32.mrb[0].mxu0
        %v1183 = vadd.f32 %v890, %v1182
        %v1184 = vpop.f32.mrb[0].mxu0
        %v1185 = vpop.f32.mrb[0].mxu0
        %v1186 = vadd.f32 %v890, %v1185
        %v1187 = vpop.f32.mrb[0].mxu0
        %1188 = vmatprep.mubr.bf16.mxu0 %v953
        %1189 = vmatmul.mubr.bf16.gmra.mrb[0].mxu0 %v921
        %v1190 = vpop.f32.mrb[0].mxu0
        %v1191 = vadd.f32 %v890, %v1190
        %v1192 = vpop.f32.mrb[0].mxu0
        %v1193 = vpop.f32.mrb[0].mxu0
        %v1194 = vadd.f32 %v890, %v1193
        %v1195 = vpop.f32.mrb[0].mxu0
        %1196 = vmatprep.mubr.bf16.mxu0 %v954
        %1197 = vmatmul.mubr.bf16.gmra.mrb[0].mxu0 %v922
        %v1198 = vpop.f32.mrb[0].mxu0
        %v1199 = vadd.f32 %v890, %v1198
        %v1200 = vpop.f32.mrb[0].mxu0
        %v1201 = vpop.f32.mrb[0].mxu0
        %v1202 = vadd.f32 %v890, %v1201
        %v1203 = vpop.f32.mrb[0].mxu0
        %1204 = vmatprep.mubr.bf16.mxu0 %v955
        %1205 = vmatmul.mubr.bf16.gmra.mrb[0].mxu0 %v923
        %v1206 = vpop.f32.mrb[0].mxu0
        %v1207 = vadd.f32 %v890, %v1206
        %v1208 = vpop.f32.mrb[0].mxu0
        %v1209 = vpop.f32.mrb[0].mxu0
        %v1210 = vadd.f32 %v890, %v1209
        %v1211 = vpop.f32.mrb[0].mxu0
        %1212 = vdwg.mxu0
        %v1213 = vmax.f32 %v1087, 0.0
        %v1214 = vmax.f32 %v1090, 0.0
        %v1215 = vmax.f32 %v1095, 0.0
        %v1216 = vmax.f32 %v1098, 0.0
        %v1217 = vmax.f32 %v1103, 0.0
        %v1218 = vmax.f32 %v1106, 0.0
        %v1219 = vmax.f32 %v1111, 0.0
        %v1220 = vmax.f32 %v1114, 0.0
        %v1221 = vmax.f32 %v1119, 0.0
        %v1222 = vmax.f32 %v1122, 0.0
        %v1223 = vmax.f32 %v1127, 0.0
        %v1224 = vmax.f32 %v1130, 0.0
        %v1225 = vmax.f32 %v1135, 0.0
        %v1226 = vmax.f32 %v1138, 0.0
        %v1227 = vmax.f32 %v1143, 0.0
        %v1228 = vmax.f32 %v1146, 0.0
        %v1229 = vmax.f32 %v1151, 0.0
        %v1230 = vmax.f32 %v1154, 0.0
        %v1231 = vmax.f32 %v1159, 0.0
        %v1232 = vmax.f32 %v1162, 0.0
        %v1233 = vmax.f32 %v1167, 0.0
        %v1234 = vmax.f32 %v1170, 0.0
        %v1235 = vmax.f32 %v1175, 0.0
        %v1236 = vmax.f32 %v1178, 0.0
        %v1237 = vmax.f32 %v1183, 0.0
        %v1238 = vmax.f32 %v1186, 0.0
        %v1239 = vmax.f32 %v1191, 0.0
        %v1240 = vmax.f32 %v1194, 0.0
        %v1241 = vmax.f32 %v1199, 0.0
        %v1242 = vmax.f32 %v1202, 0.0
        %v1243 = vmax.f32 %v1207, 0.0
        %v1244 = vmax.f32 %v1210, 0.0
        %v1245 = vadd.f32 %v1213, %v1214
        %v1246 = vadd.f32 %v1245, %v1215
        %v1247 = vadd.f32 %v1246, %v1216
        %v1248 = vadd.f32 %v1247, %v1217
        %v1249 = vadd.f32 %v1248, %v1218
        %v1250 = vadd.f32 %v1249, %v1219
        %v1251 = vadd.f32 %v1250, %v1220
        %v1252 = vadd.f32 %v1251, %v1221
        %v1253 = vadd.f32 %v1252, %v1222
        %v1254 = vadd.f32 %v1253, %v1223
        %v1255 = vadd.f32 %v1254, %v1224
        %v1256 = vadd.f32 %v1255, %v1225
        %v1257 = vadd.f32 %v1256, %v1226
        %v1258 = vadd.f32 %v1257, %v1227
        %v1259 = vadd.f32 %v1258, %v1228
        %v1260 = vadd.f32 %v1259, %v1229
        %v1261 = vadd.f32 %v1260, %v1230
        %v1262 = vadd.f32 %v1261, %v1231
        %v1263 = vadd.f32 %v1262, %v1232
        %v1264 = vadd.f32 %v1263, %v1233
        %v1265 = vadd.f32 %v1264, %v1234
        %v1266 = vadd.f32 %v1265, %v1235
        %v1267 = vadd.f32 %v1266, %v1236
        %v1268 = vadd.f32 %v1267, %v1237
        %v1269 = vadd.f32 %v1268, %v1238
        %v1270 = vadd.f32 %v1269, %v1239
        %v1271 = vadd.f32 %v1270, %v1240
        %v1272 = vadd.f32 %v1271, %v1241
        %v1273 = vadd.f32 %v1272, %v1242
        %v1274 = vadd.f32 %v1273, %v1243
        %v1275 = vadd.f32 %v1274, %v1244
        %v1276 = vrot.slane %v1275, 4
        %v1277 = vadd.f32 %v1275, %v1276
        %v1278 = vrot.slane %v1277, 2
        %v1279 = vadd.f32 %v1277, %v1278
        %v1280 = vrot.slane %v1279, 1
        %v1281 = vadd.f32 %v1279, %v1280
        %v1282 = vmul.f32 %v1281, 0.00390625
        %1283 = vst [vmem:[#allocation2 + $0x1] sm:$0x1] %v1282
        %s1284 = scalar_lea.vmem %s226, 1024
        %v1285 = vld [vmem:[%s1284] sm:$0xff]
        %v1286 = vld [vmem:[%s1284 + $0x8] sm:$0xff]
        %v1287 = vld [vmem:[%s1284 + $0x10] sm:$0xff]
        %v1288 = vld [vmem:[%s1284 + $0x18] sm:$0xff]
        %v1289 = vld [vmem:[%s1284 + $0x20] sm:$0xff]
        %v1290 = vld [vmem:[%s1284 + $0x28] sm:$0xff]
        %v1291 = vld [vmem:[%s1284 + $0x30] sm:$0xff]
        %v1292 = vld [vmem:[%s1284 + $0x38] sm:$0xff]
        %v1293 = vld [vmem:[%s1284 + $0x40] sm:$0xff]
        %v1294 = vld [vmem:[%s1284 + $0x48] sm:$0xff]
        %v1295 = vld [vmem:[%s1284 + $0x50] sm:$0xff]
        %v1296 = vld [vmem:[%s1284 + $0x58] sm:$0xff]
        %v1297 = vld [vmem:[%s1284 + $0x60] sm:$0xff]
        %v1298 = vld [vmem:[%s1284 + $0x68] sm:$0xff]
        %v1299 = vld [vmem:[%s1284 + $0x70] sm:$0xff]
        %v1300 = vld [vmem:[%s1284 + $0x78] sm:$0xff]
        %v1301 = vld [vmem:[%s1284 + $0x80] sm:$0xff]
        %v1302 = vld [vmem:[%s1284 + $0x88] sm:$0xff]
        %v1303 = vld [vmem:[%s1284 + $0x90] sm:$0xff]
        %v1304 = vld [vmem:[%s1284 + $0x98] sm:$0xff]
        %v1305 = vld [vmem:[%s1284 + $0xa0] sm:$0xff]
        %v1306 = vld [vmem:[%s1284 + $0xa8] sm:$0xff]
        %v1307 = vld [vmem:[%s1284 + $0xb0] sm:$0xff]
        %v1308 = vld [vmem:[%s1284 + $0xb8] sm:$0xff]
        %v1309 = vld [vmem:[%s1284 + $0xc0] sm:$0xff]
        %v1310 = vld [vmem:[%s1284 + $0xc8] sm:$0xff]
        %v1311 = vld [vmem:[%s1284 + $0xd0] sm:$0xff]
        %v1312 = vld [vmem:[%s1284 + $0xd8] sm:$0xff]
        %v1313 = vld [vmem:[%s1284 + $0xe0] sm:$0xff]
        %v1314 = vld [vmem:[%s1284 + $0xe8] sm:$0xff]
        %v1315 = vld [vmem:[%s1284 + $0xf0] sm:$0xff]
        %v1316 = vld [vmem:[%s1284 + $0xf8] sm:$0xff]
        %v1317 = vld [vmem:[%s1284 + $0x100] sm:$0xff]
        %v1318 = vld [vmem:[%s1284 + $0x108] sm:$0xff]
        %v1319 = vld [vmem:[%s1284 + $0x110] sm:$0xff]
        %v1320 = vld [vmem:[%s1284 + $0x118] sm:$0xff]
        %v1321 = vld [vmem:[%s1284 + $0x120] sm:$0xff]
        %v1322 = vld [vmem:[%s1284 + $0x128] sm:$0xff]
        %v1323 = vld [vmem:[%s1284 + $0x130] sm:$0xff]
        %v1324 = vld [vmem:[%s1284 + $0x138] sm:$0xff]
        %v1325 = vld [vmem:[%s1284 + $0x140] sm:$0xff]
        %v1326 = vld [vmem:[%s1284 + $0x148] sm:$0xff]
        %v1327 = vld [vmem:[%s1284 + $0x150] sm:$0xff]
        %v1328 = vld [vmem:[%s1284 + $0x158] sm:$0xff]
        %v1329 = vld [vmem:[%s1284 + $0x160] sm:$0xff]
        %v1330 = vld [vmem:[%s1284 + $0x168] sm:$0xff]
        %v1331 = vld [vmem:[%s1284 + $0x170] sm:$0xff]
        %v1332 = vld [vmem:[%s1284 + $0x178] sm:$0xff]
        %v1333 = vld [vmem:[%s1284 + $0x180] sm:$0xff]
        %v1334 = vld [vmem:[%s1284 + $0x188] sm:$0xff]
        %v1335 = vld [vmem:[%s1284 + $0x190] sm:$0xff]
        %v1336 = vld [vmem:[%s1284 + $0x198] sm:$0xff]
        %v1337 = vld [vmem:[%s1284 + $0x1a0] sm:$0xff]
        %v1338 = vld [vmem:[%s1284 + $0x1a8] sm:$0xff]
        %v1339 = vld [vmem:[%s1284 + $0x1b0] sm:$0xff]
        %v1340 = vld [vmem:[%s1284 + $0x1b8] sm:$0xff]
        %v1341 = vld [vmem:[%s1284 + $0x1c0] sm:$0xff]
        %v1342 = vld [vmem:[%s1284 + $0x1c8] sm:$0xff]
        %v1343 = vld [vmem:[%s1284 + $0x1d0] sm:$0xff]
        %v1344 = vld [vmem:[%s1284 + $0x1d8] sm:$0xff]
        %v1345 = vld [vmem:[%s1284 + $0x1e0] sm:$0xff]
        %v1346 = vld [vmem:[%s1284 + $0x1e8] sm:$0xff]
        %v1347 = vld [vmem:[%s1284 + $0x1f0] sm:$0xff]
        %v1348 = vld [vmem:[%s1284 + $0x1f8] sm:$0xff]
        %v1349 = vpack.c.bf16 %v1287, %v1285
        %v1350 = vpack.c.bf16 %v1288, %v1286
        %v1351 = vpack.c.bf16 %v1291, %v1289
        %v1352 = vpack.c.bf16 %v1292, %v1290
        %v1353 = vpack.c.bf16 %v1295, %v1293
        %v1354 = vpack.c.bf16 %v1296, %v1294
        %v1355 = vpack.c.bf16 %v1299, %v1297
        %v1356 = vpack.c.bf16 %v1300, %v1298
        %v1357 = vpack.c.bf16 %v1303, %v1301
        %v1358 = vpack.c.bf16 %v1304, %v1302
        %v1359 = vpack.c.bf16 %v1307, %v1305
        %v1360 = vpack.c.bf16 %v1308, %v1306
        %v1361 = vpack.c.bf16 %v1311, %v1309
        %v1362 = vpack.c.bf16 %v1312, %v1310
        %v1363 = vpack.c.bf16 %v1315, %v1313
        %v1364 = vpack.c.bf16 %v1316, %v1314
        %v1365 = vpack.c.bf16 %v1319, %v1317
        %v1366 = vpack.c.bf16 %v1320, %v1318
        %v1367 = vpack.c.bf16 %v1323, %v1321
        %v1368 = vpack.c.bf16 %v1324, %v1322
        %v1369 = vpack.c.bf16 %v1327, %v1325
        %v1370 = vpack.c.bf16 %v1328, %v1326
        %v1371 = vpack.c.bf16 %v1331, %v1329
        %v1372 = vpack.c.bf16 %v1332, %v1330
        %v1373 = vpack.c.bf16 %v1335, %v1333
        %v1374 = vpack.c.bf16 %v1336, %v1334
        %v1375 = vpack.c.bf16 %v1339, %v1337
        %v1376 = vpack.c.bf16 %v1340, %v1338
        %v1377 = vpack.c.bf16 %v1343, %v1341
        %v1378 = vpack.c.bf16 %v1344, %v1342
        %v1379 = vpack.c.bf16 %v1347, %v1345
        %v1380 = vpack.c.bf16 %v1348, %v1346
        %v1381 = vld [vmem:[%s1] sm:$0xf]
        %v1382 = vld [vmem:[%s1 + $0x4] sm:$0xf]
        %v1383 = vld [vmem:[%s1 + $0x8] sm:$0xf]
        %v1384 = vld [vmem:[%s1 + $0xc] sm:$0xf]
        %v1385 = vld [vmem:[%s1 + $0x10] sm:$0xf]
        %v1386 = vld [vmem:[%s1 + $0x14] sm:$0xf]
        %v1387 = vld [vmem:[%s1 + $0x18] sm:$0xf]
        %v1388 = vld [vmem:[%s1 + $0x1c] sm:$0xf]
        %v1389 = vld [vmem:[%s1 + $0x20] sm:$0xf]
        %v1390 = vld [vmem:[%s1 + $0x24] sm:$0xf]
        %v1391 = vld [vmem:[%s1 + $0x28] sm:$0xf]
        %v1392 = vld [vmem:[%s1 + $0x2c] sm:$0xf]
        %v1393 = vld [vmem:[%s1 + $0x30] sm:$0xf]
        %v1394 = vld [vmem:[%s1 + $0x34] sm:$0xf]
        %v1395 = vld [vmem:[%s1 + $0x38] sm:$0xf]
        %v1396 = vld [vmem:[%s1 + $0x3c] sm:$0xf]
        %v1397 = vld [vmem:[%s1 + $0x40] sm:$0xf]
        %v1398 = vld [vmem:[%s1 + $0x44] sm:$0xf]
        %v1399 = vld [vmem:[%s1 + $0x48] sm:$0xf]
        %v1400 = vld [vmem:[%s1 + $0x4c] sm:$0xf]
        %v1401 = vld [vmem:[%s1 + $0x50] sm:$0xf]
        %v1402 = vld [vmem:[%s1 + $0x54] sm:$0xf]
        %v1403 = vld [vmem:[%s1 + $0x58] sm:$0xf]
        %v1404 = vld [vmem:[%s1 + $0x5c] sm:$0xf]
        %v1405 = vld [vmem:[%s1 + $0x60] sm:$0xf]
        %v1406 = vld [vmem:[%s1 + $0x64] sm:$0xf]
        %v1407 = vld [vmem:[%s1 + $0x68] sm:$0xf]
        %v1408 = vld [vmem:[%s1 + $0x6c] sm:$0xf]
        %v1409 = vld [vmem:[%s1 + $0x70] sm:$0xf]
        %v1410 = vld [vmem:[%s1 + $0x74] sm:$0xf]
        %v1411 = vld [vmem:[%s1 + $0x78] sm:$0xf]
        %v1412 = vld [vmem:[%s1 + $0x7c] sm:$0xf]
        %v1413 = vld [vmem:[%s2] sm:$0x1]
        %v1415 = vlaneseq
        %v1416 = vshrl.u32 %v1415, 7
        %v1417 = vsub.s32 0, %v1416
        %v1418 = vrot.slane %v1413, %v1417
        %1420 = vxpose.xlu0.c.b16.start [1/8] %v1349, 128
        %1421 = vxpose.xlu0.c.b16.cont [2/8] %v1351, 128
        %1422 = vxpose.xlu0.c.b16.cont [3/8] %v1353, 128
        %1423 = vxpose.xlu0.c.b16.cont [4/8] %v1355, 128
        %1424 = vxpose.xlu0.c.b16.cont [5/8] %v1357, 128
        %1425 = vxpose.xlu0.c.b16.cont [6/8] %v1359, 128
        %1426 = vxpose.xlu0.c.b16.cont [7/8] %v1361, 128
        %1427 = vxpose.xlu0.c.b16.end [8/8] %v1363, 128
        %v1428 = vpop.trf.xlu0
        %v1429 = vpop.trf.xlu0
        %v1430 = vpop.trf.xlu0
        %v1431 = vpop.trf.xlu0
        %v1432 = vpop.trf.xlu0
        %v1433 = vpop.trf.xlu0
        %v1434 = vpop.trf.xlu0
        %v1435 = vpop.trf.xlu0
        %1436 = vxpose.xlu0.c.b16.start [1/8] %v1350, 128
        %1437 = vxpose.xlu0.c.b16.cont [2/8] %v1352, 128
        %1438 = vxpose.xlu0.c.b16.cont [3/8] %v1354, 128
        %1439 = vxpose.xlu0.c.b16.cont [4/8] %v1356, 128
        %1440 = vxpose.xlu0.c.b16.cont [5/8] %v1358, 128
        %1441 = vxpose.xlu0.c.b16.cont [6/8] %v1360, 128
        %1442 = vxpose.xlu0.c.b16.cont [7/8] %v1362, 128
        %1443 = vxpose.xlu0.c.b16.end [8/8] %v1364, 128
        %v1444 = vpop.trf.xlu0
        %v1445 = vpop.trf.xlu0
        %v1446 = vpop.trf.xlu0
        %v1447 = vpop.trf.xlu0
        %v1448 = vpop.trf.xlu0
        %v1449 = vpop.trf.xlu0
        %v1450 = vpop.trf.xlu0
        %v1451 = vpop.trf.xlu0
        %1452 = vxpose.xlu0.c.b16.start [1/8] %v1365, 128
        %1453 = vxpose.xlu0.c.b16.cont [2/8] %v1367, 128
        %1454 = vxpose.xlu0.c.b16.cont [3/8] %v1369, 128
        %1455 = vxpose.xlu0.c.b16.cont [4/8] %v1371, 128
        %1456 = vxpose.xlu0.c.b16.cont [5/8] %v1373, 128
        %1457 = vxpose.xlu0.c.b16.cont [6/8] %v1375, 128
        %1458 = vxpose.xlu0.c.b16.cont [7/8] %v1377, 128
        %1459 = vxpose.xlu0.c.b16.end [8/8] %v1379, 128
        %v1460 = vpop.trf.xlu0
        %v1461 = vpop.trf.xlu0
        %v1462 = vpop.trf.xlu0
        %v1463 = vpop.trf.xlu0
        %v1464 = vpop.trf.xlu0
        %v1465 = vpop.trf.xlu0
        %v1466 = vpop.trf.xlu0
        %v1467 = vpop.trf.xlu0
        %1468 = vxpose.xlu0.c.b16.start [1/8] %v1366, 128
        %1469 = vxpose.xlu0.c.b16.cont [2/8] %v1368, 128
        %1470 = vxpose.xlu0.c.b16.cont [3/8] %v1370, 128
        %1471 = vxpose.xlu0.c.b16.cont [4/8] %v1372, 128
        %1472 = vxpose.xlu0.c.b16.cont [5/8] %v1374, 128
        %1473 = vxpose.xlu0.c.b16.cont [6/8] %v1376, 128
        %1474 = vxpose.xlu0.c.b16.cont [7/8] %v1378, 128
        %1475 = vxpose.xlu0.c.b16.end [8/8] %v1380, 128
        %v1476 = vpop.trf.xlu0
        %v1477 = vpop.trf.xlu0
        %v1478 = vpop.trf.xlu0
        %v1479 = vpop.trf.xlu0
        %v1480 = vpop.trf.xlu0
        %v1481 = vpop.trf.xlu0
        %v1482 = vpop.trf.xlu0
        %v1483 = vpop.trf.xlu0
        %v1516 = vunpack.c.l.b16 %v1381
        %v1517 = vunpack.c.l.b16 %v1382
        %v1518 = vunpack.c.l.b16 %v1383
        %v1519 = vunpack.c.l.b16 %v1384
        %v1520 = vunpack.c.l.b16 %v1385
        %v1521 = vunpack.c.l.b16 %v1386
        %v1522 = vunpack.c.l.b16 %v1387
        %v1523 = vunpack.c.l.b16 %v1388
        %v1524 = vunpack.c.l.b16 %v1389
        %v1525 = vunpack.c.l.b16 %v1390
        %v1526 = vunpack.c.l.b16 %v1391
        %v1527 = vunpack.c.l.b16 %v1392
        %v1528 = vunpack.c.l.b16 %v1393
        %v1529 = vunpack.c.l.b16 %v1394
        %v1530 = vunpack.c.l.b16 %v1395
        %v1531 = vunpack.c.l.b16 %v1396
        %v1532 = vunpack.c.l.b16 %v1397
        %v1533 = vunpack.c.l.b16 %v1398
        %v1534 = vunpack.c.l.b16 %v1399
        %v1535 = vunpack.c.l.b16 %v1400
        %v1536 = vunpack.c.l.b16 %v1401
        %v1537 = vunpack.c.l.b16 %v1402
        %v1538 = vunpack.c.l.b16 %v1403
        %v1539 = vunpack.c.l.b16 %v1404
        %v1540 = vunpack.c.l.b16 %v1405
        %v1541 = vunpack.c.l.b16 %v1406
        %v1542 = vunpack.c.l.b16 %v1407
        %v1543 = vunpack.c.l.b16 %v1408
        %v1544 = vunpack.c.l.b16 %v1409
        %v1545 = vunpack.c.l.b16 %v1410
        %v1546 = vunpack.c.l.b16 %v1411
        %v1547 = vunpack.c.l.b16 %v1412
        %v1548 = vpack.c.b16 %v1517, %v1516
        %v1549 = vpack.c.b16 %v1519, %v1518
        %v1550 = vpack.c.b16 %v1521, %v1520
        %v1551 = vpack.c.b16 %v1523, %v1522
        %v1552 = vpack.c.b16 %v1525, %v1524
        %v1553 = vpack.c.b16 %v1527, %v1526
        %v1554 = vpack.c.b16 %v1529, %v1528
        %v1555 = vpack.c.b16 %v1531, %v1530
        %v1556 = vpack.c.b16 %v1533, %v1532
        %v1557 = vpack.c.b16 %v1535, %v1534
        %v1558 = vpack.c.b16 %v1537, %v1536
        %v1559 = vpack.c.b16 %v1539, %v1538
        %v1560 = vpack.c.b16 %v1541, %v1540
        %v1561 = vpack.c.b16 %v1543, %v1542
        %v1562 = vpack.c.b16 %v1545, %v1544
        %v1563 = vpack.c.b16 %v1547, %v1546
        %1580 = vmatprep.subr.bf16.mxu0 0
        %1581 = vmatpush1.bf16.msra.mxu0 %v1548
        %1582 = vmatprep.subr.bf16.mxu0 0
        %1583 = vmatpush1.bf16.msra.mxu0 %v1549
        %1584 = vmatprep.subr.bf16.mxu0 0
        %1585 = vmatpush1.bf16.msra.mxu0 %v1550
        %1586 = vmatprep.subr.bf16.mxu0 0
        %1587 = vmatpush1.bf16.msra.mxu0 %v1551
        %1588 = vmatprep.subr.bf16.mxu0 0
        %1589 = vmatpush1.bf16.msra.mxu0 %v1552
        %1590 = vmatprep.subr.bf16.mxu0 0
        %1591 = vmatpush1.bf16.msra.mxu0 %v1553
        %1592 = vmatprep.subr.bf16.mxu0 0
        %1593 = vmatpush1.bf16.msra.mxu0 %v1554
        %1594 = vmatprep.subr.bf16.mxu0 0
        %1595 = vmatpush1.bf16.msra.mxu0 %v1555
        %1596 = vmatprep.subr.bf16.mxu0 0
        %1597 = vmatpush1.bf16.msra.mxu0 %v1556
        %1598 = vmatprep.subr.bf16.mxu0 0
        %1599 = vmatpush1.bf16.msra.mxu0 %v1557
        %1600 = vmatprep.subr.bf16.mxu0 0
        %1601 = vmatpush1.bf16.msra.mxu0 %v1558
        %1602 = vmatprep.subr.bf16.mxu0 0
        %1603 = vmatpush1.bf16.msra.mxu0 %v1559
        %1604 = vmatprep.subr.bf16.mxu0 0
        %1605 = vmatpush1.bf16.msra.mxu0 %v1560
        %1606 = vmatprep.subr.bf16.mxu0 0
        %1607 = vmatpush1.bf16.msra.mxu0 %v1561
        %1608 = vmatprep.subr.bf16.mxu0 0
        %1609 = vmatpush1.bf16.msra.mxu0 %v1562
        %1610 = vmatprep.subr.bf16.mxu0 0
        %1611 = vmatpush1.bf16.msra.mxu0 %v1563
        %1612 = vmatprep.mubr.bf16.mxu0 %v1460
        %1613 = vmatmul.mubr.bf16.gmra.mrb[0].mxu0 %v1428
        %v1614 = vpop.f32.mrb[0].mxu0
        %v1615 = vadd.f32 %v1418, %v1614
        %v1616 = vpop.f32.mrb[0].mxu0
        %v1617 = vpop.f32.mrb[0].mxu0
        %v1618 = vadd.f32 %v1418, %v1617
        %v1619 = vpop.f32.mrb[0].mxu0
        %1620 = vmatprep.mubr.bf16.mxu0 %v1461
        %1621 = vmatmul.mubr.bf16.gmra.mrb[0].mxu0 %v1429
        %v1622 = vpop.f32.mrb[0].mxu0
        %v1623 = vadd.f32 %v1418, %v1622
        %v1624 = vpop.f32.mrb[0].mxu0
        %v1625 = vpop.f32.mrb[0].mxu0
        %v1626 = vadd.f32 %v1418, %v1625
        %v1627 = vpop.f32.mrb[0].mxu0
        %1628 = vmatprep.mubr.bf16.mxu0 %v1462
        %1629 = vmatmul.mubr.bf16.gmra.mrb[0].mxu0 %v1430
        %v1630 = vpop.f32.mrb[0].mxu0
        %v1631 = vadd.f32 %v1418, %v1630
        %v1632 = vpop.f32.mrb[0].mxu0
        %v1633 = vpop.f32.mrb[0].mxu0
        %v1634 = vadd.f32 %v1418, %v1633
        %v1635 = vpop.f32.mrb[0].mxu0
        %1636 = vmatprep.mubr.bf16.mxu0 %v1463
        %1637 = vmatmul.mubr.bf16.gmra.mrb[0].mxu0 %v1431
        %v1638 = vpop.f32.mrb[0].mxu0
        %v1639 = vadd.f32 %v1418, %v1638
        %v1640 = vpop.f32.mrb[0].mxu0
        %v1641 = vpop.f32.mrb[0].mxu0
        %v1642 = vadd.f32 %v1418, %v1641
        %v1643 = vpop.f32.mrb[0].mxu0
        %1644 = vmatprep.mubr.bf16.mxu0 %v1464
        %1645 = vmatmul.mubr.bf16.gmra.mrb[0].mxu0 %v1432
        %v1646 = vpop.f32.mrb[0].mxu0
        %v1647 = vadd.f32 %v1418, %v1646
        %v1648 = vpop.f32.mrb[0].mxu0
        %v1649 = vpop.f32.mrb[0].mxu0
        %v1650 = vadd.f32 %v1418, %v1649
        %v1651 = vpop.f32.mrb[0].mxu0
        %1652 = vmatprep.mubr.bf16.mxu0 %v1465
        %1653 = vmatmul.mubr.bf16.gmra.mrb[0].mxu0 %v1433
        %v1654 = vpop.f32.mrb[0].mxu0
        %v1655 = vadd.f32 %v1418, %v1654
        %v1656 = vpop.f32.mrb[0].mxu0
        %v1657 = vpop.f32.mrb[0].mxu0
        %v1658 = vadd.f32 %v1418, %v1657
        %v1659 = vpop.f32.mrb[0].mxu0
        %1660 = vmatprep.mubr.bf16.mxu0 %v1466
        %1661 = vmatmul.mubr.bf16.gmra.mrb[0].mxu0 %v1434
        %v1662 = vpop.f32.mrb[0].mxu0
        %v1663 = vadd.f32 %v1418, %v1662
        %v1664 = vpop.f32.mrb[0].mxu0
        %v1665 = vpop.f32.mrb[0].mxu0
        %v1666 = vadd.f32 %v1418, %v1665
        %v1667 = vpop.f32.mrb[0].mxu0
        %1668 = vmatprep.mubr.bf16.mxu0 %v1467
        %1669 = vmatmul.mubr.bf16.gmra.mrb[0].mxu0 %v1435
        %v1670 = vpop.f32.mrb[0].mxu0
        %v1671 = vadd.f32 %v1418, %v1670
        %v1672 = vpop.f32.mrb[0].mxu0
        %v1673 = vpop.f32.mrb[0].mxu0
        %v1674 = vadd.f32 %v1418, %v1673
        %v1675 = vpop.f32.mrb[0].mxu0
        %1676 = vmatprep.mubr.bf16.mxu0 %v1476
        %1677 = vmatmul.mubr.bf16.gmra.mrb[0].mxu0 %v1444
        %v1678 = vpop.f32.mrb[0].mxu0
        %v1679 = vadd.f32 %v1418, %v1678
        %v1680 = vpop.f32.mrb[0].mxu0
        %v1681 = vpop.f32.mrb[0].mxu0
        %v1682 = vadd.f32 %v1418, %v1681
        %v1683 = vpop.f32.mrb[0].mxu0
        %1684 = vmatprep.mubr.bf16.mxu0 %v1477
        %1685 = vmatmul.mubr.bf16.gmra.mrb[0].mxu0 %v1445
        %v1686 = vpop.f32.mrb[0].mxu0
        %v1687 = vadd.f32 %v1418, %v1686
        %v1688 = vpop.f32.mrb[0].mxu0
        %v1689 = vpop.f32.mrb[0].mxu0
        %v1690 = vadd.f32 %v1418, %v1689
        %v1691 = vpop.f32.mrb[0].mxu0
        %1692 = vmatprep.mubr.bf16.mxu0 %v1478
        %1693 = vmatmul.mubr.bf16.gmra.mrb[0].mxu0 %v1446
        %v1694 = vpop.f32.mrb[0].mxu0
        %v1695 = vadd.f32 %v1418, %v1694
        %v1696 = vpop.f32.mrb[0].mxu0
        %v1697 = vpop.f32.mrb[0].mxu0
        %v1698 = vadd.f32 %v1418, %v1697
        %v1699 = vpop.f32.mrb[0].mxu0
        %1700 = vmatprep.mubr.bf16.mxu0 %v1479
        %1701 = vmatmul.mubr.bf16.gmra.mrb[0].mxu0 %v1447
        %v1702 = vpop.f32.mrb[0].mxu0
        %v1703 = vadd.f32 %v1418, %v1702
        %v1704 = vpop.f32.mrb[0].mxu0
        %v1705 = vpop.f32.mrb[0].mxu0
        %v1706 = vadd.f32 %v1418, %v1705
        %v1707 = vpop.f32.mrb[0].mxu0
        %1708 = vmatprep.mubr.bf16.mxu0 %v1480
        %1709 = vmatmul.mubr.bf16.gmra.mrb[0].mxu0 %v1448
        %v1710 = vpop.f32.mrb[0].mxu0
        %v1711 = vadd.f32 %v1418, %v1710
        %v1712 = vpop.f32.mrb[0].mxu0
        %v1713 = vpop.f32.mrb[0].mxu0
        %v1714 = vadd.f32 %v1418, %v1713
        %v1715 = vpop.f32.mrb[0].mxu0
        %1716 = vmatprep.mubr.bf16.mxu0 %v1481
        %1717 = vmatmul.mubr.bf16.gmra.mrb[0].mxu0 %v1449
        %v1718 = vpop.f32.mrb[0].mxu0
        %v1719 = vadd.f32 %v1418, %v1718
        %v1720 = vpop.f32.mrb[0].mxu0
        %v1721 = vpop.f32.mrb[0].mxu0
        %v1722 = vadd.f32 %v1418, %v1721
        %v1723 = vpop.f32.mrb[0].mxu0
        %1724 = vmatprep.mubr.bf16.mxu0 %v1482
        %1725 = vmatmul.mubr.bf16.gmra.mrb[0].mxu0 %v1450
        %v1726 = vpop.f32.mrb[0].mxu0
        %v1727 = vadd.f32 %v1418, %v1726
        %v1728 = vpop.f32.mrb[0].mxu0
        %v1729 = vpop.f32.mrb[0].mxu0
        %v1730 = vadd.f32 %v1418, %v1729
        %v1731 = vpop.f32.mrb[0].mxu0
        %1732 = vmatprep.mubr.bf16.mxu0 %v1483
        %1733 = vmatmul.mubr.bf16.gmra.mrb[0].mxu0 %v1451
        %v1734 = vpop.f32.mrb[0].mxu0
        %v1735 = vadd.f32 %v1418, %v1734
        %v1736 = vpop.f32.mrb[0].mxu0
        %v1737 = vpop.f32.mrb[0].mxu0
        %v1738 = vadd.f32 %v1418, %v1737
        %v1739 = vpop.f32.mrb[0].mxu0
        %1740 = vdwg.mxu0
        %v1741 = vmax.f32 %v1615, 0.0
        %v1742 = vmax.f32 %v1618, 0.0
        %v1743 = vmax.f32 %v1623, 0.0
        %v1744 = vmax.f32 %v1626, 0.0
        %v1745 = vmax.f32 %v1631, 0.0
        %v1746 = vmax.f32 %v1634, 0.0
        %v1747 = vmax.f32 %v1639, 0.0
        %v1748 = vmax.f32 %v1642, 0.0
        %v1749 = vmax.f32 %v1647, 0.0
        %v1750 = vmax.f32 %v1650, 0.0
        %v1751 = vmax.f32 %v1655, 0.0
        %v1752 = vmax.f32 %v1658, 0.0
        %v1753 = vmax.f32 %v1663, 0.0
        %v1754 = vmax.f32 %v1666, 0.0
        %v1755 = vmax.f32 %v1671, 0.0
        %v1756 = vmax.f32 %v1674, 0.0
        %v1757 = vmax.f32 %v1679, 0.0
        %v1758 = vmax.f32 %v1682, 0.0
        %v1759 = vmax.f32 %v1687, 0.0
        %v1760 = vmax.f32 %v1690, 0.0
        %v1761 = vmax.f32 %v1695, 0.0
        %v1762 = vmax.f32 %v1698, 0.0
        %v1763 = vmax.f32 %v1703, 0.0
        %v1764 = vmax.f32 %v1706, 0.0
        %v1765 = vmax.f32 %v1711, 0.0
        %v1766 = vmax.f32 %v1714, 0.0
        %v1767 = vmax.f32 %v1719, 0.0
        %v1768 = vmax.f32 %v1722, 0.0
        %v1769 = vmax.f32 %v1727, 0.0
        %v1770 = vmax.f32 %v1730, 0.0
        %v1771 = vmax.f32 %v1735, 0.0
        %v1772 = vmax.f32 %v1738, 0.0
        %v1773 = vadd.f32 %v1741, %v1742
        %v1774 = vadd.f32 %v1773, %v1743
        %v1775 = vadd.f32 %v1774, %v1744
        %v1776 = vadd.f32 %v1775, %v1745
        %v1777 = vadd.f32 %v1776, %v1746
        %v1778 = vadd.f32 %v1777, %v1747
        %v1779 = vadd.f32 %v1778, %v1748
        %v1780 = vadd.f32 %v1779, %v1749
        %v1781 = vadd.f32 %v1780, %v1750
        %v1782 = vadd.f32 %v1781, %v1751
        %v1783 = vadd.f32 %v1782, %v1752
        %v1784 = vadd.f32 %v1783, %v1753
        %v1785 = vadd.f32 %v1784, %v1754
        %v1786 = vadd.f32 %v1785, %v1755
        %v1787 = vadd.f32 %v1786, %v1756
        %v1788 = vadd.f32 %v1787, %v1757
        %v1789 = vadd.f32 %v1788, %v1758
        %v1790 = vadd.f32 %v1789, %v1759
        %v1791 = vadd.f32 %v1790, %v1760
        %v1792 = vadd.f32 %v1791, %v1761
        %v1793 = vadd.f32 %v1792, %v1762
        %v1794 = vadd.f32 %v1793, %v1763
        %v1795 = vadd.f32 %v1794, %v1764
        %v1796 = vadd.f32 %v1795, %v1765
        %v1797 = vadd.f32 %v1796, %v1766
        %v1798 = vadd.f32 %v1797, %v1767
        %v1799 = vadd.f32 %v1798, %v1768
        %v1800 = vadd.f32 %v1799, %v1769
        %v1801 = vadd.f32 %v1800, %v1770
        %v1802 = vadd.f32 %v1801, %v1771
        %v1803 = vadd.f32 %v1802, %v1772
        %v1804 = vrot.slane %v1803, 4
        %v1805 = vadd.f32 %v1803, %v1804
        %v1806 = vrot.slane %v1805, 2
        %v1807 = vadd.f32 %v1805, %v1806
        %v1808 = vrot.slane %v1807, 1
        %v1809 = vadd.f32 %v1807, %v1808
        %v1810 = vmul.f32 %v1809, 0.00390625
        %1811 = vst [vmem:[#allocation2 + $0x2] sm:$0x1] %v1810
        %s1812 = scalar_lea.vmem %s226, 1536
        %v1813 = vld [vmem:[%s1812] sm:$0xff]
        %v1814 = vld [vmem:[%s1812 + $0x8] sm:$0xff]
        %v1815 = vld [vmem:[%s1812 + $0x10] sm:$0xff]
        %v1816 = vld [vmem:[%s1812 + $0x18] sm:$0xff]
        %v1817 = vld [vmem:[%s1812 + $0x20] sm:$0xff]
        %v1818 = vld [vmem:[%s1812 + $0x28] sm:$0xff]
        %v1819 = vld [vmem:[%s1812 + $0x30] sm:$0xff]
        %v1820 = vld [vmem:[%s1812 + $0x38] sm:$0xff]
        %v1821 = vld [vmem:[%s1812 + $0x40] sm:$0xff]
        %v1822 = vld [vmem:[%s1812 + $0x48] sm:$0xff]
        %v1823 = vld [vmem:[%s1812 + $0x50] sm:$0xff]
        %v1824 = vld [vmem:[%s1812 + $0x58] sm:$0xff]
        %v1825 = vld [vmem:[%s1812 + $0x60] sm:$0xff]
        %v1826 = vld [vmem:[%s1812 + $0x68] sm:$0xff]
        %v1827 = vld [vmem:[%s1812 + $0x70] sm:$0xff]
        %v1828 = vld [vmem:[%s1812 + $0x78] sm:$0xff]
        %v1829 = vld [vmem:[%s1812 + $0x80] sm:$0xff]
        %v1830 = vld [vmem:[%s1812 + $0x88] sm:$0xff]
        %v1831 = vld [vmem:[%s1812 + $0x90] sm:$0xff]
        %v1832 = vld [vmem:[%s1812 + $0x98] sm:$0xff]
        %v1833 = vld [vmem:[%s1812 + $0xa0] sm:$0xff]
        %v1834 = vld [vmem:[%s1812 + $0xa8] sm:$0xff]
        %v1835 = vld [vmem:[%s1812 + $0xb0] sm:$0xff]
        %v1836 = vld [vmem:[%s1812 + $0xb8] sm:$0xff]
        %v1837 = vld [vmem:[%s1812 + $0xc0] sm:$0xff]
        %v1838 = vld [vmem:[%s1812 + $0xc8] sm:$0xff]
        %v1839 = vld [vmem:[%s1812 + $0xd0] sm:$0xff]
        %v1840 = vld [vmem:[%s1812 + $0xd8] sm:$0xff]
        %v1841 = vld [vmem:[%s1812 + $0xe0] sm:$0xff]
        %v1842 = vld [vmem:[%s1812 + $0xe8] sm:$0xff]
        %v1843 = vld [vmem:[%s1812 + $0xf0] sm:$0xff]
        %v1844 = vld [vmem:[%s1812 + $0xf8] sm:$0xff]
        %v1845 = vld [vmem:[%s1812 + $0x100] sm:$0xff]
        %v1846 = vld [vmem:[%s1812 + $0x108] sm:$0xff]
        %v1847 = vld [vmem:[%s1812 + $0x110] sm:$0xff]
        %v1848 = vld [vmem:[%s1812 + $0x118] sm:$0xff]
        %v1849 = vld [vmem:[%s1812 + $0x120] sm:$0xff]
        %v1850 = vld [vmem:[%s1812 + $0x128] sm:$0xff]
        %v1851 = vld [vmem:[%s1812 + $0x130] sm:$0xff]
        %v1852 = vld [vmem:[%s1812 + $0x138] sm:$0xff]
        %v1853 = vld [vmem:[%s1812 + $0x140] sm:$0xff]
        %v1854 = vld [vmem:[%s1812 + $0x148] sm:$0xff]
        %v1855 = vld [vmem:[%s1812 + $0x150] sm:$0xff]
        %v1856 = vld [vmem:[%s1812 + $0x158] sm:$0xff]
        %v1857 = vld [vmem:[%s1812 + $0x160] sm:$0xff]
        %v1858 = vld [vmem:[%s1812 + $0x168] sm:$0xff]
        %v1859 = vld [vmem:[%s1812 + $0x170] sm:$0xff]
        %v1860 = vld [vmem:[%s1812 + $0x178] sm:$0xff]
        %v1861 = vld [vmem:[%s1812 + $0x180] sm:$0xff]
        %v1862 = vld [vmem:[%s1812 + $0x188] sm:$0xff]
        %v1863 = vld [vmem:[%s1812 + $0x190] sm:$0xff]
        %v1864 = vld [vmem:[%s1812 + $0x198] sm:$0xff]
        %v1865 = vld [vmem:[%s1812 + $0x1a0] sm:$0xff]
        %v1866 = vld [vmem:[%s1812 + $0x1a8] sm:$0xff]
        %v1867 = vld [vmem:[%s1812 + $0x1b0] sm:$0xff]
        %v1868 = vld [vmem:[%s1812 + $0x1b8] sm:$0xff]
        %v1869 = vld [vmem:[%s1812 + $0x1c0] sm:$0xff]
        %v1870 = vld [vmem:[%s1812 + $0x1c8] sm:$0xff]
        %v1871 = vld [vmem:[%s1812 + $0x1d0] sm:$0xff]
        %v1872 = vld [vmem:[%s1812 + $0x1d8] sm:$0xff]
        %v1873 = vld [vmem:[%s1812 + $0x1e0] sm:$0xff]
        %v1874 = vld [vmem:[%s1812 + $0x1e8] sm:$0xff]
        %v1875 = vld [vmem:[%s1812 + $0x1f0] sm:$0xff]
        %v1876 = vld [vmem:[%s1812 + $0x1f8] sm:$0xff]
        %v1877 = vpack.c.bf16 %v1815, %v1813
        %v1878 = vpack.c.bf16 %v1816, %v1814
        %v1879 = vpack.c.bf16 %v1819, %v1817
        %v1880 = vpack.c.bf16 %v1820, %v1818
        %v1881 = vpack.c.bf16 %v1823, %v1821
        %v1882 = vpack.c.bf16 %v1824, %v1822
        %v1883 = vpack.c.bf16 %v1827, %v1825
        %v1884 = vpack.c.bf16 %v1828, %v1826
        %v1885 = vpack.c.bf16 %v1831, %v1829
        %v1886 = vpack.c.bf16 %v1832, %v1830
        %v1887 = vpack.c.bf16 %v1835, %v1833
        %v1888 = vpack.c.bf16 %v1836, %v1834
        %v1889 = vpack.c.bf16 %v1839, %v1837
        %v1890 = vpack.c.bf16 %v1840, %v1838
        %v1891 = vpack.c.bf16 %v1843, %v1841
        %v1892 = vpack.c.bf16 %v1844, %v1842
        %v1893 = vpack.c.bf16 %v1847, %v1845
        %v1894 = vpack.c.bf16 %v1848, %v1846
        %v1895 = vpack.c.bf16 %v1851, %v1849
        %v1896 = vpack.c.bf16 %v1852, %v1850
        %v1897 = vpack.c.bf16 %v1855, %v1853
        %v1898 = vpack.c.bf16 %v1856, %v1854
        %v1899 = vpack.c.bf16 %v1859, %v1857
        %v1900 = vpack.c.bf16 %v1860, %v1858
        %v1901 = vpack.c.bf16 %v1863, %v1861
        %v1902 = vpack.c.bf16 %v1864, %v1862
        %v1903 = vpack.c.bf16 %v1867, %v1865
        %v1904 = vpack.c.bf16 %v1868, %v1866
        %v1905 = vpack.c.bf16 %v1871, %v1869
        %v1906 = vpack.c.bf16 %v1872, %v1870
        %v1907 = vpack.c.bf16 %v1875, %v1873
        %v1908 = vpack.c.bf16 %v1876, %v1874
        %v1909 = vld [vmem:[%s1] sm:$0xf]
        %v1910 = vld [vmem:[%s1 + $0x4] sm:$0xf]
        %v1911 = vld [vmem:[%s1 + $0x8] sm:$0xf]
        %v1912 = vld [vmem:[%s1 + $0xc] sm:$0xf]
        %v1913 = vld [vmem:[%s1 + $0x10] sm:$0xf]
        %v1914 = vld [vmem:[%s1 + $0x14] sm:$0xf]
        %v1915 = vld [vmem:[%s1 + $0x18] sm:$0xf]
        %v1916 = vld [vmem:[%s1 + $0x1c] sm:$0xf]
        %v1917 = vld [vmem:[%s1 + $0x20] sm:$0xf]
        %v1918 = vld [vmem:[%s1 + $0x24] sm:$0xf]
        %v1919 = vld [vmem:[%s1 + $0x28] sm:$0xf]
        %v1920 = vld [vmem:[%s1 + $0x2c] sm:$0xf]
        %v1921 = vld [vmem:[%s1 + $0x30] sm:$0xf]
        %v1922 = vld [vmem:[%s1 + $0x34] sm:$0xf]
        %v1923 = vld [vmem:[%s1 + $0x38] sm:$0xf]
        %v1924 = vld [vmem:[%s1 + $0x3c] sm:$0xf]
        %v1925 = vld [vmem:[%s1 + $0x40] sm:$0xf]
        %v1926 = vld [vmem:[%s1 + $0x44] sm:$0xf]
        %v1927 = vld [vmem:[%s1 + $0x48] sm:$0xf]
        %v1928 = vld [vmem:[%s1 + $0x4c] sm:$0xf]
        %v1929 = vld [vmem:[%s1 + $0x50] sm:$0xf]
        %v1930 = vld [vmem:[%s1 + $0x54] sm:$0xf]
        %v1931 = vld [vmem:[%s1 + $0x58] sm:$0xf]
        %v1932 = vld [vmem:[%s1 + $0x5c] sm:$0xf]
        %v1933 = vld [vmem:[%s1 + $0x60] sm:$0xf]
        %v1934 = vld [vmem:[%s1 + $0x64] sm:$0xf]
        %v1935 = vld [vmem:[%s1 + $0x68] sm:$0xf]
        %v1936 = vld [vmem:[%s1 + $0x6c] sm:$0xf]
        %v1937 = vld [vmem:[%s1 + $0x70] sm:$0xf]
        %v1938 = vld [vmem:[%s1 + $0x74] sm:$0xf]
        %v1939 = vld [vmem:[%s1 + $0x78] sm:$0xf]
        %v1940 = vld [vmem:[%s1 + $0x7c] sm:$0xf]
        %v1941 = vld [vmem:[%s2] sm:$0x1]
        %v1943 = vlaneseq
        %v1944 = vshrl.u32 %v1943, 7
        %v1945 = vsub.s32 0, %v1944
        %v1946 = vrot.slane %v1941, %v1945
        %1948 = vxpose.xlu0.c.b16.start [1/8] %v1877, 128
        %1949 = vxpose.xlu0.c.b16.cont [2/8] %v1879, 128
        %1950 = vxpose.xlu0.c.b16.cont [3/8] %v1881, 128
        %1951 = vxpose.xlu0.c.b16.cont [4/8] %v1883, 128
        %1952 = vxpose.xlu0.c.b16.cont [5/8] %v1885, 128
        %1953 = vxpose.xlu0.c.b16.cont [6/8] %v1887, 128
        %1954 = vxpose.xlu0.c.b16.cont [7/8] %v1889, 128
        %1955 = vxpose.xlu0.c.b16.end [8/8] %v1891, 128
        %v1956 = vpop.trf.xlu0
        %v1957 = vpop.trf.xlu0
        %v1958 = vpop.trf.xlu0
        %v1959 = vpop.trf.xlu0
        %v1960 = vpop.trf.xlu0
        %v1961 = vpop.trf.xlu0
        %v1962 = vpop.trf.xlu0
        %v1963 = vpop.trf.xlu0
        %1964 = vxpose.xlu0.c.b16.start [1/8] %v1878, 128
        %1965 = vxpose.xlu0.c.b16.cont [2/8] %v1880, 128
        %1966 = vxpose.xlu0.c.b16.cont [3/8] %v1882, 128
        %1967 = vxpose.xlu0.c.b16.cont [4/8] %v1884, 128
        %1968 = vxpose.xlu0.c.b16.cont [5/8] %v1886, 128
        %1969 = vxpose.xlu0.c.b16.cont [6/8] %v1888, 128
        %1970 = vxpose.xlu0.c.b16.cont [7/8] %v1890, 128
        %1971 = vxpose.xlu0.c.b16.end [8/8] %v1892, 128
        %v1972 = vpop.trf.xlu0
        %v1973 = vpop.trf.xlu0
        %v1974 = vpop.trf.xlu0
        %v1975 = vpop.trf.xlu0
        %v1976 = vpop.trf.xlu0
        %v1977 = vpop.trf.xlu0
        %v1978 = vpop.trf.xlu0
        %v1979 = vpop.trf.xlu0
        %1980 = vxpose.xlu0.c.b16.start [1/8] %v1893, 128
        %1981 = vxpose.xlu0.c.b16.cont [2/8] %v1895, 128
        %1982 = vxpose.xlu0.c.b16.cont [3/8] %v1897, 128
        %1983 = vxpose.xlu0.c.b16.cont [4/8] %v1899, 128
        %1984 = vxpose.xlu0.c.b16.cont [5/8] %v1901, 128
        %1985 = vxpose.xlu0.c.b16.cont [6/8] %v1903, 128
        %1986 = vxpose.xlu0.c.b16.cont [7/8] %v1905, 128
        %1987 = vxpose.xlu0.c.b16.end [8/8] %v1907, 128
        %v1988 = vpop.trf.xlu0
        %v1989 = vpop.trf.xlu0
        %v1990 = vpop.trf.xlu0
        %v1991 = vpop.trf.xlu0
        %v1992 = vpop.trf.xlu0
        %v1993 = vpop.trf.xlu0
        %v1994 = vpop.trf.xlu0
        %v1995 = vpop.trf.xlu0
        %1996 = vxpose.xlu0.c.b16.start [1/8] %v1894, 128
        %1997 = vxpose.xlu0.c.b16.cont [2/8] %v1896, 128
        %1998 = vxpose.xlu0.c.b16.cont [3/8] %v1898, 128
        %1999 = vxpose.xlu0.c.b16.cont [4/8] %v1900, 128
        %2000 = vxpose.xlu0.c.b16.cont [5/8] %v1902, 128
        %2001 = vxpose.xlu0.c.b16.cont [6/8] %v1904, 128
        %2002 = vxpose.xlu0.c.b16.cont [7/8] %v1906, 128
        %2003 = vxpose.xlu0.c.b16.end [8/8] %v1908, 128
        %v2004 = vpop.trf.xlu0
        %v2005 = vpop.trf.xlu0
        %v2006 = vpop.trf.xlu0
        %v2007 = vpop.trf.xlu0
        %v2008 = vpop.trf.xlu0
        %v2009 = vpop.trf.xlu0
        %v2010 = vpop.trf.xlu0
        %v2011 = vpop.trf.xlu0
        %v2044 = vunpack.c.l.b16 %v1909
        %v2045 = vunpack.c.l.b16 %v1910
        %v2046 = vunpack.c.l.b16 %v1911
        %v2047 = vunpack.c.l.b16 %v1912
        %v2048 = vunpack.c.l.b16 %v1913
        %v2049 = vunpack.c.l.b16 %v1914
        %v2050 = vunpack.c.l.b16 %v1915
        %v2051 = vunpack.c.l.b16 %v1916
        %v2052 = vunpack.c.l.b16 %v1917
        %v2053 = vunpack.c.l.b16 %v1918
        %v2054 = vunpack.c.l.b16 %v1919
        %v2055 = vunpack.c.l.b16 %v1920
        %v2056 = vunpack.c.l.b16 %v1921
        %v2057 = vunpack.c.l.b16 %v1922
        %v2058 = vunpack.c.l.b16 %v1923
        %v2059 = vunpack.c.l.b16 %v1924
        %v2060 = vunpack.c.l.b16 %v1925
        %v2061 = vunpack.c.l.b16 %v1926
        %v2062 = vunpack.c.l.b16 %v1927
        %v2063 = vunpack.c.l.b16 %v1928
        %v2064 = vunpack.c.l.b16 %v1929
        %v2065 = vunpack.c.l.b16 %v1930
        %v2066 = vunpack.c.l.b16 %v1931
        %v2067 = vunpack.c.l.b16 %v1932
        %v2068 = vunpack.c.l.b16 %v1933
        %v2069 = vunpack.c.l.b16 %v1934
        %v2070 = vunpack.c.l.b16 %v1935
        %v2071 = vunpack.c.l.b16 %v1936
        %v2072 = vunpack.c.l.b16 %v1937
        %v2073 = vunpack.c.l.b16 %v1938
        %v2074 = vunpack.c.l.b16 %v1939
        %v2075 = vunpack.c.l.b16 %v1940
        %v2076 = vpack.c.b16 %v2045, %v2044
        %v2077 = vpack.c.b16 %v2047, %v2046
        %v2078 = vpack.c.b16 %v2049, %v2048
        %v2079 = vpack.c.b16 %v2051, %v2050
        %v2080 = vpack.c.b16 %v2053, %v2052
        %v2081 = vpack.c.b16 %v2055, %v2054
        %v2082 = vpack.c.b16 %v2057, %v2056
        %v2083 = vpack.c.b16 %v2059, %v2058
        %v2084 = vpack.c.b16 %v2061, %v2060
        %v2085 = vpack.c.b16 %v2063, %v2062
        %v2086 = vpack.c.b16 %v2065, %v2064
        %v2087 = vpack.c.b16 %v2067, %v2066
        %v2088 = vpack.c.b16 %v2069, %v2068
        %v2089 = vpack.c.b16 %v2071, %v2070
        %v2090 = vpack.c.b16 %v2073, %v2072
        %v2091 = vpack.c.b16 %v2075, %v2074
        %2108 = vmatprep.subr.bf16.mxu0 0
        %2109 = vmatpush1.bf16.msra.mxu0 %v2076
        %2110 = vmatprep.subr.bf16.mxu0 0
        %2111 = vmatpush1.bf16.msra.mxu0 %v2077
        %2112 = vmatprep.subr.bf16.mxu0 0
        %2113 = vmatpush1.bf16.msra.mxu0 %v2078
        %2114 = vmatprep.subr.bf16.mxu0 0
        %2115 = vmatpush1.bf16.msra.mxu0 %v2079
        %2116 = vmatprep.subr.bf16.mxu0 0
        %2117 = vmatpush1.bf16.msra.mxu0 %v2080
        %2118 = vmatprep.subr.bf16.mxu0 0
        %2119 = vmatpush1.bf16.msra.mxu0 %v2081
        %2120 = vmatprep.subr.bf16.mxu0 0
        %2121 = vmatpush1.bf16.msra.mxu0 %v2082
        %2122 = vmatprep.subr.bf16.mxu0 0
        %2123 = vmatpush1.bf16.msra.mxu0 %v2083
        %2124 = vmatprep.subr.bf16.mxu0 0
        %2125 = vmatpush1.bf16.msra.mxu0 %v2084
        %2126 = vmatprep.subr.bf16.mxu0 0
        %2127 = vmatpush1.bf16.msra.mxu0 %v2085
        %2128 = vmatprep.subr.bf16.mxu0 0
        %2129 = vmatpush1.bf16.msra.mxu0 %v2086
        %2130 = vmatprep.subr.bf16.mxu0 0
        %2131 = vmatpush1.bf16.msra.mxu0 %v2087
        %2132 = vmatprep.subr.bf16.mxu0 0
        %2133 = vmatpush1.bf16.msra.mxu0 %v2088
        %2134 = vmatprep.subr.bf16.mxu0 0
        %2135 = vmatpush1.bf16.msra.mxu0 %v2089
        %2136 = vmatprep.subr.bf16.mxu0 0
        %2137 = vmatpush1.bf16.msra.mxu0 %v2090
        %2138 = vmatprep.subr.bf16.mxu0 0
        %2139 = vmatpush1.bf16.msra.mxu0 %v2091
        %2140 = vmatprep.mubr.bf16.mxu0 %v1988
        %2141 = vmatmul.mubr.bf16.gmra.mrb[0].mxu0 %v1956
        %v2142 = vpop.f32.mrb[0].mxu0
        %v2143 = vadd.f32 %v1946, %v2142
        %v2144 = vpop.f32.mrb[0].mxu0
        %v2145 = vpop.f32.mrb[0].mxu0
        %v2146 = vadd.f32 %v1946, %v2145
        %v2147 = vpop.f32.mrb[0].mxu0
        %2148 = vmatprep.mubr.bf16.mxu0 %v1989
        %2149 = vmatmul.mubr.bf16.gmra.mrb[0].mxu0 %v1957
        %v2150 = vpop.f32.mrb[0].mxu0
        %v2151 = vadd.f32 %v1946, %v2150
        %v2152 = vpop.f32.mrb[0].mxu0
        %v2153 = vpop.f32.mrb[0].mxu0
        %v2154 = vadd.f32 %v1946, %v2153
        %v2155 = vpop.f32.mrb[0].mxu0
        %2156 = vmatprep.mubr.bf16.mxu0 %v1990
        %2157 = vmatmul.mubr.bf16.gmra.mrb[0].mxu0 %v1958
        %v2158 = vpop.f32.mrb[0].mxu0
        %v2159 = vadd.f32 %v1946, %v2158
        %v2160 = vpop.f32.mrb[0].mxu0
        %v2161 = vpop.f32.mrb[0].mxu0
        %v2162 = vadd.f32 %v1946, %v2161
        %v2163 = vpop.f32.mrb[0].mxu0
        %2164 = vmatprep.mubr.bf16.mxu0 %v1991
        %2165 = vmatmul.mubr.bf16.gmra.mrb[0].mxu0 %v1959
        %v2166 = vpop.f32.mrb[0].mxu0
        %v2167 = vadd.f32 %v1946, %v2166
        %v2168 = vpop.f32.mrb[0].mxu0
        %v2169 = vpop.f32.mrb[0].mxu0
        %v2170 = vadd.f32 %v1946, %v2169
        %v2171 = vpop.f32.mrb[0].mxu0
        %2172 = vmatprep.mubr.bf16.mxu0 %v1992
        %2173 = vmatmul.mubr.bf16.gmra.mrb[0].mxu0 %v1960
        %v2174 = vpop.f32.mrb[0].mxu0
        %v2175 = vadd.f32 %v1946, %v2174
        %v2176 = vpop.f32.mrb[0].mxu0
        %v2177 = vpop.f32.mrb[0].mxu0
        %v2178 = vadd.f32 %v1946, %v2177
        %v2179 = vpop.f32.mrb[0].mxu0
        %2180 = vmatprep.mubr.bf16.mxu0 %v1993
        %2181 = vmatmul.mubr.bf16.gmra.mrb[0].mxu0 %v1961
        %v2182 = vpop.f32.mrb[0].mxu0
        %v2183 = vadd.f32 %v1946, %v2182
        %v2184 = vpop.f32.mrb[0].mxu0
        %v2185 = vpop.f32.mrb[0].mxu0
        %v2186 = vadd.f32 %v1946, %v2185
        %v2187 = vpop.f32.mrb[0].mxu0
        %2188 = vmatprep.mubr.bf16.mxu0 %v1994
        %2189 = vmatmul.mubr.bf16.gmra.mrb[0].mxu0 %v1962
        %v2190 = vpop.f32.mrb[0].mxu0
        %v2191 = vadd.f32 %v1946, %v2190
        %v2192 = vpop.f32.mrb[0].mxu0
        %v2193 = vpop.f32.mrb[0].mxu0
        %v2194 = vadd.f32 %v1946, %v2193
        %v2195 = vpop.f32.mrb[0].mxu0
        %2196 = vmatprep.mubr.bf16.mxu0 %v1995
        %2197 = vmatmul.mubr.bf16.gmra.mrb[0].mxu0 %v1963
        %v2198 = vpop.f32.mrb[0].mxu0
        %v2199 = vadd.f32 %v1946, %v2198
        %v2200 = vpop.f32.mrb[0].mxu0
        %v2201 = vpop.f32.mrb[0].mxu0
        %v2202 = vadd.f32 %v1946, %v2201
        %v2203 = vpop.f32.mrb[0].mxu0
        %2204 = vmatprep.mubr.bf16.mxu0 %v2004
        %2205 = vmatmul.mubr.bf16.gmra.mrb[0].mxu0 %v1972
        %v2206 = vpop.f32.mrb[0].mxu0
        %v2207 = vadd.f32 %v1946, %v2206
        %v2208 = vpop.f32.mrb[0].mxu0
        %v2209 = vpop.f32.mrb[0].mxu0
        %v2210 = vadd.f32 %v1946, %v2209
        %v2211 = vpop.f32.mrb[0].mxu0
        %2212 = vmatprep.mubr.bf16.mxu0 %v2005
        %2213 = vmatmul.mubr.bf16.gmra.mrb[0].mxu0 %v1973
        %v2214 = vpop.f32.mrb[0].mxu0
        %v2215 = vadd.f32 %v1946, %v2214
        %v2216 = vpop.f32.mrb[0].mxu0
        %v2217 = vpop.f32.mrb[0].mxu0
        %v2218 = vadd.f32 %v1946, %v2217
        %v2219 = vpop.f32.mrb[0].mxu0
        %2220 = vmatprep.mubr.bf16.mxu0 %v2006
        %2221 = vmatmul.mubr.bf16.gmra.mrb[0].mxu0 %v1974
        %v2222 = vpop.f32.mrb[0].mxu0
        %v2223 = vadd.f32 %v1946, %v2222
        %v2224 = vpop.f32.mrb[0].mxu0
        %v2225 = vpop.f32.mrb[0].mxu0
        %v2226 = vadd.f32 %v1946, %v2225
        %v2227 = vpop.f32.mrb[0].mxu0
        %2228 = vmatprep.mubr.bf16.mxu0 %v2007
        %2229 = vmatmul.mubr.bf16.gmra.mrb[0].mxu0 %v1975
        %v2230 = vpop.f32.mrb[0].mxu0
        %v2231 = vadd.f32 %v1946, %v2230
        %v2232 = vpop.f32.mrb[0].mxu0
        %v2233 = vpop.f32.mrb[0].mxu0
        %v2234 = vadd.f32 %v1946, %v2233
        %v2235 = vpop.f32.mrb[0].mxu0
        %2236 = vmatprep.mubr.bf16.mxu0 %v2008
        %2237 = vmatmul.mubr.bf16.gmra.mrb[0].mxu0 %v1976
        %v2238 = vpop.f32.mrb[0].mxu0
        %v2239 = vadd.f32 %v1946, %v2238
        %v2240 = vpop.f32.mrb[0].mxu0
        %v2241 = vpop.f32.mrb[0].mxu0
        %v2242 = vadd.f32 %v1946, %v2241
        %v2243 = vpop.f32.mrb[0].mxu0
        %2244 = vmatprep.mubr.bf16.mxu0 %v2009
        %2245 = vmatmul.mubr.bf16.gmra.mrb[0].mxu0 %v1977
        %v2246 = vpop.f32.mrb[0].mxu0
        %v2247 = vadd.f32 %v1946, %v2246
        %v2248 = vpop.f32.mrb[0].mxu0
        %v2249 = vpop.f32.mrb[0].mxu0
        %v2250 = vadd.f32 %v1946, %v2249
        %v2251 = vpop.f32.mrb[0].mxu0
        %2252 = vmatprep.mubr.bf16.mxu0 %v2010
        %2253 = vmatmul.mubr.bf16.gmra.mrb[0].mxu0 %v1978
        %v2254 = vpop.f32.mrb[0].mxu0
        %v2255 = vadd.f32 %v1946, %v2254
        %v2256 = vpop.f32.mrb[0].mxu0
        %v2257 = vpop.f32.mrb[0].mxu0
        %v2258 = vadd.f32 %v1946, %v2257
        %v2259 = vpop.f32.mrb[0].mxu0
        %2260 = vmatprep.mubr.bf16.mxu0 %v2011
        %2261 = vmatmul.mubr.bf16.gmra.mrb[0].mxu0 %v1979
        %v2262 = vpop.f32.mrb[0].mxu0
        %v2263 = vadd.f32 %v1946, %v2262
        %v2264 = vpop.f32.mrb[0].mxu0
        %v2265 = vpop.f32.mrb[0].mxu0
        %v2266 = vadd.f32 %v1946, %v2265
        %v2267 = vpop.f32.mrb[0].mxu0
        %2268 = vdwg.mxu0
        %v2269 = vmax.f32 %v2143, 0.0
        %v2270 = vmax.f32 %v2146, 0.0
        %v2271 = vmax.f32 %v2151, 0.0
        %v2272 = vmax.f32 %v2154, 0.0
        %v2273 = vmax.f32 %v2159, 0.0
        %v2274 = vmax.f32 %v2162, 0.0
        %v2275 = vmax.f32 %v2167, 0.0
        %v2276 = vmax.f32 %v2170, 0.0
        %v2277 = vmax.f32 %v2175, 0.0
        %v2278 = vmax.f32 %v2178, 0.0
        %v2279 = vmax.f32 %v2183, 0.0
        %v2280 = vmax.f32 %v2186, 0.0
        %v2281 = vmax.f32 %v2191, 0.0
        %v2282 = vmax.f32 %v2194, 0.0
        %v2283 = vmax.f32 %v2199, 0.0
        %v2284 = vmax.f32 %v2202, 0.0
        %v2285 = vmax.f32 %v2207, 0.0
        %v2286 = vmax.f32 %v2210, 0.0
        %v2287 = vmax.f32 %v2215, 0.0
        %v2288 = vmax.f32 %v2218, 0.0
        %v2289 = vmax.f32 %v2223, 0.0
        %v2290 = vmax.f32 %v2226, 0.0
        %v2291 = vmax.f32 %v2231, 0.0
        %v2292 = vmax.f32 %v2234, 0.0
        %v2293 = vmax.f32 %v2239, 0.0
        %v2294 = vmax.f32 %v2242, 0.0
        %v2295 = vmax.f32 %v2247, 0.0
        %v2296 = vmax.f32 %v2250, 0.0
        %v2297 = vmax.f32 %v2255, 0.0
        %v2298 = vmax.f32 %v2258, 0.0
        %v2299 = vmax.f32 %v2263, 0.0
        %v2300 = vmax.f32 %v2266, 0.0
        %v2301 = vadd.f32 %v2269, %v2270
        %v2302 = vadd.f32 %v2301, %v2271
        %v2303 = vadd.f32 %v2302, %v2272
        %v2304 = vadd.f32 %v2303, %v2273
        %v2305 = vadd.f32 %v2304, %v2274
        %v2306 = vadd.f32 %v2305, %v2275
        %v2307 = vadd.f32 %v2306, %v2276
        %v2308 = vadd.f32 %v2307, %v2277
        %v2309 = vadd.f32 %v2308, %v2278
        %v2310 = vadd.f32 %v2309, %v2279
        %v2311 = vadd.f32 %v2310, %v2280
        %v2312 = vadd.f32 %v2311, %v2281
        %v2313 = vadd.f32 %v2312, %v2282
        %v2314 = vadd.f32 %v2313, %v2283
        %v2315 = vadd.f32 %v2314, %v2284
        %v2316 = vadd.f32 %v2315, %v2285
        %v2317 = vadd.f32 %v2316, %v2286
        %v2318 = vadd.f32 %v2317, %v2287
        %v2319 = vadd.f32 %v2318, %v2288
        %v2320 = vadd.f32 %v2319, %v2289
        %v2321 = vadd.f32 %v2320, %v2290
        %v2322 = vadd.f32 %v2321, %v2291
        %v2323 = vadd.f32 %v2322, %v2292
        %v2324 = vadd.f32 %v2323, %v2293
        %v2325 = vadd.f32 %v2324, %v2294
        %v2326 = vadd.f32 %v2325, %v2295
        %v2327 = vadd.f32 %v2326, %v2296
        %v2328 = vadd.f32 %v2327, %v2297
        %v2329 = vadd.f32 %v2328, %v2298
        %v2330 = vadd.f32 %v2329, %v2299
        %v2331 = vadd.f32 %v2330, %v2300
        %v2332 = vrot.slane %v2331, 4
        %v2333 = vadd.f32 %v2331, %v2332
        %v2334 = vrot.slane %v2333, 2
        %v2335 = vadd.f32 %v2333, %v2334
        %v2336 = vrot.slane %v2335, 1
        %v2337 = vadd.f32 %v2335, %v2336
        %v2338 = vmul.f32 %v2337, 0.00390625
        %2339 = vst [vmem:[#allocation2 + $0x3] sm:$0x1] %v2338
        %s2340 = scalar_lea.vmem %s226, 2048
        %v2341 = vld [vmem:[%s2340] sm:$0xff]
        %v2342 = vld [vmem:[%s2340 + $0x8] sm:$0xff]
        %v2343 = vld [vmem:[%s2340 + $0x10] sm:$0xff]
        %v2344 = vld [vmem:[%s2340 + $0x18] sm:$0xff]
        %v2345 = vld [vmem:[%s2340 + $0x20] sm:$0xff]
        %v2346 = vld [vmem:[%s2340 + $0x28] sm:$0xff]
        %v2347 = vld [vmem:[%s2340 + $0x30] sm:$0xff]
        %v2348 = vld [vmem:[%s2340 + $0x38] sm:$0xff]
        %v2349 = vld [vmem:[%s2340 + $0x40] sm:$0xff]
        %v2350 = vld [vmem:[%s2340 + $0x48] sm:$0xff]
        %v2351 = vld [vmem:[%s2340 + $0x50] sm:$0xff]
        %v2352 = vld [vmem:[%s2340 + $0x58] sm:$0xff]
        %v2353 = vld [vmem:[%s2340 + $0x60] sm:$0xff]
        %v2354 = vld [vmem:[%s2340 + $0x68] sm:$0xff]
        %v2355 = vld [vmem:[%s2340 + $0x70] sm:$0xff]
        %v2356 = vld [vmem:[%s2340 + $0x78] sm:$0xff]
        %v2357 = vld [vmem:[%s2340 + $0x80] sm:$0xff]
        %v2358 = vld [vmem:[%s2340 + $0x88] sm:$0xff]
        %v2359 = vld [vmem:[%s2340 + $0x90] sm:$0xff]
        %v2360 = vld [vmem:[%s2340 + $0x98] sm:$0xff]
        %v2361 = vld [vmem:[%s2340 + $0xa0] sm:$0xff]
        %v2362 = vld [vmem:[%s2340 + $0xa8] sm:$0xff]
        %v2363 = vld [vmem:[%s2340 + $0xb0] sm:$0xff]
        %v2364 = vld [vmem:[%s2340 + $0xb8] sm:$0xff]
        %v2365 = vld [vmem:[%s2340 + $0xc0] sm:$0xff]
        %v2366 = vld [vmem:[%s2340 + $0xc8] sm:$0xff]
        %v2367 = vld [vmem:[%s2340 + $0xd0] sm:$0xff]
        %v2368 = vld [vmem:[%s2340 + $0xd8] sm:$0xff]
        %v2369 = vld [vmem:[%s2340 + $0xe0] sm:$0xff]
        %v2370 = vld [vmem:[%s2340 + $0xe8] sm:$0xff]
        %v2371 = vld [vmem:[%s2340 + $0xf0] sm:$0xff]
        %v2372 = vld [vmem:[%s2340 + $0xf8] sm:$0xff]
        %v2373 = vld [vmem:[%s2340 + $0x100] sm:$0xff]
        %v2374 = vld [vmem:[%s2340 + $0x108] sm:$0xff]
        %v2375 = vld [vmem:[%s2340 + $0x110] sm:$0xff]
        %v2376 = vld [vmem:[%s2340 + $0x118] sm:$0xff]
        %v2377 = vld [vmem:[%s2340 + $0x120] sm:$0xff]
        %v2378 = vld [vmem:[%s2340 + $0x128] sm:$0xff]
        %v2379 = vld [vmem:[%s2340 + $0x130] sm:$0xff]
        %v2380 = vld [vmem:[%s2340 + $0x138] sm:$0xff]
        %v2381 = vld [vmem:[%s2340 + $0x140] sm:$0xff]
        %v2382 = vld [vmem:[%s2340 + $0x148] sm:$0xff]
        %v2383 = vld [vmem:[%s2340 + $0x150] sm:$0xff]
        %v2384 = vld [vmem:[%s2340 + $0x158] sm:$0xff]
        %v2385 = vld [vmem:[%s2340 + $0x160] sm:$0xff]
        %v2386 = vld [vmem:[%s2340 + $0x168] sm:$0xff]
        %v2387 = vld [vmem:[%s2340 + $0x170] sm:$0xff]
        %v2388 = vld [vmem:[%s2340 + $0x178] sm:$0xff]
        %v2389 = vld [vmem:[%s2340 + $0x180] sm:$0xff]
        %v2390 = vld [vmem:[%s2340 + $0x188] sm:$0xff]
        %v2391 = vld [vmem:[%s2340 + $0x190] sm:$0xff]
        %v2392 = vld [vmem:[%s2340 + $0x198] sm:$0xff]
        %v2393 = vld [vmem:[%s2340 + $0x1a0] sm:$0xff]
        %v2394 = vld [vmem:[%s2340 + $0x1a8] sm:$0xff]
        %v2395 = vld [vmem:[%s2340 + $0x1b0] sm:$0xff]
        %v2396 = vld [vmem:[%s2340 + $0x1b8] sm:$0xff]
        %v2397 = vld [vmem:[%s2340 + $0x1c0] sm:$0xff]
        %v2398 = vld [vmem:[%s2340 + $0x1c8] sm:$0xff]
        %v2399 = vld [vmem:[%s2340 + $0x1d0] sm:$0xff]
        %v2400 = vld [vmem:[%s2340 + $0x1d8] sm:$0xff]
        %v2401 = vld [vmem:[%s2340 + $0x1e0] sm:$0xff]
        %v2402 = vld [vmem:[%s2340 + $0x1e8] sm:$0xff]
        %v2403 = vld [vmem:[%s2340 + $0x1f0] sm:$0xff]
        %v2404 = vld [vmem:[%s2340 + $0x1f8] sm:$0xff]
        %v2405 = vpack.c.bf16 %v2343, %v2341
        %v2406 = vpack.c.bf16 %v2344, %v2342
        %v2407 = vpack.c.bf16 %v2347, %v2345
        %v2408 = vpack.c.bf16 %v2348, %v2346
        %v2409 = vpack.c.bf16 %v2351, %v2349
        %v2410 = vpack.c.bf16 %v2352, %v2350
        %v2411 = vpack.c.bf16 %v2355, %v2353
        %v2412 = vpack.c.bf16 %v2356, %v2354
        %v2413 = vpack.c.bf16 %v2359, %v2357
        %v2414 = vpack.c.bf16 %v2360, %v2358
        %v2415 = vpack.c.bf16 %v2363, %v2361
        %v2416 = vpack.c.bf16 %v2364, %v2362
        %v2417 = vpack.c.bf16 %v2367, %v2365
        %v2418 = vpack.c.bf16 %v2368, %v2366
        %v2419 = vpack.c.bf16 %v2371, %v2369
        %v2420 = vpack.c.bf16 %v2372, %v2370
        %v2421 = vpack.c.bf16 %v2375, %v2373
        %v2422 = vpack.c.bf16 %v2376, %v2374
        %v2423 = vpack.c.bf16 %v2379, %v2377
        %v2424 = vpack.c.bf16 %v2380, %v2378
        %v2425 = vpack.c.bf16 %v2383, %v2381
        %v2426 = vpack.c.bf16 %v2384, %v2382
        %v2427 = vpack.c.bf16 %v2387, %v2385
        %v2428 = vpack.c.bf16 %v2388, %v2386
        %v2429 = vpack.c.bf16 %v2391, %v2389
        %v2430 = vpack.c.bf16 %v2392, %v2390
        %v2431 = vpack.c.bf16 %v2395, %v2393
        %v2432 = vpack.c.bf16 %v2396, %v2394
        %v2433 = vpack.c.bf16 %v2399, %v2397
        %v2434 = vpack.c.bf16 %v2400, %v2398
        %v2435 = vpack.c.bf16 %v2403, %v2401
        %v2436 = vpack.c.bf16 %v2404, %v2402
        %v2437 = vld [vmem:[%s1] sm:$0xf]
        %v2438 = vld [vmem:[%s1 + $0x4] sm:$0xf]
        %v2439 = vld [vmem:[%s1 + $0x8] sm:$0xf]
        %v2440 = vld [vmem:[%s1 + $0xc] sm:$0xf]
        %v2441 = vld [vmem:[%s1 + $0x10] sm:$0xf]
        %v2442 = vld [vmem:[%s1 + $0x14] sm:$0xf]
        %v2443 = vld [vmem:[%s1 + $0x18] sm:$0xf]
        %v2444 = vld [vmem:[%s1 + $0x1c] sm:$0xf]
        %v2445 = vld [vmem:[%s1 + $0x20] sm:$0xf]
        %v2446 = vld [vmem:[%s1 + $0x24] sm:$0xf]
        %v2447 = vld [vmem:[%s1 + $0x28] sm:$0xf]
        %v2448 = vld [vmem:[%s1 + $0x2c] sm:$0xf]
        %v2449 = vld [vmem:[%s1 + $0x30] sm:$0xf]
        %v2450 = vld [vmem:[%s1 + $0x34] sm:$0xf]
        %v2451 = vld [vmem:[%s1 + $0x38] sm:$0xf]
        %v2452 = vld [vmem:[%s1 + $0x3c] sm:$0xf]
        %v2453 = vld [vmem:[%s1 + $0x40] sm:$0xf]
        %v2454 = vld [vmem:[%s1 + $0x44] sm:$0xf]
        %v2455 = vld [vmem:[%s1 + $0x48] sm:$0xf]
        %v2456 = vld [vmem:[%s1 + $0x4c] sm:$0xf]
        %v2457 = vld [vmem:[%s1 + $0x50] sm:$0xf]
        %v2458 = vld [vmem:[%s1 + $0x54] sm:$0xf]
        %v2459 = vld [vmem:[%s1 + $0x58] sm:$0xf]
        %v2460 = vld [vmem:[%s1 + $0x5c] sm:$0xf]
        %v2461 = vld [vmem:[%s1 + $0x60] sm:$0xf]
        %v2462 = vld [vmem:[%s1 + $0x64] sm:$0xf]
        %v2463 = vld [vmem:[%s1 + $0x68] sm:$0xf]
        %v2464 = vld [vmem:[%s1 + $0x6c] sm:$0xf]
        %v2465 = vld [vmem:[%s1 + $0x70] sm:$0xf]
        %v2466 = vld [vmem:[%s1 + $0x74] sm:$0xf]
        %v2467 = vld [vmem:[%s1 + $0x78] sm:$0xf]
        %v2468 = vld [vmem:[%s1 + $0x7c] sm:$0xf]
        %v2469 = vld [vmem:[%s2] sm:$0x1]
        %v2471 = vlaneseq
        %v2472 = vshrl.u32 %v2471, 7
        %v2473 = vsub.s32 0, %v2472
        %v2474 = vrot.slane %v2469, %v2473
        %2476 = vxpose.xlu0.c.b16.start [1/8] %v2405, 128
        %2477 = vxpose.xlu0.c.b16.cont [2/8] %v2407, 128
        %2478 = vxpose.xlu0.c.b16.cont [3/8] %v2409, 128
        %2479 = vxpose.xlu0.c.b16.cont [4/8] %v2411, 128
        %2480 = vxpose.xlu0.c.b16.cont [5/8] %v2413, 128
        %2481 = vxpose.xlu0.c.b16.cont [6/8] %v2415, 128
        %2482 = vxpose.xlu0.c.b16.cont [7/8] %v2417, 128
        %2483 = vxpose.xlu0.c.b16.end [8/8] %v2419, 128
        %v2484 = vpop.trf.xlu0
        %v2485 = vpop.trf.xlu0
        %v2486 = vpop.trf.xlu0
        %v2487 = vpop.trf.xlu0
        %v2488 = vpop.trf.xlu0
        %v2489 = vpop.trf.xlu0
        %v2490 = vpop.trf.xlu0
        %v2491 = vpop.trf.xlu0
        %2492 = vxpose.xlu0.c.b16.start [1/8] %v2406, 128
        %2493 = vxpose.xlu0.c.b16.cont [2/8] %v2408, 128
        %2494 = vxpose.xlu0.c.b16.cont [3/8] %v2410, 128
        %2495 = vxpose.xlu0.c.b16.cont [4/8] %v2412, 128
        %2496 = vxpose.xlu0.c.b16.cont [5/8] %v2414, 128
        %2497 = vxpose.xlu0.c.b16.cont [6/8] %v2416, 128
        %2498 = vxpose.xlu0.c.b16.cont [7/8] %v2418, 128
        %2499 = vxpose.xlu0.c.b16.end [8/8] %v2420, 128
        %v2500 = vpop.trf.xlu0
        %v2501 = vpop.trf.xlu0
        %v2502 = vpop.trf.xlu0
        %v2503 = vpop.trf.xlu0
        %v2504 = vpop.trf.xlu0
        %v2505 = vpop.trf.xlu0
        %v2506 = vpop.trf.xlu0
        %v2507 = vpop.trf.xlu0
        %2508 = vxpose.xlu0.c.b16.start [1/8] %v2421, 128
        %2509 = vxpose.xlu0.c.b16.cont [2/8] %v2423, 128
        %2510 = vxpose.xlu0.c.b16.cont [3/8] %v2425, 128
        %2511 = vxpose.xlu0.c.b16.cont [4/8] %v2427, 128
        %2512 = vxpose.xlu0.c.b16.cont [5/8] %v2429, 128
        %2513 = vxpose.xlu0.c.b16.cont [6/8] %v2431, 128
        %2514 = vxpose.xlu0.c.b16.cont [7/8] %v2433, 128
        %2515 = vxpose.xlu0.c.b16.end [8/8] %v2435, 128
        %v2516 = vpop.trf.xlu0
        %v2517 = vpop.trf.xlu0
        %v2518 = vpop.trf.xlu0
        %v2519 = vpop.trf.xlu0
        %v2520 = vpop.trf.xlu0
        %v2521 = vpop.trf.xlu0
        %v2522 = vpop.trf.xlu0
        %v2523 = vpop.trf.xlu0
        %2524 = vxpose.xlu0.c.b16.start [1/8] %v2422, 128
        %2525 = vxpose.xlu0.c.b16.cont [2/8] %v2424, 128
        %2526 = vxpose.xlu0.c.b16.cont [3/8] %v2426, 128
        %2527 = vxpose.xlu0.c.b16.cont [4/8] %v2428, 128
        %2528 = vxpose.xlu0.c.b16.cont [5/8] %v2430, 128
        %2529 = vxpose.xlu0.c.b16.cont [6/8] %v2432, 128
        %2530 = vxpose.xlu0.c.b16.cont [7/8] %v2434, 128
        %2531 = vxpose.xlu0.c.b16.end [8/8] %v2436, 128
        %v2532 = vpop.trf.xlu0
        %v2533 = vpop.trf.xlu0
        %v2534 = vpop.trf.xlu0
        %v2535 = vpop.trf.xlu0
        %v2536 = vpop.trf.xlu0
        %v2537 = vpop.trf.xlu0
        %v2538 = vpop.trf.xlu0
        %v2539 = vpop.trf.xlu0
        %v2572 = vunpack.c.l.b16 %v2437
        %v2573 = vunpack.c.l.b16 %v2438
        %v2574 = vunpack.c.l.b16 %v2439
        %v2575 = vunpack.c.l.b16 %v2440
        %v2576 = vunpack.c.l.b16 %v2441
        %v2577 = vunpack.c.l.b16 %v2442
        %v2578 = vunpack.c.l.b16 %v2443
        %v2579 = vunpack.c.l.b16 %v2444
        %v2580 = vunpack.c.l.b16 %v2445
        %v2581 = vunpack.c.l.b16 %v2446
        %v2582 = vunpack.c.l.b16 %v2447
        %v2583 = vunpack.c.l.b16 %v2448
        %v2584 = vunpack.c.l.b16 %v2449
        %v2585 = vunpack.c.l.b16 %v2450
        %v2586 = vunpack.c.l.b16 %v2451
        %v2587 = vunpack.c.l.b16 %v2452
        %v2588 = vunpack.c.l.b16 %v2453
        %v2589 = vunpack.c.l.b16 %v2454
        %v2590 = vunpack.c.l.b16 %v2455
        %v2591 = vunpack.c.l.b16 %v2456
        %v2592 = vunpack.c.l.b16 %v2457
        %v2593 = vunpack.c.l.b16 %v2458
        %v2594 = vunpack.c.l.b16 %v2459
        %v2595 = vunpack.c.l.b16 %v2460
        %v2596 = vunpack.c.l.b16 %v2461
        %v2597 = vunpack.c.l.b16 %v2462
        %v2598 = vunpack.c.l.b16 %v2463
        %v2599 = vunpack.c.l.b16 %v2464
        %v2600 = vunpack.c.l.b16 %v2465
        %v2601 = vunpack.c.l.b16 %v2466
        %v2602 = vunpack.c.l.b16 %v2467
        %v2603 = vunpack.c.l.b16 %v2468
        %v2604 = vpack.c.b16 %v2573, %v2572
        %v2605 = vpack.c.b16 %v2575, %v2574
        %v2606 = vpack.c.b16 %v2577, %v2576
        %v2607 = vpack.c.b16 %v2579, %v2578
        %v2608 = vpack.c.b16 %v2581, %v2580
        %v2609 = vpack.c.b16 %v2583, %v2582
        %v2610 = vpack.c.b16 %v2585, %v2584
        %v2611 = vpack.c.b16 %v2587, %v2586
        %v2612 = vpack.c.b16 %v2589, %v2588
        %v2613 = vpack.c.b16 %v2591, %v2590
        %v2614 = vpack.c.b16 %v2593, %v2592
        %v2615 = vpack.c.b16 %v2595, %v2594
        %v2616 = vpack.c.b16 %v2597, %v2596
        %v2617 = vpack.c.b16 %v2599, %v2598
        %v2618 = vpack.c.b16 %v2601, %v2600
        %v2619 = vpack.c.b16 %v2603, %v2602
        %2636 = vmatprep.subr.bf16.mxu0 0
        %2637 = vmatpush1.bf16.msra.mxu0 %v2604
        %2638 = vmatprep.subr.bf16.mxu0 0
        %2639 = vmatpush1.bf16.msra.mxu0 %v2605
        %2640 = vmatprep.subr.bf16.mxu0 0
        %2641 = vmatpush1.bf16.msra.mxu0 %v2606
        %2642 = vmatprep.subr.bf16.mxu0 0
        %2643 = vmatpush1.bf16.msra.mxu0 %v2607
        %2644 = vmatprep.subr.bf16.mxu0 0
        %2645 = vmatpush1.bf16.msra.mxu0 %v2608
        %2646 = vmatprep.subr.bf16.mxu0 0
        %2647 = vmatpush1.bf16.msra.mxu0 %v2609
        %2648 = vmatprep.subr.bf16.mxu0 0
        %2649 = vmatpush1.bf16.msra.mxu0 %v2610
        %2650 = vmatprep.subr.bf16.mxu0 0
        %2651 = vmatpush1.bf16.msra.mxu0 %v2611
        %2652 = vmatprep.subr.bf16.mxu0 0
        %2653 = vmatpush1.bf16.msra.mxu0 %v2612
        %2654 = vmatprep.subr.bf16.mxu0 0
        %2655 = vmatpush1.bf16.msra.mxu0 %v2613
        %2656 = vmatprep.subr.bf16.mxu0 0
        %2657 = vmatpush1.bf16.msra.mxu0 %v2614
        %2658 = vmatprep.subr.bf16.mxu0 0
        %2659 = vmatpush1.bf16.msra.mxu0 %v2615
        %2660 = vmatprep.subr.bf16.mxu0 0
        %2661 = vmatpush1.bf16.msra.mxu0 %v2616
        %2662 = vmatprep.subr.bf16.mxu0 0
        %2663 = vmatpush1.bf16.msra.mxu0 %v2617
        %2664 = vmatprep.subr.bf16.mxu0 0
        %2665 = vmatpush1.bf16.msra.mxu0 %v2618
        %2666 = vmatprep.subr.bf16.mxu0 0
        %2667 = vmatpush1.bf16.msra.mxu0 %v2619
        %2668 = vmatprep.mubr.bf16.mxu0 %v2516
        %2669 = vmatmul.mubr.bf16.gmra.mrb[0].mxu0 %v2484
        %v2670 = vpop.f32.mrb[0].mxu0
        %v2671 = vadd.f32 %v2474, %v2670
        %v2672 = vpop.f32.mrb[0].mxu0
        %v2673 = vpop.f32.mrb[0].mxu0
        %v2674 = vadd.f32 %v2474, %v2673
        %v2675 = vpop.f32.mrb[0].mxu0
        %2676 = vmatprep.mubr.bf16.mxu0 %v2517
        %2677 = vmatmul.mubr.bf16.gmra.mrb[0].mxu0 %v2485
        %v2678 = vpop.f32.mrb[0].mxu0
        %v2679 = vadd.f32 %v2474, %v2678
        %v2680 = vpop.f32.mrb[0].mxu0
        %v2681 = vpop.f32.mrb[0].mxu0
        %v2682 = vadd.f32 %v2474, %v2681
        %v2683 = vpop.f32.mrb[0].mxu0
        %2684 = vmatprep.mubr.bf16.mxu0 %v2518
        %2685 = vmatmul.mubr.bf16.gmra.mrb[0].mxu0 %v2486
        %v2686 = vpop.f32.mrb[0].mxu0
        %v2687 = vadd.f32 %v2474, %v2686
        %v2688 = vpop.f32.mrb[0].mxu0
        %v2689 = vpop.f32.mrb[0].mxu0
        %v2690 = vadd.f32 %v2474, %v2689
        %v2691 = vpop.f32.mrb[0].mxu0
        %2692 = vmatprep.mubr.bf16.mxu0 %v2519
        %2693 = vmatmul.mubr.bf16.gmra.mrb[0].mxu0 %v2487
        %v2694 = vpop.f32.mrb[0].mxu0
        %v2695 = vadd.f32 %v2474, %v2694
        %v2696 = vpop.f32.mrb[0].mxu0
        %v2697 = vpop.f32.mrb[0].mxu0
        %v2698 = vadd.f32 %v2474, %v2697
        %v2699 = vpop.f32.mrb[0].mxu0
        %2700 = vmatprep.mubr.bf16.mxu0 %v2520
        %2701 = vmatmul.mubr.bf16.gmra.mrb[0].mxu0 %v2488
        %v2702 = vpop.f32.mrb[0].mxu0
        %v2703 = vadd.f32 %v2474, %v2702
        %v2704 = vpop.f32.mrb[0].mxu0
        %v2705 = vpop.f32.mrb[0].mxu0
        %v2706 = vadd.f32 %v2474, %v2705
        %v2707 = vpop.f32.mrb[0].mxu0
        %2708 = vmatprep.mubr.bf16.mxu0 %v2521
        %2709 = vmatmul.mubr.bf16.gmra.mrb[0].mxu0 %v2489
        %v2710 = vpop.f32.mrb[0].mxu0
        %v2711 = vadd.f32 %v2474, %v2710
        %v2712 = vpop.f32.mrb[0].mxu0
        %v2713 = vpop.f32.mrb[0].mxu0
        %v2714 = vadd.f32 %v2474, %v2713
        %v2715 = vpop.f32.mrb[0].mxu0
        %2716 = vmatprep.mubr.bf16.mxu0 %v2522
        %2717 = vmatmul.mubr.bf16.gmra.mrb[0].mxu0 %v2490
        %v2718 = vpop.f32.mrb[0].mxu0
        %v2719 = vadd.f32 %v2474, %v2718
        %v2720 = vpop.f32.mrb[0].mxu0
        %v2721 = vpop.f32.mrb[0].mxu0
        %v2722 = vadd.f32 %v2474, %v2721
        %v2723 = vpop.f32.mrb[0].mxu0
        %2724 = vmatprep.mubr.bf16.mxu0 %v2523
        %2725 = vmatmul.mubr.bf16.gmra.mrb[0].mxu0 %v2491
        %v2726 = vpop.f32.mrb[0].mxu0
        %v2727 = vadd.f32 %v2474, %v2726
        %v2728 = vpop.f32.mrb[0].mxu0
        %v2729 = vpop.f32.mrb[0].mxu0
        %v2730 = vadd.f32 %v2474, %v2729
        %v2731 = vpop.f32.mrb[0].mxu0
        %2732 = vmatprep.mubr.bf16.mxu0 %v2532
        %2733 = vmatmul.mubr.bf16.gmra.mrb[0].mxu0 %v2500
        %v2734 = vpop.f32.mrb[0].mxu0
        %v2735 = vadd.f32 %v2474, %v2734
        %v2736 = vpop.f32.mrb[0].mxu0
        %v2737 = vpop.f32.mrb[0].mxu0
        %v2738 = vadd.f32 %v2474, %v2737
        %v2739 = vpop.f32.mrb[0].mxu0
        %2740 = vmatprep.mubr.bf16.mxu0 %v2533
        %2741 = vmatmul.mubr.bf16.gmra.mrb[0].mxu0 %v2501
        %v2742 = vpop.f32.mrb[0].mxu0
        %v2743 = vadd.f32 %v2474, %v2742
        %v2744 = vpop.f32.mrb[0].mxu0
        %v2745 = vpop.f32.mrb[0].mxu0
        %v2746 = vadd.f32 %v2474, %v2745
        %v2747 = vpop.f32.mrb[0].mxu0
        %2748 = vmatprep.mubr.bf16.mxu0 %v2534
        %2749 = vmatmul.mubr.bf16.gmra.mrb[0].mxu0 %v2502
        %v2750 = vpop.f32.mrb[0].mxu0
        %v2751 = vadd.f32 %v2474, %v2750
        %v2752 = vpop.f32.mrb[0].mxu0
        %v2753 = vpop.f32.mrb[0].mxu0
        %v2754 = vadd.f32 %v2474, %v2753
        %v2755 = vpop.f32.mrb[0].mxu0
        %2756 = vmatprep.mubr.bf16.mxu0 %v2535
        %2757 = vmatmul.mubr.bf16.gmra.mrb[0].mxu0 %v2503
        %v2758 = vpop.f32.mrb[0].mxu0
        %v2759 = vadd.f32 %v2474, %v2758
        %v2760 = vpop.f32.mrb[0].mxu0
        %v2761 = vpop.f32.mrb[0].mxu0
        %v2762 = vadd.f32 %v2474, %v2761
        %v2763 = vpop.f32.mrb[0].mxu0
        %2764 = vmatprep.mubr.bf16.mxu0 %v2536
        %2765 = vmatmul.mubr.bf16.gmra.mrb[0].mxu0 %v2504
        %v2766 = vpop.f32.mrb[0].mxu0
        %v2767 = vadd.f32 %v2474, %v2766
        %v2768 = vpop.f32.mrb[0].mxu0
        %v2769 = vpop.f32.mrb[0].mxu0
        %v2770 = vadd.f32 %v2474, %v2769
        %v2771 = vpop.f32.mrb[0].mxu0
        %2772 = vmatprep.mubr.bf16.mxu0 %v2537
        %2773 = vmatmul.mubr.bf16.gmra.mrb[0].mxu0 %v2505
        %v2774 = vpop.f32.mrb[0].mxu0
        %v2775 = vadd.f32 %v2474, %v2774
        %v2776 = vpop.f32.mrb[0].mxu0
        %v2777 = vpop.f32.mrb[0].mxu0
        %v2778 = vadd.f32 %v2474, %v2777
        %v2779 = vpop.f32.mrb[0].mxu0
        %2780 = vmatprep.mubr.bf16.mxu0 %v2538
        %2781 = vmatmul.mubr.bf16.gmra.mrb[0].mxu0 %v2506
        %v2782 = vpop.f32.mrb[0].mxu0
        %v2783 = vadd.f32 %v2474, %v2782
        %v2784 = vpop.f32.mrb[0].mxu0
        %v2785 = vpop.f32.mrb[0].mxu0
        %v2786 = vadd.f32 %v2474, %v2785
        %v2787 = vpop.f32.mrb[0].mxu0
        %2788 = vmatprep.mubr.bf16.mxu0 %v2539
        %2789 = vmatmul.mubr.bf16.gmra.mrb[0].mxu0 %v2507
        %v2790 = vpop.f32.mrb[0].mxu0
        %v2791 = vadd.f32 %v2474, %v2790
        %v2792 = vpop.f32.mrb[0].mxu0
        %v2793 = vpop.f32.mrb[0].mxu0
        %v2794 = vadd.f32 %v2474, %v2793
        %v2795 = vpop.f32.mrb[0].mxu0
        %2796 = vdwg.mxu0
        %v2797 = vmax.f32 %v2671, 0.0
        %v2798 = vmax.f32 %v2674, 0.0
        %v2799 = vmax.f32 %v2679, 0.0
        %v2800 = vmax.f32 %v2682, 0.0
        %v2801 = vmax.f32 %v2687, 0.0
        %v2802 = vmax.f32 %v2690, 0.0
        %v2803 = vmax.f32 %v2695, 0.0
        %v2804 = vmax.f32 %v2698, 0.0
        %v2805 = vmax.f32 %v2703, 0.0
        %v2806 = vmax.f32 %v2706, 0.0
        %v2807 = vmax.f32 %v2711, 0.0
        %v2808 = vmax.f32 %v2714, 0.0
        %v2809 = vmax.f32 %v2719, 0.0
        %v2810 = vmax.f32 %v2722, 0.0
        %v2811 = vmax.f32 %v2727, 0.0
        %v2812 = vmax.f32 %v2730, 0.0
        %v2813 = vmax.f32 %v2735, 0.0
        %v2814 = vmax.f32 %v2738, 0.0
        %v2815 = vmax.f32 %v2743, 0.0
        %v2816 = vmax.f32 %v2746, 0.0
        %v2817 = vmax.f32 %v2751, 0.0
        %v2818 = vmax.f32 %v2754, 0.0
        %v2819 = vmax.f32 %v2759, 0.0
        %v2820 = vmax.f32 %v2762, 0.0
        %v2821 = vmax.f32 %v2767, 0.0
        %v2822 = vmax.f32 %v2770, 0.0
        %v2823 = vmax.f32 %v2775, 0.0
        %v2824 = vmax.f32 %v2778, 0.0
        %v2825 = vmax.f32 %v2783, 0.0
        %v2826 = vmax.f32 %v2786, 0.0
        %v2827 = vmax.f32 %v2791, 0.0
        %v2828 = vmax.f32 %v2794, 0.0
        %v2829 = vadd.f32 %v2797, %v2798
        %v2830 = vadd.f32 %v2829, %v2799
        %v2831 = vadd.f32 %v2830, %v2800
        %v2832 = vadd.f32 %v2831, %v2801
        %v2833 = vadd.f32 %v2832, %v2802
        %v2834 = vadd.f32 %v2833, %v2803
        %v2835 = vadd.f32 %v2834, %v2804
        %v2836 = vadd.f32 %v2835, %v2805
        %v2837 = vadd.f32 %v2836, %v2806
        %v2838 = vadd.f32 %v2837, %v2807
        %v2839 = vadd.f32 %v2838, %v2808
        %v2840 = vadd.f32 %v2839, %v2809
        %v2841 = vadd.f32 %v2840, %v2810
        %v2842 = vadd.f32 %v2841, %v2811
        %v2843 = vadd.f32 %v2842, %v2812
        %v2844 = vadd.f32 %v2843, %v2813
        %v2845 = vadd.f32 %v2844, %v2814
        %v2846 = vadd.f32 %v2845, %v2815
        %v2847 = vadd.f32 %v2846, %v2816
        %v2848 = vadd.f32 %v2847, %v2817
        %v2849 = vadd.f32 %v2848, %v2818
        %v2850 = vadd.f32 %v2849, %v2819
        %v2851 = vadd.f32 %v2850, %v2820
        %v2852 = vadd.f32 %v2851, %v2821
        %v2853 = vadd.f32 %v2852, %v2822
        %v2854 = vadd.f32 %v2853, %v2823
        %v2855 = vadd.f32 %v2854, %v2824
        %v2856 = vadd.f32 %v2855, %v2825
        %v2857 = vadd.f32 %v2856, %v2826
        %v2858 = vadd.f32 %v2857, %v2827
        %v2859 = vadd.f32 %v2858, %v2828
        %v2860 = vrot.slane %v2859, 4
        %v2861 = vadd.f32 %v2859, %v2860
        %v2862 = vrot.slane %v2861, 2
        %v2863 = vadd.f32 %v2861, %v2862
        %v2864 = vrot.slane %v2863, 1
        %v2865 = vadd.f32 %v2863, %v2864
        %v2866 = vmul.f32 %v2865, 0.00390625
        %2867 = vst [vmem:[#allocation2 + $0x4] sm:$0x1] %v2866
        %s2868 = scalar_lea.vmem %s226, 2560
        %v2869 = vld [vmem:[%s2868] sm:$0xff]
        %v2870 = vld [vmem:[%s2868 + $0x8] sm:$0xff]
        %v2871 = vld [vmem:[%s2868 + $0x10] sm:$0xff]
        %v2872 = vld [vmem:[%s2868 + $0x18] sm:$0xff]
        %v2873 = vld [vmem:[%s2868 + $0x20] sm:$0xff]
        %v2874 = vld [vmem:[%s2868 + $0x28] sm:$0xff]
        %v2875 = vld [vmem:[%s2868 + $0x30] sm:$0xff]
        %v2876 = vld [vmem:[%s2868 + $0x38] sm:$0xff]
        %v2877 = vld [vmem:[%s2868 + $0x40] sm:$0xff]
        %v2878 = vld [vmem:[%s2868 + $0x48] sm:$0xff]
        %v2879 = vld [vmem:[%s2868 + $0x50] sm:$0xff]
        %v2880 = vld [vmem:[%s2868 + $0x58] sm:$0xff]
        %v2881 = vld [vmem:[%s2868 + $0x60] sm:$0xff]
        %v2882 = vld [vmem:[%s2868 + $0x68] sm:$0xff]
        %v2883 = vld [vmem:[%s2868 + $0x70] sm:$0xff]
        %v2884 = vld [vmem:[%s2868 + $0x78] sm:$0xff]
        %v2885 = vld [vmem:[%s2868 + $0x80] sm:$0xff]
        %v2886 = vld [vmem:[%s2868 + $0x88] sm:$0xff]
        %v2887 = vld [vmem:[%s2868 + $0x90] sm:$0xff]
        %v2888 = vld [vmem:[%s2868 + $0x98] sm:$0xff]
        %v2889 = vld [vmem:[%s2868 + $0xa0] sm:$0xff]
        %v2890 = vld [vmem:[%s2868 + $0xa8] sm:$0xff]
        %v2891 = vld [vmem:[%s2868 + $0xb0] sm:$0xff]
        %v2892 = vld [vmem:[%s2868 + $0xb8] sm:$0xff]
        %v2893 = vld [vmem:[%s2868 + $0xc0] sm:$0xff]
        %v2894 = vld [vmem:[%s2868 + $0xc8] sm:$0xff]
        %v2895 = vld [vmem:[%s2868 + $0xd0] sm:$0xff]
        %v2896 = vld [vmem:[%s2868 + $0xd8] sm:$0xff]
        %v2897 = vld [vmem:[%s2868 + $0xe0] sm:$0xff]
        %v2898 = vld [vmem:[%s2868 + $0xe8] sm:$0xff]
        %v2899 = vld [vmem:[%s2868 + $0xf0] sm:$0xff]
        %v2900 = vld [vmem:[%s2868 + $0xf8] sm:$0xff]
        %v2901 = vld [vmem:[%s2868 + $0x100] sm:$0xff]
        %v2902 = vld [vmem:[%s2868 + $0x108] sm:$0xff]
        %v2903 = vld [vmem:[%s2868 + $0x110] sm:$0xff]
        %v2904 = vld [vmem:[%s2868 + $0x118] sm:$0xff]
        %v2905 = vld [vmem:[%s2868 + $0x120] sm:$0xff]
        %v2906 = vld [vmem:[%s2868 + $0x128] sm:$0xff]
        %v2907 = vld [vmem:[%s2868 + $0x130] sm:$0xff]
        %v2908 = vld [vmem:[%s2868 + $0x138] sm:$0xff]
        %v2909 = vld [vmem:[%s2868 + $0x140] sm:$0xff]
        %v2910 = vld [vmem:[%s2868 + $0x148] sm:$0xff]
        %v2911 = vld [vmem:[%s2868 + $0x150] sm:$0xff]
        %v2912 = vld [vmem:[%s2868 + $0x158] sm:$0xff]
        %v2913 = vld [vmem:[%s2868 + $0x160] sm:$0xff]
        %v2914 = vld [vmem:[%s2868 + $0x168] sm:$0xff]
        %v2915 = vld [vmem:[%s2868 + $0x170] sm:$0xff]
        %v2916 = vld [vmem:[%s2868 + $0x178] sm:$0xff]
        %v2917 = vld [vmem:[%s2868 + $0x180] sm:$0xff]
        %v2918 = vld [vmem:[%s2868 + $0x188] sm:$0xff]
        %v2919 = vld [vmem:[%s2868 + $0x190] sm:$0xff]
        %v2920 = vld [vmem:[%s2868 + $0x198] sm:$0xff]
        %v2921 = vld [vmem:[%s2868 + $0x1a0] sm:$0xff]
        %v2922 = vld [vmem:[%s2868 + $0x1a8] sm:$0xff]
        %v2923 = vld [vmem:[%s2868 + $0x1b0] sm:$0xff]
        %v2924 = vld [vmem:[%s2868 + $0x1b8] sm:$0xff]
        %v2925 = vld [vmem:[%s2868 + $0x1c0] sm:$0xff]
        %v2926 = vld [vmem:[%s2868 + $0x1c8] sm:$0xff]
        %v2927 = vld [vmem:[%s2868 + $0x1d0] sm:$0xff]
        %v2928 = vld [vmem:[%s2868 + $0x1d8] sm:$0xff]
        %v2929 = vld [vmem:[%s2868 + $0x1e0] sm:$0xff]
        %v2930 = vld [vmem:[%s2868 + $0x1e8] sm:$0xff]
        %v2931 = vld [vmem:[%s2868 + $0x1f0] sm:$0xff]
        %v2932 = vld [vmem:[%s2868 + $0x1f8] sm:$0xff]
        %v2933 = vpack.c.bf16 %v2871, %v2869
        %v2934 = vpack.c.bf16 %v2872, %v2870
        %v2935 = vpack.c.bf16 %v2875, %v2873
        %v2936 = vpack.c.bf16 %v2876, %v2874
        %v2937 = vpack.c.bf16 %v2879, %v2877
        %v2938 = vpack.c.bf16 %v2880, %v2878
        %v2939 = vpack.c.bf16 %v2883, %v2881
        %v2940 = vpack.c.bf16 %v2884, %v2882
        %v2941 = vpack.c.bf16 %v2887, %v2885
        %v2942 = vpack.c.bf16 %v2888, %v2886
        %v2943 = vpack.c.bf16 %v2891, %v2889
        %v2944 = vpack.c.bf16 %v2892, %v2890
        %v2945 = vpack.c.bf16 %v2895, %v2893
        %v2946 = vpack.c.bf16 %v2896, %v2894
        %v2947 = vpack.c.bf16 %v2899, %v2897
        %v2948 = vpack.c.bf16 %v2900, %v2898
        %v2949 = vpack.c.bf16 %v2903, %v2901
        %v2950 = vpack.c.bf16 %v2904, %v2902
        %v2951 = vpack.c.bf16 %v2907, %v2905
        %v2952 = vpack.c.bf16 %v2908, %v2906
        %v2953 = vpack.c.bf16 %v2911, %v2909
        %v2954 = vpack.c.bf16 %v2912, %v2910
        %v2955 = vpack.c.bf16 %v2915, %v2913
        %v2956 = vpack.c.bf16 %v2916, %v2914
        %v2957 = vpack.c.bf16 %v2919, %v2917
        %v2958 = vpack.c.bf16 %v2920, %v2918
        %v2959 = vpack.c.bf16 %v2923, %v2921
        %v2960 = vpack.c.bf16 %v2924, %v2922
        %v2961 = vpack.c.bf16 %v2927, %v2925
        %v2962 = vpack.c.bf16 %v2928, %v2926
        %v2963 = vpack.c.bf16 %v2931, %v2929
        %v2964 = vpack.c.bf16 %v2932, %v2930
        %v2965 = vld [vmem:[%s1] sm:$0xf]
        %v2966 = vld [vmem:[%s1 + $0x4] sm:$0xf]
        %v2967 = vld [vmem:[%s1 + $0x8] sm:$0xf]
        %v2968 = vld [vmem:[%s1 + $0xc] sm:$0xf]
        %v2969 = vld [vmem:[%s1 + $0x10] sm:$0xf]
        %v2970 = vld [vmem:[%s1 + $0x14] sm:$0xf]
        %v2971 = vld [vmem:[%s1 + $0x18] sm:$0xf]
        %v2972 = vld [vmem:[%s1 + $0x1c] sm:$0xf]
        %v2973 = vld [vmem:[%s1 + $0x20] sm:$0xf]
        %v2974 = vld [vmem:[%s1 + $0x24] sm:$0xf]
        %v2975 = vld [vmem:[%s1 + $0x28] sm:$0xf]
        %v2976 = vld [vmem:[%s1 + $0x2c] sm:$0xf]
        %v2977 = vld [vmem:[%s1 + $0x30] sm:$0xf]
        %v2978 = vld [vmem:[%s1 + $0x34] sm:$0xf]
        %v2979 = vld [vmem:[%s1 + $0x38] sm:$0xf]
        %v2980 = vld [vmem:[%s1 + $0x3c] sm:$0xf]
        %v2981 = vld [vmem:[%s1 + $0x40] sm:$0xf]
        %v2982 = vld [vmem:[%s1 + $0x44] sm:$0xf]
        %v2983 = vld [vmem:[%s1 + $0x48] sm:$0xf]
        %v2984 = vld [vmem:[%s1 + $0x4c] sm:$0xf]
        %v2985 = vld [vmem:[%s1 + $0x50] sm:$0xf]
        %v2986 = vld [vmem:[%s1 + $0x54] sm:$0xf]
        %v2987 = vld [vmem:[%s1 + $0x58] sm:$0xf]
        %v2988 = vld [vmem:[%s1 + $0x5c] sm:$0xf]
        %v2989 = vld [vmem:[%s1 + $0x60] sm:$0xf]
        %v2990 = vld [vmem:[%s1 + $0x64] sm:$0xf]
        %v2991 = vld [vmem:[%s1 + $0x68] sm:$0xf]
        %v2992 = vld [vmem:[%s1 + $0x6c] sm:$0xf]
        %v2993 = vld [vmem:[%s1 + $0x70] sm:$0xf]
        %v2994 = vld [vmem:[%s1 + $0x74] sm:$0xf]
        %v2995 = vld [vmem:[%s1 + $0x78] sm:$0xf]
        %v2996 = vld [vmem:[%s1 + $0x7c] sm:$0xf]
        %v2997 = vld [vmem:[%s2] sm:$0x1]
        %v2999 = vlaneseq
        %v3000 = vshrl.u32 %v2999, 7
        %v3001 = vsub.s32 0, %v3000
        %v3002 = vrot.slane %v2997, %v3001
        %3004 = vxpose.xlu0.c.b16.start [1/8] %v2933, 128
        %3005 = vxpose.xlu0.c.b16.cont [2/8] %v2935, 128
        %3006 = vxpose.xlu0.c.b16.cont [3/8] %v2937, 128
        %3007 = vxpose.xlu0.c.b16.cont [4/8] %v2939, 128
        %3008 = vxpose.xlu0.c.b16.cont [5/8] %v2941, 128
        %3009 = vxpose.xlu0.c.b16.cont [6/8] %v2943, 128
        %3010 = vxpose.xlu0.c.b16.cont [7/8] %v2945, 128
        %3011 = vxpose.xlu0.c.b16.end [8/8] %v2947, 128
        %v3012 = vpop.trf.xlu0
        %v3013 = vpop.trf.xlu0
        %v3014 = vpop.trf.xlu0
        %v3015 = vpop.trf.xlu0
        %v3016 = vpop.trf.xlu0
        %v3017 = vpop.trf.xlu0
        %v3018 = vpop.trf.xlu0
        %v3019 = vpop.trf.xlu0
        %3020 = vxpose.xlu0.c.b16.start [1/8] %v2934, 128
        %3021 = vxpose.xlu0.c.b16.cont [2/8] %v2936, 128
        %3022 = vxpose.xlu0.c.b16.cont [3/8] %v2938, 128
        %3023 = vxpose.xlu0.c.b16.cont [4/8] %v2940, 128
        %3024 = vxpose.xlu0.c.b16.cont [5/8] %v2942, 128
        %3025 = vxpose.xlu0.c.b16.cont [6/8] %v2944, 128
        %3026 = vxpose.xlu0.c.b16.cont [7/8] %v2946, 128
        %3027 = vxpose.xlu0.c.b16.end [8/8] %v2948, 128
        %v3028 = vpop.trf.xlu0
        %v3029 = vpop.trf.xlu0
        %v3030 = vpop.trf.xlu0
        %v3031 = vpop.trf.xlu0
        %v3032 = vpop.trf.xlu0
        %v3033 = vpop.trf.xlu0
        %v3034 = vpop.trf.xlu0
        %v3035 = vpop.trf.xlu0
        %3036 = vxpose.xlu0.c.b16.start [1/8] %v2949, 128
        %3037 = vxpose.xlu0.c.b16.cont [2/8] %v2951, 128
        %3038 = vxpose.xlu0.c.b16.cont [3/8] %v2953, 128
        %3039 = vxpose.xlu0.c.b16.cont [4/8] %v2955, 128
        %3040 = vxpose.xlu0.c.b16.cont [5/8] %v2957, 128
        %3041 = vxpose.xlu0.c.b16.cont [6/8] %v2959, 128
        %3042 = vxpose.xlu0.c.b16.cont [7/8] %v2961, 128
        %3043 = vxpose.xlu0.c.b16.end [8/8] %v2963, 128
        %v3044 = vpop.trf.xlu0
        %v3045 = vpop.trf.xlu0
        %v3046 = vpop.trf.xlu0
        %v3047 = vpop.trf.xlu0
        %v3048 = vpop.trf.xlu0
        %v3049 = vpop.trf.xlu0
        %v3050 = vpop.trf.xlu0
        %v3051 = vpop.trf.xlu0
        %3052 = vxpose.xlu0.c.b16.start [1/8] %v2950, 128
        %3053 = vxpose.xlu0.c.b16.cont [2/8] %v2952, 128
        %3054 = vxpose.xlu0.c.b16.cont [3/8] %v2954, 128
        %3055 = vxpose.xlu0.c.b16.cont [4/8] %v2956, 128
        %3056 = vxpose.xlu0.c.b16.cont [5/8] %v2958, 128
        %3057 = vxpose.xlu0.c.b16.cont [6/8] %v2960, 128
        %3058 = vxpose.xlu0.c.b16.cont [7/8] %v2962, 128
        %3059 = vxpose.xlu0.c.b16.end [8/8] %v2964, 128
        %v3060 = vpop.trf.xlu0
        %v3061 = vpop.trf.xlu0
        %v3062 = vpop.trf.xlu0
        %v3063 = vpop.trf.xlu0
        %v3064 = vpop.trf.xlu0
        %v3065 = vpop.trf.xlu0
        %v3066 = vpop.trf.xlu0
        %v3067 = vpop.trf.xlu0
        %v3100 = vunpack.c.l.b16 %v2965
        %v3101 = vunpack.c.l.b16 %v2966
        %v3102 = vunpack.c.l.b16 %v2967
        %v3103 = vunpack.c.l.b16 %v2968
        %v3104 = vunpack.c.l.b16 %v2969
        %v3105 = vunpack.c.l.b16 %v2970
        %v3106 = vunpack.c.l.b16 %v2971
        %v3107 = vunpack.c.l.b16 %v2972
        %v3108 = vunpack.c.l.b16 %v2973
        %v3109 = vunpack.c.l.b16 %v2974
        %v3110 = vunpack.c.l.b16 %v2975
        %v3111 = vunpack.c.l.b16 %v2976
        %v3112 = vunpack.c.l.b16 %v2977
        %v3113 = vunpack.c.l.b16 %v2978
        %v3114 = vunpack.c.l.b16 %v2979
        %v3115 = vunpack.c.l.b16 %v2980
        %v3116 = vunpack.c.l.b16 %v2981
        %v3117 = vunpack.c.l.b16 %v2982
        %v3118 = vunpack.c.l.b16 %v2983
        %v3119 = vunpack.c.l.b16 %v2984
        %v3120 = vunpack.c.l.b16 %v2985
        %v3121 = vunpack.c.l.b16 %v2986
        %v3122 = vunpack.c.l.b16 %v2987
        %v3123 = vunpack.c.l.b16 %v2988
        %v3124 = vunpack.c.l.b16 %v2989
        %v3125 = vunpack.c.l.b16 %v2990
        %v3126 = vunpack.c.l.b16 %v2991
        %v3127 = vunpack.c.l.b16 %v2992
        %v3128 = vunpack.c.l.b16 %v2993
        %v3129 = vunpack.c.l.b16 %v2994
        %v3130 = vunpack.c.l.b16 %v2995
        %v3131 = vunpack.c.l.b16 %v2996
        %v3132 = vpack.c.b16 %v3101, %v3100
        %v3133 = vpack.c.b16 %v3103, %v3102
        %v3134 = vpack.c.b16 %v3105, %v3104
        %v3135 = vpack.c.b16 %v3107, %v3106
        %v3136 = vpack.c.b16 %v3109, %v3108
        %v3137 = vpack.c.b16 %v3111, %v3110
        %v3138 = vpack.c.b16 %v3113, %v3112
        %v3139 = vpack.c.b16 %v3115, %v3114
        %v3140 = vpack.c.b16 %v3117, %v3116
        %v3141 = vpack.c.b16 %v3119, %v3118
        %v3142 = vpack.c.b16 %v3121, %v3120
        %v3143 = vpack.c.b16 %v3123, %v3122
        %v3144 = vpack.c.b16 %v3125, %v3124
        %v3145 = vpack.c.b16 %v3127, %v3126
        %v3146 = vpack.c.b16 %v3129, %v3128
        %v3147 = vpack.c.b16 %v3131, %v3130
        %3164 = vmatprep.subr.bf16.mxu0 0
        %3165 = vmatpush1.bf16.msra.mxu0 %v3132
        %3166 = vmatprep.subr.bf16.mxu0 0
        %3167 = vmatpush1.bf16.msra.mxu0 %v3133
        %3168 = vmatprep.subr.bf16.mxu0 0
        %3169 = vmatpush1.bf16.msra.mxu0 %v3134
        %3170 = vmatprep.subr.bf16.mxu0 0
        %3171 = vmatpush1.bf16.msra.mxu0 %v3135
        %3172 = vmatprep.subr.bf16.mxu0 0
        %3173 = vmatpush1.bf16.msra.mxu0 %v3136
        %3174 = vmatprep.subr.bf16.mxu0 0
        %3175 = vmatpush1.bf16.msra.mxu0 %v3137
        %3176 = vmatprep.subr.bf16.mxu0 0
        %3177 = vmatpush1.bf16.msra.mxu0 %v3138
        %3178 = vmatprep.subr.bf16.mxu0 0
        %3179 = vmatpush1.bf16.msra.mxu0 %v3139
        %3180 = vmatprep.subr.bf16.mxu0 0
        %3181 = vmatpush1.bf16.msra.mxu0 %v3140
        %3182 = vmatprep.subr.bf16.mxu0 0
        %3183 = vmatpush1.bf16.msra.mxu0 %v3141
        %3184 = vmatprep.subr.bf16.mxu0 0
        %3185 = vmatpush1.bf16.msra.mxu0 %v3142
        %3186 = vmatprep.subr.bf16.mxu0 0
        %3187 = vmatpush1.bf16.msra.mxu0 %v3143
        %3188 = vmatprep.subr.bf16.mxu0 0
        %3189 = vmatpush1.bf16.msra.mxu0 %v3144
        %3190 = vmatprep.subr.bf16.mxu0 0
        %3191 = vmatpush1.bf16.msra.mxu0 %v3145
        %3192 = vmatprep.subr.bf16.mxu0 0
        %3193 = vmatpush1.bf16.msra.mxu0 %v3146
        %3194 = vmatprep.subr.bf16.mxu0 0
        %3195 = vmatpush1.bf16.msra.mxu0 %v3147
        %3196 = vmatprep.mubr.bf16.mxu0 %v3044
        %3197 = vmatmul.mubr.bf16.gmra.mrb[0].mxu0 %v3012
        %v3198 = vpop.f32.mrb[0].mxu0
        %v3199 = vadd.f32 %v3002, %v3198
        %v3200 = vpop.f32.mrb[0].mxu0
        %v3201 = vpop.f32.mrb[0].mxu0
        %v3202 = vadd.f32 %v3002, %v3201
        %v3203 = vpop.f32.mrb[0].mxu0
        %3204 = vmatprep.mubr.bf16.mxu0 %v3045
        %3205 = vmatmul.mubr.bf16.gmra.mrb[0].mxu0 %v3013
        %v3206 = vpop.f32.mrb[0].mxu0
        %v3207 = vadd.f32 %v3002, %v3206
        %v3208 = vpop.f32.mrb[0].mxu0
        %v3209 = vpop.f32.mrb[0].mxu0
        %v3210 = vadd.f32 %v3002, %v3209
        %v3211 = vpop.f32.mrb[0].mxu0
        %3212 = vmatprep.mubr.bf16.mxu0 %v3046
        %3213 = vmatmul.mubr.bf16.gmra.mrb[0].mxu0 %v3014
        %v3214 = vpop.f32.mrb[0].mxu0
        %v3215 = vadd.f32 %v3002, %v3214
        %v3216 = vpop.f32.mrb[0].mxu0
        %v3217 = vpop.f32.mrb[0].mxu0
        %v3218 = vadd.f32 %v3002, %v3217
        %v3219 = vpop.f32.mrb[0].mxu0
        %3220 = vmatprep.mubr.bf16.mxu0 %v3047
        %3221 = vmatmul.mubr.bf16.gmra.mrb[0].mxu0 %v3015
        %v3222 = vpop.f32.mrb[0].mxu0
        %v3223 = vadd.f32 %v3002, %v3222
        %v3224 = vpop.f32.mrb[0].mxu0
        %v3225 = vpop.f32.mrb[0].mxu0
        %v3226 = vadd.f32 %v3002, %v3225
        %v3227 = vpop.f32.mrb[0].mxu0
        %3228 = vmatprep.mubr.bf16.mxu0 %v3048
        %3229 = vmatmul.mubr.bf16.gmra.mrb[0].mxu0 %v3016
        %v3230 = vpop.f32.mrb[0].mxu0
        %v3231 = vadd.f32 %v3002, %v3230
        %v3232 = vpop.f32.mrb[0].mxu0
        %v3233 = vpop.f32.mrb[0].mxu0
        %v3234 = vadd.f32 %v3002, %v3233
        %v3235 = vpop.f32.mrb[0].mxu0
        %3236 = vmatprep.mubr.bf16.mxu0 %v3049
        %3237 = vmatmul.mubr.bf16.gmra.mrb[0].mxu0 %v3017
        %v3238 = vpop.f32.mrb[0].mxu0
        %v3239 = vadd.f32 %v3002, %v3238
        %v3240 = vpop.f32.mrb[0].mxu0
        %v3241 = vpop.f32.mrb[0].mxu0
        %v3242 = vadd.f32 %v3002, %v3241
        %v3243 = vpop.f32.mrb[0].mxu0
        %3244 = vmatprep.mubr.bf16.mxu0 %v3050
        %3245 = vmatmul.mubr.bf16.gmra.mrb[0].mxu0 %v3018
        %v3246 = vpop.f32.mrb[0].mxu0
        %v3247 = vadd.f32 %v3002, %v3246
        %v3248 = vpop.f32.mrb[0].mxu0
        %v3249 = vpop.f32.mrb[0].mxu0
        %v3250 = vadd.f32 %v3002, %v3249
        %v3251 = vpop.f32.mrb[0].mxu0
        %3252 = vmatprep.mubr.bf16.mxu0 %v3051
        %3253 = vmatmul.mubr.bf16.gmra.mrb[0].mxu0 %v3019
        %v3254 = vpop.f32.mrb[0].mxu0
        %v3255 = vadd.f32 %v3002, %v3254
        %v3256 = vpop.f32.mrb[0].mxu0
        %v3257 = vpop.f32.mrb[0].mxu0
        %v3258 = vadd.f32 %v3002, %v3257
        %v3259 = vpop.f32.mrb[0].mxu0
        %3260 = vmatprep.mubr.bf16.mxu0 %v3060
        %3261 = vmatmul.mubr.bf16.gmra.mrb[0].mxu0 %v3028
        %v3262 = vpop.f32.mrb[0].mxu0
        %v3263 = vadd.f32 %v3002, %v3262
        %v3264 = vpop.f32.mrb[0].mxu0
        %v3265 = vpop.f32.mrb[0].mxu0
        %v3266 = vadd.f32 %v3002, %v3265
        %v3267 = vpop.f32.mrb[0].mxu0
        %3268 = vmatprep.mubr.bf16.mxu0 %v3061
        %3269 = vmatmul.mubr.bf16.gmra.mrb[0].mxu0 %v3029
        %v3270 = vpop.f32.mrb[0].mxu0
        %v3271 = vadd.f32 %v3002, %v3270
        %v3272 = vpop.f32.mrb[0].mxu0
        %v3273 = vpop.f32.mrb[0].mxu0
        %v3274 = vadd.f32 %v3002, %v3273
        %v3275 = vpop.f32.mrb[0].mxu0
        %3276 = vmatprep.mubr.bf16.mxu0 %v3062
        %3277 = vmatmul.mubr.bf16.gmra.mrb[0].mxu0 %v3030
        %v3278 = vpop.f32.mrb[0].mxu0
        %v3279 = vadd.f32 %v3002, %v3278
        %v3280 = vpop.f32.mrb[0].mxu0
        %v3281 = vpop.f32.mrb[0].mxu0
        %v3282 = vadd.f32 %v3002, %v3281
        %v3283 = vpop.f32.mrb[0].mxu0
        %3284 = vmatprep.mubr.bf16.mxu0 %v3063
        %3285 = vmatmul.mubr.bf16.gmra.mrb[0].mxu0 %v3031
        %v3286 = vpop.f32.mrb[0].mxu0
        %v3287 = vadd.f32 %v3002, %v3286
        %v3288 = vpop.f32.mrb[0].mxu0
        %v3289 = vpop.f32.mrb[0].mxu0
        %v3290 = vadd.f32 %v3002, %v3289
        %v3291 = vpop.f32.mrb[0].mxu0
        %3292 = vmatprep.mubr.bf16.mxu0 %v3064
        %3293 = vmatmul.mubr.bf16.gmra.mrb[0].mxu0 %v3032
        %v3294 = vpop.f32.mrb[0].mxu0
        %v3295 = vadd.f32 %v3002, %v3294
        %v3296 = vpop.f32.mrb[0].mxu0
        %v3297 = vpop.f32.mrb[0].mxu0
        %v3298 = vadd.f32 %v3002, %v3297
        %v3299 = vpop.f32.mrb[0].mxu0
        %3300 = vmatprep.mubr.bf16.mxu0 %v3065
        %3301 = vmatmul.mubr.bf16.gmra.mrb[0].mxu0 %v3033
        %v3302 = vpop.f32.mrb[0].mxu0
        %v3303 = vadd.f32 %v3002, %v3302
        %v3304 = vpop.f32.mrb[0].mxu0
        %v3305 = vpop.f32.mrb[0].mxu0
        %v3306 = vadd.f32 %v3002, %v3305
        %v3307 = vpop.f32.mrb[0].mxu0
        %3308 = vmatprep.mubr.bf16.mxu0 %v3066
        %3309 = vmatmul.mubr.bf16.gmra.mrb[0].mxu0 %v3034
        %v3310 = vpop.f32.mrb[0].mxu0
        %v3311 = vadd.f32 %v3002, %v3310
        %v3312 = vpop.f32.mrb[0].mxu0
        %v3313 = vpop.f32.mrb[0].mxu0
        %v3314 = vadd.f32 %v3002, %v3313
        %v3315 = vpop.f32.mrb[0].mxu0
        %3316 = vmatprep.mubr.bf16.mxu0 %v3067
        %3317 = vmatmul.mubr.bf16.gmra.mrb[0].mxu0 %v3035
        %v3318 = vpop.f32.mrb[0].mxu0
        %v3319 = vadd.f32 %v3002, %v3318
        %v3320 = vpop.f32.mrb[0].mxu0
        %v3321 = vpop.f32.mrb[0].mxu0
        %v3322 = vadd.f32 %v3002, %v3321
        %v3323 = vpop.f32.mrb[0].mxu0
        %3324 = vdwg.mxu0
        %v3325 = vmax.f32 %v3199, 0.0
        %v3326 = vmax.f32 %v3202, 0.0
        %v3327 = vmax.f32 %v3207, 0.0
        %v3328 = vmax.f32 %v3210, 0.0
        %v3329 = vmax.f32 %v3215, 0.0
        %v3330 = vmax.f32 %v3218, 0.0
        %v3331 = vmax.f32 %v3223, 0.0
        %v3332 = vmax.f32 %v3226, 0.0
        %v3333 = vmax.f32 %v3231, 0.0
        %v3334 = vmax.f32 %v3234, 0.0
        %v3335 = vmax.f32 %v3239, 0.0
        %v3336 = vmax.f32 %v3242, 0.0
        %v3337 = vmax.f32 %v3247, 0.0
        %v3338 = vmax.f32 %v3250, 0.0
        %v3339 = vmax.f32 %v3255, 0.0
        %v3340 = vmax.f32 %v3258, 0.0
        %v3341 = vmax.f32 %v3263, 0.0
        %v3342 = vmax.f32 %v3266, 0.0
        %v3343 = vmax.f32 %v3271, 0.0
        %v3344 = vmax.f32 %v3274, 0.0
        %v3345 = vmax.f32 %v3279, 0.0
        %v3346 = vmax.f32 %v3282, 0.0
        %v3347 = vmax.f32 %v3287, 0.0
        %v3348 = vmax.f32 %v3290, 0.0
        %v3349 = vmax.f32 %v3295, 0.0
        %v3350 = vmax.f32 %v3298, 0.0
        %v3351 = vmax.f32 %v3303, 0.0
        %v3352 = vmax.f32 %v3306, 0.0
        %v3353 = vmax.f32 %v3311, 0.0
        %v3354 = vmax.f32 %v3314, 0.0
        %v3355 = vmax.f32 %v3319, 0.0
        %v3356 = vmax.f32 %v3322, 0.0
        %v3357 = vadd.f32 %v3325, %v3326
        %v3358 = vadd.f32 %v3357, %v3327
        %v3359 = vadd.f32 %v3358, %v3328
        %v3360 = vadd.f32 %v3359, %v3329
        %v3361 = vadd.f32 %v3360, %v3330
        %v3362 = vadd.f32 %v3361, %v3331
        %v3363 = vadd.f32 %v3362, %v3332
        %v3364 = vadd.f32 %v3363, %v3333
        %v3365 = vadd.f32 %v3364, %v3334
        %v3366 = vadd.f32 %v3365, %v3335
        %v3367 = vadd.f32 %v3366, %v3336
        %v3368 = vadd.f32 %v3367, %v3337
        %v3369 = vadd.f32 %v3368, %v3338
        %v3370 = vadd.f32 %v3369, %v3339
        %v3371 = vadd.f32 %v3370, %v3340
        %v3372 = vadd.f32 %v3371, %v3341
        %v3373 = vadd.f32 %v3372, %v3342
        %v3374 = vadd.f32 %v3373, %v3343
        %v3375 = vadd.f32 %v3374, %v3344
        %v3376 = vadd.f32 %v3375, %v3345
        %v3377 = vadd.f32 %v3376, %v3346
        %v3378 = vadd.f32 %v3377, %v3347
        %v3379 = vadd.f32 %v3378, %v3348
        %v3380 = vadd.f32 %v3379, %v3349
        %v3381 = vadd.f32 %v3380, %v3350
        %v3382 = vadd.f32 %v3381, %v3351
        %v3383 = vadd.f32 %v3382, %v3352
        %v3384 = vadd.f32 %v3383, %v3353
        %v3385 = vadd.f32 %v3384, %v3354
        %v3386 = vadd.f32 %v3385, %v3355
        %v3387 = vadd.f32 %v3386, %v3356
        %v3388 = vrot.slane %v3387, 4
        %v3389 = vadd.f32 %v3387, %v3388
        %v3390 = vrot.slane %v3389, 2
        %v3391 = vadd.f32 %v3389, %v3390
        %v3392 = vrot.slane %v3391, 1
        %v3393 = vadd.f32 %v3391, %v3392
        %v3394 = vmul.f32 %v3393, 0.00390625
        %3395 = vst [vmem:[#allocation2 + $0x5] sm:$0x1] %v3394
        %s3396 = scalar_lea.vmem %s226, 3072
        %v3397 = vld [vmem:[%s3396] sm:$0xff]
        %v3398 = vld [vmem:[%s3396 + $0x8] sm:$0xff]
        %v3399 = vld [vmem:[%s3396 + $0x10] sm:$0xff]
        %v3400 = vld [vmem:[%s3396 + $0x18] sm:$0xff]
        %v3401 = vld [vmem:[%s3396 + $0x20] sm:$0xff]
        %v3402 = vld [vmem:[%s3396 + $0x28] sm:$0xff]
        %v3403 = vld [vmem:[%s3396 + $0x30] sm:$0xff]
        %v3404 = vld [vmem:[%s3396 + $0x38] sm:$0xff]
        %v3405 = vld [vmem:[%s3396 + $0x40] sm:$0xff]
        %v3406 = vld [vmem:[%s3396 + $0x48] sm:$0xff]
        %v3407 = vld [vmem:[%s3396 + $0x50] sm:$0xff]
        %v3408 = vld [vmem:[%s3396 + $0x58] sm:$0xff]
        %v3409 = vld [vmem:[%s3396 + $0x60] sm:$0xff]
        %v3410 = vld [vmem:[%s3396 + $0x68] sm:$0xff]
        %v3411 = vld [vmem:[%s3396 + $0x70] sm:$0xff]
        %v3412 = vld [vmem:[%s3396 + $0x78] sm:$0xff]
        %v3413 = vld [vmem:[%s3396 + $0x80] sm:$0xff]
        %v3414 = vld [vmem:[%s3396 + $0x88] sm:$0xff]
        %v3415 = vld [vmem:[%s3396 + $0x90] sm:$0xff]
        %v3416 = vld [vmem:[%s3396 + $0x98] sm:$0xff]
        %v3417 = vld [vmem:[%s3396 + $0xa0] sm:$0xff]
        %v3418 = vld [vmem:[%s3396 + $0xa8] sm:$0xff]
        %v3419 = vld [vmem:[%s3396 + $0xb0] sm:$0xff]
        %v3420 = vld [vmem:[%s3396 + $0xb8] sm:$0xff]
        %v3421 = vld [vmem:[%s3396 + $0xc0] sm:$0xff]
        %v3422 = vld [vmem:[%s3396 + $0xc8] sm:$0xff]
        %v3423 = vld [vmem:[%s3396 + $0xd0] sm:$0xff]
        %v3424 = vld [vmem:[%s3396 + $0xd8] sm:$0xff]
        %v3425 = vld [vmem:[%s3396 + $0xe0] sm:$0xff]
        %v3426 = vld [vmem:[%s3396 + $0xe8] sm:$0xff]
        %v3427 = vld [vmem:[%s3396 + $0xf0] sm:$0xff]
        %v3428 = vld [vmem:[%s3396 + $0xf8] sm:$0xff]
        %v3429 = vld [vmem:[%s3396 + $0x100] sm:$0xff]
        %v3430 = vld [vmem:[%s3396 + $0x108] sm:$0xff]
        %v3431 = vld [vmem:[%s3396 + $0x110] sm:$0xff]
        %v3432 = vld [vmem:[%s3396 + $0x118] sm:$0xff]
        %v3433 = vld [vmem:[%s3396 + $0x120] sm:$0xff]
        %v3434 = vld [vmem:[%s3396 + $0x128] sm:$0xff]
        %v3435 = vld [vmem:[%s3396 + $0x130] sm:$0xff]
        %v3436 = vld [vmem:[%s3396 + $0x138] sm:$0xff]
        %v3437 = vld [vmem:[%s3396 + $0x140] sm:$0xff]
        %v3438 = vld [vmem:[%s3396 + $0x148] sm:$0xff]
        %v3439 = vld [vmem:[%s3396 + $0x150] sm:$0xff]
        %v3440 = vld [vmem:[%s3396 + $0x158] sm:$0xff]
        %v3441 = vld [vmem:[%s3396 + $0x160] sm:$0xff]
        %v3442 = vld [vmem:[%s3396 + $0x168] sm:$0xff]
        %v3443 = vld [vmem:[%s3396 + $0x170] sm:$0xff]
        %v3444 = vld [vmem:[%s3396 + $0x178] sm:$0xff]
        %v3445 = vld [vmem:[%s3396 + $0x180] sm:$0xff]
        %v3446 = vld [vmem:[%s3396 + $0x188] sm:$0xff]
        %v3447 = vld [vmem:[%s3396 + $0x190] sm:$0xff]
        %v3448 = vld [vmem:[%s3396 + $0x198] sm:$0xff]
        %v3449 = vld [vmem:[%s3396 + $0x1a0] sm:$0xff]
        %v3450 = vld [vmem:[%s3396 + $0x1a8] sm:$0xff]
        %v3451 = vld [vmem:[%s3396 + $0x1b0] sm:$0xff]
        %v3452 = vld [vmem:[%s3396 + $0x1b8] sm:$0xff]
        %v3453 = vld [vmem:[%s3396 + $0x1c0] sm:$0xff]
        %v3454 = vld [vmem:[%s3396 + $0x1c8] sm:$0xff]
        %v3455 = vld [vmem:[%s3396 + $0x1d0] sm:$0xff]
        %v3456 = vld [vmem:[%s3396 + $0x1d8] sm:$0xff]
        %v3457 = vld [vmem:[%s3396 + $0x1e0] sm:$0xff]
        %v3458 = vld [vmem:[%s3396 + $0x1e8] sm:$0xff]
        %v3459 = vld [vmem:[%s3396 + $0x1f0] sm:$0xff]
        %v3460 = vld [vmem:[%s3396 + $0x1f8] sm:$0xff]
        %v3461 = vpack.c.bf16 %v3399, %v3397
        %v3462 = vpack.c.bf16 %v3400, %v3398
        %v3463 = vpack.c.bf16 %v3403, %v3401
        %v3464 = vpack.c.bf16 %v3404, %v3402
        %v3465 = vpack.c.bf16 %v3407, %v3405
        %v3466 = vpack.c.bf16 %v3408, %v3406
        %v3467 = vpack.c.bf16 %v3411, %v3409
        %v3468 = vpack.c.bf16 %v3412, %v3410
        %v3469 = vpack.c.bf16 %v3415, %v3413
        %v3470 = vpack.c.bf16 %v3416, %v3414
        %v3471 = vpack.c.bf16 %v3419, %v3417
        %v3472 = vpack.c.bf16 %v3420, %v3418
        %v3473 = vpack.c.bf16 %v3423, %v3421
        %v3474 = vpack.c.bf16 %v3424, %v3422
        %v3475 = vpack.c.bf16 %v3427, %v3425
        %v3476 = vpack.c.bf16 %v3428, %v3426
        %v3477 = vpack.c.bf16 %v3431, %v3429
        %v3478 = vpack.c.bf16 %v3432, %v3430
        %v3479 = vpack.c.bf16 %v3435, %v3433
        %v3480 = vpack.c.bf16 %v3436, %v3434
        %v3481 = vpack.c.bf16 %v3439, %v3437
        %v3482 = vpack.c.bf16 %v3440, %v3438
        %v3483 = vpack.c.bf16 %v3443, %v3441
        %v3484 = vpack.c.bf16 %v3444, %v3442
        %v3485 = vpack.c.bf16 %v3447, %v3445
        %v3486 = vpack.c.bf16 %v3448, %v3446
        %v3487 = vpack.c.bf16 %v3451, %v3449
        %v3488 = vpack.c.bf16 %v3452, %v3450
        %v3489 = vpack.c.bf16 %v3455, %v3453
        %v3490 = vpack.c.bf16 %v3456, %v3454
        %v3491 = vpack.c.bf16 %v3459, %v3457
        %v3492 = vpack.c.bf16 %v3460, %v3458
        %v3493 = vld [vmem:[%s1] sm:$0xf]
        %v3494 = vld [vmem:[%s1 + $0x4] sm:$0xf]
        %v3495 = vld [vmem:[%s1 + $0x8] sm:$0xf]
        %v3496 = vld [vmem:[%s1 + $0xc] sm:$0xf]
        %v3497 = vld [vmem:[%s1 + $0x10] sm:$0xf]
        %v3498 = vld [vmem:[%s1 + $0x14] sm:$0xf]
        %v3499 = vld [vmem:[%s1 + $0x18] sm:$0xf]
        %v3500 = vld [vmem:[%s1 + $0x1c] sm:$0xf]
        %v3501 = vld [vmem:[%s1 + $0x20] sm:$0xf]
        %v3502 = vld [vmem:[%s1 + $0x24] sm:$0xf]
        %v3503 = vld [vmem:[%s1 + $0x28] sm:$0xf]
        %v3504 = vld [vmem:[%s1 + $0x2c] sm:$0xf]
        %v3505 = vld [vmem:[%s1 + $0x30] sm:$0xf]
        %v3506 = vld [vmem:[%s1 + $0x34] sm:$0xf]
        %v3507 = vld [vmem:[%s1 + $0x38] sm:$0xf]
        %v3508 = vld [vmem:[%s1 + $0x3c] sm:$0xf]
        %v3509 = vld [vmem:[%s1 + $0x40] sm:$0xf]
        %v3510 = vld [vmem:[%s1 + $0x44] sm:$0xf]
        %v3511 = vld [vmem:[%s1 + $0x48] sm:$0xf]
        %v3512 = vld [vmem:[%s1 + $0x4c] sm:$0xf]
        %v3513 = vld [vmem:[%s1 + $0x50] sm:$0xf]
        %v3514 = vld [vmem:[%s1 + $0x54] sm:$0xf]
        %v3515 = vld [vmem:[%s1 + $0x58] sm:$0xf]
        %v3516 = vld [vmem:[%s1 + $0x5c] sm:$0xf]
        %v3517 = vld [vmem:[%s1 + $0x60] sm:$0xf]
        %v3518 = vld [vmem:[%s1 + $0x64] sm:$0xf]
        %v3519 = vld [vmem:[%s1 + $0x68] sm:$0xf]
        %v3520 = vld [vmem:[%s1 + $0x6c] sm:$0xf]
        %v3521 = vld [vmem:[%s1 + $0x70] sm:$0xf]
        %v3522 = vld [vmem:[%s1 + $0x74] sm:$0xf]
        %v3523 = vld [vmem:[%s1 + $0x78] sm:$0xf]
        %v3524 = vld [vmem:[%s1 + $0x7c] sm:$0xf]
        %v3525 = vld [vmem:[%s2] sm:$0x1]
        %v3527 = vlaneseq
        %v3528 = vshrl.u32 %v3527, 7
        %v3529 = vsub.s32 0, %v3528
        %v3530 = vrot.slane %v3525, %v3529
        %3532 = vxpose.xlu0.c.b16.start [1/8] %v3461, 128
        %3533 = vxpose.xlu0.c.b16.cont [2/8] %v3463, 128
        %3534 = vxpose.xlu0.c.b16.cont [3/8] %v3465, 128
        %3535 = vxpose.xlu0.c.b16.cont [4/8] %v3467, 128
        %3536 = vxpose.xlu0.c.b16.cont [5/8] %v3469, 128
        %3537 = vxpose.xlu0.c.b16.cont [6/8] %v3471, 128
        %3538 = vxpose.xlu0.c.b16.cont [7/8] %v3473, 128
        %3539 = vxpose.xlu0.c.b16.end [8/8] %v3475, 128
        %v3540 = vpop.trf.xlu0
        %v3541 = vpop.trf.xlu0
        %v3542 = vpop.trf.xlu0
        %v3543 = vpop.trf.xlu0
        %v3544 = vpop.trf.xlu0
        %v3545 = vpop.trf.xlu0
        %v3546 = vpop.trf.xlu0
        %v3547 = vpop.trf.xlu0
        %3548 = vxpose.xlu0.c.b16.start [1/8] %v3462, 128
        %3549 = vxpose.xlu0.c.b16.cont [2/8] %v3464, 128
        %3550 = vxpose.xlu0.c.b16.cont [3/8] %v3466, 128
        %3551 = vxpose.xlu0.c.b16.cont [4/8] %v3468, 128
        %3552 = vxpose.xlu0.c.b16.cont [5/8] %v3470, 128
        %3553 = vxpose.xlu0.c.b16.cont [6/8] %v3472, 128
        %3554 = vxpose.xlu0.c.b16.cont [7/8] %v3474, 128
        %3555 = vxpose.xlu0.c.b16.end [8/8] %v3476, 128
        %v3556 = vpop.trf.xlu0
        %v3557 = vpop.trf.xlu0
        %v3558 = vpop.trf.xlu0
        %v3559 = vpop.trf.xlu0
        %v3560 = vpop.trf.xlu0
        %v3561 = vpop.trf.xlu0
        %v3562 = vpop.trf.xlu0
        %v3563 = vpop.trf.xlu0
        %3564 = vxpose.xlu0.c.b16.start [1/8] %v3477, 128
        %3565 = vxpose.xlu0.c.b16.cont [2/8] %v3479, 128
        %3566 = vxpose.xlu0.c.b16.cont [3/8] %v3481, 128
        %3567 = vxpose.xlu0.c.b16.cont [4/8] %v3483, 128
        %3568 = vxpose.xlu0.c.b16.cont [5/8] %v3485, 128
        %3569 = vxpose.xlu0.c.b16.cont [6/8] %v3487, 128
        %3570 = vxpose.xlu0.c.b16.cont [7/8] %v3489, 128
        %3571 = vxpose.xlu0.c.b16.end [8/8] %v3491, 128
        %v3572 = vpop.trf.xlu0
        %v3573 = vpop.trf.xlu0
        %v3574 = vpop.trf.xlu0
        %v3575 = vpop.trf.xlu0
        %v3576 = vpop.trf.xlu0
        %v3577 = vpop.trf.xlu0
        %v3578 = vpop.trf.xlu0
        %v3579 = vpop.trf.xlu0
        %3580 = vxpose.xlu0.c.b16.start [1/8] %v3478, 128
        %3581 = vxpose.xlu0.c.b16.cont [2/8] %v3480, 128
        %3582 = vxpose.xlu0.c.b16.cont [3/8] %v3482, 128
        %3583 = vxpose.xlu0.c.b16.cont [4/8] %v3484, 128
        %3584 = vxpose.xlu0.c.b16.cont [5/8] %v3486, 128
        %3585 = vxpose.xlu0.c.b16.cont [6/8] %v3488, 128
        %3586 = vxpose.xlu0.c.b16.cont [7/8] %v3490, 128
        %3587 = vxpose.xlu0.c.b16.end [8/8] %v3492, 128
        %v3588 = vpop.trf.xlu0
        %v3589 = vpop.trf.xlu0
        %v3590 = vpop.trf.xlu0
        %v3591 = vpop.trf.xlu0
        %v3592 = vpop.trf.xlu0
        %v3593 = vpop.trf.xlu0
        %v3594 = vpop.trf.xlu0
        %v3595 = vpop.trf.xlu0
        %v3628 = vunpack.c.l.b16 %v3493
        %v3629 = vunpack.c.l.b16 %v3494
        %v3630 = vunpack.c.l.b16 %v3495
        %v3631 = vunpack.c.l.b16 %v3496
        %v3632 = vunpack.c.l.b16 %v3497
        %v3633 = vunpack.c.l.b16 %v3498
        %v3634 = vunpack.c.l.b16 %v3499
        %v3635 = vunpack.c.l.b16 %v3500
        %v3636 = vunpack.c.l.b16 %v3501
        %v3637 = vunpack.c.l.b16 %v3502
        %v3638 = vunpack.c.l.b16 %v3503
        %v3639 = vunpack.c.l.b16 %v3504
        %v3640 = vunpack.c.l.b16 %v3505
        %v3641 = vunpack.c.l.b16 %v3506
        %v3642 = vunpack.c.l.b16 %v3507
        %v3643 = vunpack.c.l.b16 %v3508
        %v3644 = vunpack.c.l.b16 %v3509
        %v3645 = vunpack.c.l.b16 %v3510
        %v3646 = vunpack.c.l.b16 %v3511
        %v3647 = vunpack.c.l.b16 %v3512
        %v3648 = vunpack.c.l.b16 %v3513
        %v3649 = vunpack.c.l.b16 %v3514
        %v3650 = vunpack.c.l.b16 %v3515
        %v3651 = vunpack.c.l.b16 %v3516
        %v3652 = vunpack.c.l.b16 %v3517
        %v3653 = vunpack.c.l.b16 %v3518
        %v3654 = vunpack.c.l.b16 %v3519
        %v3655 = vunpack.c.l.b16 %v3520
        %v3656 = vunpack.c.l.b16 %v3521
        %v3657 = vunpack.c.l.b16 %v3522
        %v3658 = vunpack.c.l.b16 %v3523
        %v3659 = vunpack.c.l.b16 %v3524
        %v3660 = vpack.c.b16 %v3629, %v3628
        %v3661 = vpack.c.b16 %v3631, %v3630
        %v3662 = vpack.c.b16 %v3633, %v3632
        %v3663 = vpack.c.b16 %v3635, %v3634
        %v3664 = vpack.c.b16 %v3637, %v3636
        %v3665 = vpack.c.b16 %v3639, %v3638
        %v3666 = vpack.c.b16 %v3641, %v3640
        %v3667 = vpack.c.b16 %v3643, %v3642
        %v3668 = vpack.c.b16 %v3645, %v3644
        %v3669 = vpack.c.b16 %v3647, %v3646
        %v3670 = vpack.c.b16 %v3649, %v3648
        %v3671 = vpack.c.b16 %v3651, %v3650
        %v3672 = vpack.c.b16 %v3653, %v3652
        %v3673 = vpack.c.b16 %v3655, %v3654
        %v3674 = vpack.c.b16 %v3657, %v3656
        %v3675 = vpack.c.b16 %v3659, %v3658
        %3692 = vmatprep.subr.bf16.mxu0 0
        %3693 = vmatpush1.bf16.msra.mxu0 %v3660
        %3694 = vmatprep.subr.bf16.mxu0 0
        %3695 = vmatpush1.bf16.msra.mxu0 %v3661
        %3696 = vmatprep.subr.bf16.mxu0 0
        %3697 = vmatpush1.bf16.msra.mxu0 %v3662
        %3698 = vmatprep.subr.bf16.mxu0 0
        %3699 = vmatpush1.bf16.msra.mxu0 %v3663
        %3700 = vmatprep.subr.bf16.mxu0 0
        %3701 = vmatpush1.bf16.msra.mxu0 %v3664
        %3702 = vmatprep.subr.bf16.mxu0 0
        %3703 = vmatpush1.bf16.msra.mxu0 %v3665
        %3704 = vmatprep.subr.bf16.mxu0 0
        %3705 = vmatpush1.bf16.msra.mxu0 %v3666
        %3706 = vmatprep.subr.bf16.mxu0 0
        %3707 = vmatpush1.bf16.msra.mxu0 %v3667
        %3708 = vmatprep.subr.bf16.mxu0 0
        %3709 = vmatpush1.bf16.msra.mxu0 %v3668
        %3710 = vmatprep.subr.bf16.mxu0 0
        %3711 = vmatpush1.bf16.msra.mxu0 %v3669
        %3712 = vmatprep.subr.bf16.mxu0 0
        %3713 = vmatpush1.bf16.msra.mxu0 %v3670
        %3714 = vmatprep.subr.bf16.mxu0 0
        %3715 = vmatpush1.bf16.msra.mxu0 %v3671
        %3716 = vmatprep.subr.bf16.mxu0 0
        %3717 = vmatpush1.bf16.msra.mxu0 %v3672
        %3718 = vmatprep.subr.bf16.mxu0 0
        %3719 = vmatpush1.bf16.msra.mxu0 %v3673
        %3720 = vmatprep.subr.bf16.mxu0 0
        %3721 = vmatpush1.bf16.msra.mxu0 %v3674
        %3722 = vmatprep.subr.bf16.mxu0 0
        %3723 = vmatpush1.bf16.msra.mxu0 %v3675
        %3724 = vmatprep.mubr.bf16.mxu0 %v3572
        %3725 = vmatmul.mubr.bf16.gmra.mrb[0].mxu0 %v3540
        %v3726 = vpop.f32.mrb[0].mxu0
        %v3727 = vadd.f32 %v3530, %v3726
        %v3728 = vpop.f32.mrb[0].mxu0
        %v3729 = vpop.f32.mrb[0].mxu0
        %v3730 = vadd.f32 %v3530, %v3729
        %v3731 = vpop.f32.mrb[0].mxu0
        %3732 = vmatprep.mubr.bf16.mxu0 %v3573
        %3733 = vmatmul.mubr.bf16.gmra.mrb[0].mxu0 %v3541
        %v3734 = vpop.f32.mrb[0].mxu0
        %v3735 = vadd.f32 %v3530, %v3734
        %v3736 = vpop.f32.mrb[0].mxu0
        %v3737 = vpop.f32.mrb[0].mxu0
        %v3738 = vadd.f32 %v3530, %v3737
        %v3739 = vpop.f32.mrb[0].mxu0
        %3740 = vmatprep.mubr.bf16.mxu0 %v3574
        %3741 = vmatmul.mubr.bf16.gmra.mrb[0].mxu0 %v3542
        %v3742 = vpop.f32.mrb[0].mxu0
        %v3743 = vadd.f32 %v3530, %v3742
        %v3744 = vpop.f32.mrb[0].mxu0
        %v3745 = vpop.f32.mrb[0].mxu0
        %v3746 = vadd.f32 %v3530, %v3745
        %v3747 = vpop.f32.mrb[0].mxu0
        %3748 = vmatprep.mubr.bf16.mxu0 %v3575
        %3749 = vmatmul.mubr.bf16.gmra.mrb[0].mxu0 %v3543
        %v3750 = vpop.f32.mrb[0].mxu0
        %v3751 = vadd.f32 %v3530, %v3750
        %v3752 = vpop.f32.mrb[0].mxu0
        %v3753 = vpop.f32.mrb[0].mxu0
        %v3754 = vadd.f32 %v3530, %v3753
        %v3755 = vpop.f32.mrb[0].mxu0
        %3756 = vmatprep.mubr.bf16.mxu0 %v3576
        %3757 = vmatmul.mubr.bf16.gmra.mrb[0].mxu0 %v3544
        %v3758 = vpop.f32.mrb[0].mxu0
        %v3759 = vadd.f32 %v3530, %v3758
        %v3760 = vpop.f32.mrb[0].mxu0
        %v3761 = vpop.f32.mrb[0].mxu0
        %v3762 = vadd.f32 %v3530, %v3761
        %v3763 = vpop.f32.mrb[0].mxu0
        %3764 = vmatprep.mubr.bf16.mxu0 %v3577
        %3765 = vmatmul.mubr.bf16.gmra.mrb[0].mxu0 %v3545
        %v3766 = vpop.f32.mrb[0].mxu0
        %v3767 = vadd.f32 %v3530, %v3766
        %v3768 = vpop.f32.mrb[0].mxu0
        %v3769 = vpop.f32.mrb[0].mxu0
        %v3770 = vadd.f32 %v3530, %v3769
        %v3771 = vpop.f32.mrb[0].mxu0
        %3772 = vmatprep.mubr.bf16.mxu0 %v3578
        %3773 = vmatmul.mubr.bf16.gmra.mrb[0].mxu0 %v3546
        %v3774 = vpop.f32.mrb[0].mxu0
        %v3775 = vadd.f32 %v3530, %v3774
        %v3776 = vpop.f32.mrb[0].mxu0
        %v3777 = vpop.f32.mrb[0].mxu0
        %v3778 = vadd.f32 %v3530, %v3777
        %v3779 = vpop.f32.mrb[0].mxu0
        %3780 = vmatprep.mubr.bf16.mxu0 %v3579
        %3781 = vmatmul.mubr.bf16.gmra.mrb[0].mxu0 %v3547
        %v3782 = vpop.f32.mrb[0].mxu0
        %v3783 = vadd.f32 %v3530, %v3782
        %v3784 = vpop.f32.mrb[0].mxu0
        %v3785 = vpop.f32.mrb[0].mxu0
        %v3786 = vadd.f32 %v3530, %v3785
        %v3787 = vpop.f32.mrb[0].mxu0
        %3788 = vmatprep.mubr.bf16.mxu0 %v3588
        %3789 = vmatmul.mubr.bf16.gmra.mrb[0].mxu0 %v3556
        %v3790 = vpop.f32.mrb[0].mxu0
        %v3791 = vadd.f32 %v3530, %v3790
        %v3792 = vpop.f32.mrb[0].mxu0
        %v3793 = vpop.f32.mrb[0].mxu0
        %v3794 = vadd.f32 %v3530, %v3793
        %v3795 = vpop.f32.mrb[0].mxu0
        %3796 = vmatprep.mubr.bf16.mxu0 %v3589
        %3797 = vmatmul.mubr.bf16.gmra.mrb[0].mxu0 %v3557
        %v3798 = vpop.f32.mrb[0].mxu0
        %v3799 = vadd.f32 %v3530, %v3798
        %v3800 = vpop.f32.mrb[0].mxu0
        %v3801 = vpop.f32.mrb[0].mxu0
        %v3802 = vadd.f32 %v3530, %v3801
        %v3803 = vpop.f32.mrb[0].mxu0
        %3804 = vmatprep.mubr.bf16.mxu0 %v3590
        %3805 = vmatmul.mubr.bf16.gmra.mrb[0].mxu0 %v3558
        %v3806 = vpop.f32.mrb[0].mxu0
        %v3807 = vadd.f32 %v3530, %v3806
        %v3808 = vpop.f32.mrb[0].mxu0
        %v3809 = vpop.f32.mrb[0].mxu0
        %v3810 = vadd.f32 %v3530, %v3809
        %v3811 = vpop.f32.mrb[0].mxu0
        %3812 = vmatprep.mubr.bf16.mxu0 %v3591
        %3813 = vmatmul.mubr.bf16.gmra.mrb[0].mxu0 %v3559
        %v3814 = vpop.f32.mrb[0].mxu0
        %v3815 = vadd.f32 %v3530, %v3814
        %v3816 = vpop.f32.mrb[0].mxu0
        %v3817 = vpop.f32.mrb[0].mxu0
        %v3818 = vadd.f32 %v3530, %v3817
        %v3819 = vpop.f32.mrb[0].mxu0
        %3820 = vmatprep.mubr.bf16.mxu0 %v3592
        %3821 = vmatmul.mubr.bf16.gmra.mrb[0].mxu0 %v3560
        %v3822 = vpop.f32.mrb[0].mxu0
        %v3823 = vadd.f32 %v3530, %v3822
        %v3824 = vpop.f32.mrb[0].mxu0
        %v3825 = vpop.f32.mrb[0].mxu0
        %v3826 = vadd.f32 %v3530, %v3825
        %v3827 = vpop.f32.mrb[0].mxu0
        %3828 = vmatprep.mubr.bf16.mxu0 %v3593
        %3829 = vmatmul.mubr.bf16.gmra.mrb[0].mxu0 %v3561
        %v3830 = vpop.f32.mrb[0].mxu0
        %v3831 = vadd.f32 %v3530, %v3830
        %v3832 = vpop.f32.mrb[0].mxu0
        %v3833 = vpop.f32.mrb[0].mxu0
        %v3834 = vadd.f32 %v3530, %v3833
        %v3835 = vpop.f32.mrb[0].mxu0
        %3836 = vmatprep.mubr.bf16.mxu0 %v3594
        %3837 = vmatmul.mubr.bf16.gmra.mrb[0].mxu0 %v3562
        %v3838 = vpop.f32.mrb[0].mxu0
        %v3839 = vadd.f32 %v3530, %v3838
        %v3840 = vpop.f32.mrb[0].mxu0
        %v3841 = vpop.f32.mrb[0].mxu0
        %v3842 = vadd.f32 %v3530, %v3841
        %v3843 = vpop.f32.mrb[0].mxu0
        %3844 = vmatprep.mubr.bf16.mxu0 %v3595
        %3845 = vmatmul.mubr.bf16.gmra.mrb[0].mxu0 %v3563
        %v3846 = vpop.f32.mrb[0].mxu0
        %v3847 = vadd.f32 %v3530, %v3846
        %v3848 = vpop.f32.mrb[0].mxu0
        %v3849 = vpop.f32.mrb[0].mxu0
        %v3850 = vadd.f32 %v3530, %v3849
        %v3851 = vpop.f32.mrb[0].mxu0
        %3852 = vdwg.mxu0
        %v3853 = vmax.f32 %v3727, 0.0
        %v3854 = vmax.f32 %v3730, 0.0
        %v3855 = vmax.f32 %v3735, 0.0
        %v3856 = vmax.f32 %v3738, 0.0
        %v3857 = vmax.f32 %v3743, 0.0
        %v3858 = vmax.f32 %v3746, 0.0
        %v3859 = vmax.f32 %v3751, 0.0
        %v3860 = vmax.f32 %v3754, 0.0
        %v3861 = vmax.f32 %v3759, 0.0
        %v3862 = vmax.f32 %v3762, 0.0
        %v3863 = vmax.f32 %v3767, 0.0
        %v3864 = vmax.f32 %v3770, 0.0
        %v3865 = vmax.f32 %v3775, 0.0
        %v3866 = vmax.f32 %v3778, 0.0
        %v3867 = vmax.f32 %v3783, 0.0
        %v3868 = vmax.f32 %v3786, 0.0
        %v3869 = vmax.f32 %v3791, 0.0
        %v3870 = vmax.f32 %v3794, 0.0
        %v3871 = vmax.f32 %v3799, 0.0
        %v3872 = vmax.f32 %v3802, 0.0
        %v3873 = vmax.f32 %v3807, 0.0
        %v3874 = vmax.f32 %v3810, 0.0
        %v3875 = vmax.f32 %v3815, 0.0
        %v3876 = vmax.f32 %v3818, 0.0
        %v3877 = vmax.f32 %v3823, 0.0
        %v3878 = vmax.f32 %v3826, 0.0
        %v3879 = vmax.f32 %v3831, 0.0
        %v3880 = vmax.f32 %v3834, 0.0
        %v3881 = vmax.f32 %v3839, 0.0
        %v3882 = vmax.f32 %v3842, 0.0
        %v3883 = vmax.f32 %v3847, 0.0
        %v3884 = vmax.f32 %v3850, 0.0
        %v3885 = vadd.f32 %v3853, %v3854
        %v3886 = vadd.f32 %v3885, %v3855
        %v3887 = vadd.f32 %v3886, %v3856
        %v3888 = vadd.f32 %v3887, %v3857
        %v3889 = vadd.f32 %v3888, %v3858
        %v3890 = vadd.f32 %v3889, %v3859
        %v3891 = vadd.f32 %v3890, %v3860
        %v3892 = vadd.f32 %v3891, %v3861
        %v3893 = vadd.f32 %v3892, %v3862
        %v3894 = vadd.f32 %v3893, %v3863
        %v3895 = vadd.f32 %v3894, %v3864
        %v3896 = vadd.f32 %v3895, %v3865
        %v3897 = vadd.f32 %v3896, %v3866
        %v3898 = vadd.f32 %v3897, %v3867
        %v3899 = vadd.f32 %v3898, %v3868
        %v3900 = vadd.f32 %v3899, %v3869
        %v3901 = vadd.f32 %v3900, %v3870
        %v3902 = vadd.f32 %v3901, %v3871
        %v3903 = vadd.f32 %v3902, %v3872
        %v3904 = vadd.f32 %v3903, %v3873
        %v3905 = vadd.f32 %v3904, %v3874
        %v3906 = vadd.f32 %v3905, %v3875
        %v3907 = vadd.f32 %v3906, %v3876
        %v3908 = vadd.f32 %v3907, %v3877
        %v3909 = vadd.f32 %v3908, %v3878
        %v3910 = vadd.f32 %v3909, %v3879
        %v3911 = vadd.f32 %v3910, %v3880
        %v3912 = vadd.f32 %v3911, %v3881
        %v3913 = vadd.f32 %v3912, %v3882
        %v3914 = vadd.f32 %v3913, %v3883
        %v3915 = vadd.f32 %v3914, %v3884
        %v3916 = vrot.slane %v3915, 4
        %v3917 = vadd.f32 %v3915, %v3916
        %v3918 = vrot.slane %v3917, 2
        %v3919 = vadd.f32 %v3917, %v3918
        %v3920 = vrot.slane %v3919, 1
        %v3921 = vadd.f32 %v3919, %v3920
        %v3922 = vmul.f32 %v3921, 0.00390625
        %3923 = vst [vmem:[#allocation2 + $0x6] sm:$0x1] %v3922
        %s3924 = scalar_lea.vmem %s226, 3584
        %v3925 = vld [vmem:[%s3924] sm:$0xff]
        %v3926 = vld [vmem:[%s3924 + $0x8] sm:$0xff]
        %v3927 = vld [vmem:[%s3924 + $0x10] sm:$0xff]
        %v3928 = vld [vmem:[%s3924 + $0x18] sm:$0xff]
        %v3929 = vld [vmem:[%s3924 + $0x20] sm:$0xff]
        %v3930 = vld [vmem:[%s3924 + $0x28] sm:$0xff]
        %v3931 = vld [vmem:[%s3924 + $0x30] sm:$0xff]
        %v3932 = vld [vmem:[%s3924 + $0x38] sm:$0xff]
        %v3933 = vld [vmem:[%s3924 + $0x40] sm:$0xff]
        %v3934 = vld [vmem:[%s3924 + $0x48] sm:$0xff]
        %v3935 = vld [vmem:[%s3924 + $0x50] sm:$0xff]
        %v3936 = vld [vmem:[%s3924 + $0x58] sm:$0xff]
        %v3937 = vld [vmem:[%s3924 + $0x60] sm:$0xff]
        %v3938 = vld [vmem:[%s3924 + $0x68] sm:$0xff]
        %v3939 = vld [vmem:[%s3924 + $0x70] sm:$0xff]
        %v3940 = vld [vmem:[%s3924 + $0x78] sm:$0xff]
        %v3941 = vld [vmem:[%s3924 + $0x80] sm:$0xff]
        %v3942 = vld [vmem:[%s3924 + $0x88] sm:$0xff]
        %v3943 = vld [vmem:[%s3924 + $0x90] sm:$0xff]
        %v3944 = vld [vmem:[%s3924 + $0x98] sm:$0xff]
        %v3945 = vld [vmem:[%s3924 + $0xa0] sm:$0xff]
        %v3946 = vld [vmem:[%s3924 + $0xa8] sm:$0xff]
        %v3947 = vld [vmem:[%s3924 + $0xb0] sm:$0xff]
        %v3948 = vld [vmem:[%s3924 + $0xb8] sm:$0xff]
        %v3949 = vld [vmem:[%s3924 + $0xc0] sm:$0xff]
        %v3950 = vld [vmem:[%s3924 + $0xc8] sm:$0xff]
        %v3951 = vld [vmem:[%s3924 + $0xd0] sm:$0xff]
        %v3952 = vld [vmem:[%s3924 + $0xd8] sm:$0xff]
        %v3953 = vld [vmem:[%s3924 + $0xe0] sm:$0xff]
        %v3954 = vld [vmem:[%s3924 + $0xe8] sm:$0xff]
        %v3955 = vld [vmem:[%s3924 + $0xf0] sm:$0xff]
        %v3956 = vld [vmem:[%s3924 + $0xf8] sm:$0xff]
        %v3957 = vld [vmem:[%s3924 + $0x100] sm:$0xff]
        %v3958 = vld [vmem:[%s3924 + $0x108] sm:$0xff]
        %v3959 = vld [vmem:[%s3924 + $0x110] sm:$0xff]
        %v3960 = vld [vmem:[%s3924 + $0x118] sm:$0xff]
        %v3961 = vld [vmem:[%s3924 + $0x120] sm:$0xff]
        %v3962 = vld [vmem:[%s3924 + $0x128] sm:$0xff]
        %v3963 = vld [vmem:[%s3924 + $0x130] sm:$0xff]
        %v3964 = vld [vmem:[%s3924 + $0x138] sm:$0xff]
        %v3965 = vld [vmem:[%s3924 + $0x140] sm:$0xff]
        %v3966 = vld [vmem:[%s3924 + $0x148] sm:$0xff]
        %v3967 = vld [vmem:[%s3924 + $0x150] sm:$0xff]
        %v3968 = vld [vmem:[%s3924 + $0x158] sm:$0xff]
        %v3969 = vld [vmem:[%s3924 + $0x160] sm:$0xff]
        %v3970 = vld [vmem:[%s3924 + $0x168] sm:$0xff]
        %v3971 = vld [vmem:[%s3924 + $0x170] sm:$0xff]
        %v3972 = vld [vmem:[%s3924 + $0x178] sm:$0xff]
        %v3973 = vld [vmem:[%s3924 + $0x180] sm:$0xff]
        %v3974 = vld [vmem:[%s3924 + $0x188] sm:$0xff]
        %v3975 = vld [vmem:[%s3924 + $0x190] sm:$0xff]
        %v3976 = vld [vmem:[%s3924 + $0x198] sm:$0xff]
        %v3977 = vld [vmem:[%s3924 + $0x1a0] sm:$0xff]
        %v3978 = vld [vmem:[%s3924 + $0x1a8] sm:$0xff]
        %v3979 = vld [vmem:[%s3924 + $0x1b0] sm:$0xff]
        %v3980 = vld [vmem:[%s3924 + $0x1b8] sm:$0xff]
        %v3981 = vld [vmem:[%s3924 + $0x1c0] sm:$0xff]
        %v3982 = vld [vmem:[%s3924 + $0x1c8] sm:$0xff]
        %v3983 = vld [vmem:[%s3924 + $0x1d0] sm:$0xff]
        %v3984 = vld [vmem:[%s3924 + $0x1d8] sm:$0xff]
        %v3985 = vld [vmem:[%s3924 + $0x1e0] sm:$0xff]
        %v3986 = vld [vmem:[%s3924 + $0x1e8] sm:$0xff]
        %v3987 = vld [vmem:[%s3924 + $0x1f0] sm:$0xff]
        %v3988 = vld [vmem:[%s3924 + $0x1f8] sm:$0xff]
        %v3989 = vpack.c.bf16 %v3927, %v3925
        %v3990 = vpack.c.bf16 %v3928, %v3926
        %v3991 = vpack.c.bf16 %v3931, %v3929
        %v3992 = vpack.c.bf16 %v3932, %v3930
        %v3993 = vpack.c.bf16 %v3935, %v3933
        %v3994 = vpack.c.bf16 %v3936, %v3934
        %v3995 = vpack.c.bf16 %v3939, %v3937
        %v3996 = vpack.c.bf16 %v3940, %v3938
        %v3997 = vpack.c.bf16 %v3943, %v3941
        %v3998 = vpack.c.bf16 %v3944, %v3942
        %v3999 = vpack.c.bf16 %v3947, %v3945
        %v4000 = vpack.c.bf16 %v3948, %v3946
        %v4001 = vpack.c.bf16 %v3951, %v3949
        %v4002 = vpack.c.bf16 %v3952, %v3950
        %v4003 = vpack.c.bf16 %v3955, %v3953
        %v4004 = vpack.c.bf16 %v3956, %v3954
        %v4005 = vpack.c.bf16 %v3959, %v3957
        %v4006 = vpack.c.bf16 %v3960, %v3958
        %v4007 = vpack.c.bf16 %v3963, %v3961
        %v4008 = vpack.c.bf16 %v3964, %v3962
        %v4009 = vpack.c.bf16 %v3967, %v3965
        %v4010 = vpack.c.bf16 %v3968, %v3966
        %v4011 = vpack.c.bf16 %v3971, %v3969
        %v4012 = vpack.c.bf16 %v3972, %v3970
        %v4013 = vpack.c.bf16 %v3975, %v3973
        %v4014 = vpack.c.bf16 %v3976, %v3974
        %v4015 = vpack.c.bf16 %v3979, %v3977
        %v4016 = vpack.c.bf16 %v3980, %v3978
        %v4017 = vpack.c.bf16 %v3983, %v3981
        %v4018 = vpack.c.bf16 %v3984, %v3982
        %v4019 = vpack.c.bf16 %v3987, %v3985
        %v4020 = vpack.c.bf16 %v3988, %v3986
        %v4021 = vld [vmem:[%s1] sm:$0xf]
        %v4022 = vld [vmem:[%s1 + $0x4] sm:$0xf]
        %v4023 = vld [vmem:[%s1 + $0x8] sm:$0xf]
        %v4024 = vld [vmem:[%s1 + $0xc] sm:$0xf]
        %v4025 = vld [vmem:[%s1 + $0x10] sm:$0xf]
        %v4026 = vld [vmem:[%s1 + $0x14] sm:$0xf]
        %v4027 = vld [vmem:[%s1 + $0x18] sm:$0xf]
        %v4028 = vld [vmem:[%s1 + $0x1c] sm:$0xf]
        %v4029 = vld [vmem:[%s1 + $0x20] sm:$0xf]
        %v4030 = vld [vmem:[%s1 + $0x24] sm:$0xf]
        %v4031 = vld [vmem:[%s1 + $0x28] sm:$0xf]
        %v4032 = vld [vmem:[%s1 + $0x2c] sm:$0xf]
        %v4033 = vld [vmem:[%s1 + $0x30] sm:$0xf]
        %v4034 = vld [vmem:[%s1 + $0x34] sm:$0xf]
        %v4035 = vld [vmem:[%s1 + $0x38] sm:$0xf]
        %v4036 = vld [vmem:[%s1 + $0x3c] sm:$0xf]
        %v4037 = vld [vmem:[%s1 + $0x40] sm:$0xf]
        %v4038 = vld [vmem:[%s1 + $0x44] sm:$0xf]
        %v4039 = vld [vmem:[%s1 + $0x48] sm:$0xf]
        %v4040 = vld [vmem:[%s1 + $0x4c] sm:$0xf]
        %v4041 = vld [vmem:[%s1 + $0x50] sm:$0xf]
        %v4042 = vld [vmem:[%s1 + $0x54] sm:$0xf]
        %v4043 = vld [vmem:[%s1 + $0x58] sm:$0xf]
        %v4044 = vld [vmem:[%s1 + $0x5c] sm:$0xf]
        %v4045 = vld [vmem:[%s1 + $0x60] sm:$0xf]
        %v4046 = vld [vmem:[%s1 + $0x64] sm:$0xf]
        %v4047 = vld [vmem:[%s1 + $0x68] sm:$0xf]
        %v4048 = vld [vmem:[%s1 + $0x6c] sm:$0xf]
        %v4049 = vld [vmem:[%s1 + $0x70] sm:$0xf]
        %v4050 = vld [vmem:[%s1 + $0x74] sm:$0xf]
        %v4051 = vld [vmem:[%s1 + $0x78] sm:$0xf]
        %v4052 = vld [vmem:[%s1 + $0x7c] sm:$0xf]
        %v4053 = vld [vmem:[%s2] sm:$0x1]
        %v4055 = vlaneseq
        %v4056 = vshrl.u32 %v4055, 7
        %v4057 = vsub.s32 0, %v4056
        %v4058 = vrot.slane %v4053, %v4057
        %4060 = vxpose.xlu0.c.b16.start [1/8] %v3989, 128
        %4061 = vxpose.xlu0.c.b16.cont [2/8] %v3991, 128
        %4062 = vxpose.xlu0.c.b16.cont [3/8] %v3993, 128
        %4063 = vxpose.xlu0.c.b16.cont [4/8] %v3995, 128
        %4064 = vxpose.xlu0.c.b16.cont [5/8] %v3997, 128
        %4065 = vxpose.xlu0.c.b16.cont [6/8] %v3999, 128
        %4066 = vxpose.xlu0.c.b16.cont [7/8] %v4001, 128
        %4067 = vxpose.xlu0.c.b16.end [8/8] %v4003, 128
        %v4068 = vpop.trf.xlu0
        %v4069 = vpop.trf.xlu0
        %v4070 = vpop.trf.xlu0
        %v4071 = vpop.trf.xlu0
        %v4072 = vpop.trf.xlu0
        %v4073 = vpop.trf.xlu0
        %v4074 = vpop.trf.xlu0
        %v4075 = vpop.trf.xlu0
        %4076 = vxpose.xlu0.c.b16.start [1/8] %v3990, 128
        %4077 = vxpose.xlu0.c.b16.cont [2/8] %v3992, 128
        %4078 = vxpose.xlu0.c.b16.cont [3/8] %v3994, 128
        %4079 = vxpose.xlu0.c.b16.cont [4/8] %v3996, 128
        %4080 = vxpose.xlu0.c.b16.cont [5/8] %v3998, 128
        %4081 = vxpose.xlu0.c.b16.cont [6/8] %v4000, 128
        %4082 = vxpose.xlu0.c.b16.cont [7/8] %v4002, 128
        %4083 = vxpose.xlu0.c.b16.end [8/8] %v4004, 128
        %v4084 = vpop.trf.xlu0
        %v4085 = vpop.trf.xlu0
        %v4086 = vpop.trf.xlu0
        %v4087 = vpop.trf.xlu0
        %v4088 = vpop.trf.xlu0
        %v4089 = vpop.trf.xlu0
        %v4090 = vpop.trf.xlu0
        %v4091 = vpop.trf.xlu0
        %4092 = vxpose.xlu0.c.b16.start [1/8] %v4005, 128
        %4093 = vxpose.xlu0.c.b16.cont [2/8] %v4007, 128
        %4094 = vxpose.xlu0.c.b16.cont [3/8] %v4009, 128
        %4095 = vxpose.xlu0.c.b16.cont [4/8] %v4011, 128
        %4096 = vxpose.xlu0.c.b16.cont [5/8] %v4013, 128
        %4097 = vxpose.xlu0.c.b16.cont [6/8] %v4015, 128
        %4098 = vxpose.xlu0.c.b16.cont [7/8] %v4017, 128
        %4099 = vxpose.xlu0.c.b16.end [8/8] %v4019, 128
        %v4100 = vpop.trf.xlu0
        %v4101 = vpop.trf.xlu0
        %v4102 = vpop.trf.xlu0
        %v4103 = vpop.trf.xlu0
        %v4104 = vpop.trf.xlu0
        %v4105 = vpop.trf.xlu0
        %v4106 = vpop.trf.xlu0
        %v4107 = vpop.trf.xlu0
        %4108 = vxpose.xlu0.c.b16.start [1/8] %v4006, 128
        %4109 = vxpose.xlu0.c.b16.cont [2/8] %v4008, 128
        %4110 = vxpose.xlu0.c.b16.cont [3/8] %v4010, 128
        %4111 = vxpose.xlu0.c.b16.cont [4/8] %v4012, 128
        %4112 = vxpose.xlu0.c.b16.cont [5/8] %v4014, 128
        %4113 = vxpose.xlu0.c.b16.cont [6/8] %v4016, 128
        %4114 = vxpose.xlu0.c.b16.cont [7/8] %v4018, 128
        %4115 = vxpose.xlu0.c.b16.end [8/8] %v4020, 128
        %v4116 = vpop.trf.xlu0
        %v4117 = vpop.trf.xlu0
        %v4118 = vpop.trf.xlu0
        %v4119 = vpop.trf.xlu0
        %v4120 = vpop.trf.xlu0
        %v4121 = vpop.trf.xlu0
        %v4122 = vpop.trf.xlu0
        %v4123 = vpop.trf.xlu0
        %v4156 = vunpack.c.l.b16 %v4021
        %v4157 = vunpack.c.l.b16 %v4022
        %v4158 = vunpack.c.l.b16 %v4023
        %v4159 = vunpack.c.l.b16 %v4024
        %v4160 = vunpack.c.l.b16 %v4025
        %v4161 = vunpack.c.l.b16 %v4026
        %v4162 = vunpack.c.l.b16 %v4027
        %v4163 = vunpack.c.l.b16 %v4028
        %v4164 = vunpack.c.l.b16 %v4029
        %v4165 = vunpack.c.l.b16 %v4030
        %v4166 = vunpack.c.l.b16 %v4031
        %v4167 = vunpack.c.l.b16 %v4032
        %v4168 = vunpack.c.l.b16 %v4033
        %v4169 = vunpack.c.l.b16 %v4034
        %v4170 = vunpack.c.l.b16 %v4035
        %v4171 = vunpack.c.l.b16 %v4036
        %v4172 = vunpack.c.l.b16 %v4037
        %v4173 = vunpack.c.l.b16 %v4038
        %v4174 = vunpack.c.l.b16 %v4039
        %v4175 = vunpack.c.l.b16 %v4040
        %v4176 = vunpack.c.l.b16 %v4041
        %v4177 = vunpack.c.l.b16 %v4042
        %v4178 = vunpack.c.l.b16 %v4043
        %v4179 = vunpack.c.l.b16 %v4044
        %v4180 = vunpack.c.l.b16 %v4045
        %v4181 = vunpack.c.l.b16 %v4046
        %v4182 = vunpack.c.l.b16 %v4047
        %v4183 = vunpack.c.l.b16 %v4048
        %v4184 = vunpack.c.l.b16 %v4049
        %v4185 = vunpack.c.l.b16 %v4050
        %v4186 = vunpack.c.l.b16 %v4051
        %v4187 = vunpack.c.l.b16 %v4052
        %v4188 = vpack.c.b16 %v4157, %v4156
        %v4189 = vpack.c.b16 %v4159, %v4158
        %v4190 = vpack.c.b16 %v4161, %v4160
        %v4191 = vpack.c.b16 %v4163, %v4162
        %v4192 = vpack.c.b16 %v4165, %v4164
        %v4193 = vpack.c.b16 %v4167, %v4166
        %v4194 = vpack.c.b16 %v4169, %v4168
        %v4195 = vpack.c.b16 %v4171, %v4170
        %v4196 = vpack.c.b16 %v4173, %v4172
        %v4197 = vpack.c.b16 %v4175, %v4174
        %v4198 = vpack.c.b16 %v4177, %v4176
        %v4199 = vpack.c.b16 %v4179, %v4178
        %v4200 = vpack.c.b16 %v4181, %v4180
        %v4201 = vpack.c.b16 %v4183, %v4182
        %v4202 = vpack.c.b16 %v4185, %v4184
        %v4203 = vpack.c.b16 %v4187, %v4186
        %4220 = vmatprep.subr.bf16.mxu0 0
        %4221 = vmatpush1.bf16.msra.mxu0 %v4188
        %4222 = vmatprep.subr.bf16.mxu0 0
        %4223 = vmatpush1.bf16.msra.mxu0 %v4189
        %4224 = vmatprep.subr.bf16.mxu0 0
        %4225 = vmatpush1.bf16.msra.mxu0 %v4190
        %4226 = vmatprep.subr.bf16.mxu0 0
        %4227 = vmatpush1.bf16.msra.mxu0 %v4191
        %4228 = vmatprep.subr.bf16.mxu0 0
        %4229 = vmatpush1.bf16.msra.mxu0 %v4192
        %4230 = vmatprep.subr.bf16.mxu0 0
        %4231 = vmatpush1.bf16.msra.mxu0 %v4193
        %4232 = vmatprep.subr.bf16.mxu0 0
        %4233 = vmatpush1.bf16.msra.mxu0 %v4194
        %4234 = vmatprep.subr.bf16.mxu0 0
        %4235 = vmatpush1.bf16.msra.mxu0 %v4195
        %4236 = vmatprep.subr.bf16.mxu0 0
        %4237 = vmatpush1.bf16.msra.mxu0 %v4196
        %4238 = vmatprep.subr.bf16.mxu0 0
        %4239 = vmatpush1.bf16.msra.mxu0 %v4197
        %4240 = vmatprep.subr.bf16.mxu0 0
        %4241 = vmatpush1.bf16.msra.mxu0 %v4198
        %4242 = vmatprep.subr.bf16.mxu0 0
        %4243 = vmatpush1.bf16.msra.mxu0 %v4199
        %4244 = vmatprep.subr.bf16.mxu0 0
        %4245 = vmatpush1.bf16.msra.mxu0 %v4200
        %4246 = vmatprep.subr.bf16.mxu0 0
        %4247 = vmatpush1.bf16.msra.mxu0 %v4201
        %4248 = vmatprep.subr.bf16.mxu0 0
        %4249 = vmatpush1.bf16.msra.mxu0 %v4202
        %4250 = vmatprep.subr.bf16.mxu0 0
        %4251 = vmatpush1.bf16.msra.mxu0 %v4203
        %4252 = vmatprep.mubr.bf16.mxu0 %v4100
        %4253 = vmatmul.mubr.bf16.gmra.mrb[0].mxu0 %v4068
        %v4254 = vpop.f32.mrb[0].mxu0
        %v4255 = vadd.f32 %v4058, %v4254
        %v4256 = vpop.f32.mrb[0].mxu0
        %v4257 = vpop.f32.mrb[0].mxu0
        %v4258 = vadd.f32 %v4058, %v4257
        %v4259 = vpop.f32.mrb[0].mxu0
        %4260 = vmatprep.mubr.bf16.mxu0 %v4101
        %4261 = vmatmul.mubr.bf16.gmra.mrb[0].mxu0 %v4069
        %v4262 = vpop.f32.mrb[0].mxu0
        %v4263 = vadd.f32 %v4058, %v4262
        %v4264 = vpop.f32.mrb[0].mxu0
        %v4265 = vpop.f32.mrb[0].mxu0
        %v4266 = vadd.f32 %v4058, %v4265
        %v4267 = vpop.f32.mrb[0].mxu0
        %4268 = vmatprep.mubr.bf16.mxu0 %v4102
        %4269 = vmatmul.mubr.bf16.gmra.mrb[0].mxu0 %v4070
        %v4270 = vpop.f32.mrb[0].mxu0
        %v4271 = vadd.f32 %v4058, %v4270
        %v4272 = vpop.f32.mrb[0].mxu0
        %v4273 = vpop.f32.mrb[0].mxu0
        %v4274 = vadd.f32 %v4058, %v4273
        %v4275 = vpop.f32.mrb[0].mxu0
        %4276 = vmatprep.mubr.bf16.mxu0 %v4103
        %4277 = vmatmul.mubr.bf16.gmra.mrb[0].mxu0 %v4071
        %v4278 = vpop.f32.mrb[0].mxu0
        %v4279 = vadd.f32 %v4058, %v4278
        %v4280 = vpop.f32.mrb[0].mxu0
        %v4281 = vpop.f32.mrb[0].mxu0
        %v4282 = vadd.f32 %v4058, %v4281
        %v4283 = vpop.f32.mrb[0].mxu0
        %4284 = vmatprep.mubr.bf16.mxu0 %v4104
        %4285 = vmatmul.mubr.bf16.gmra.mrb[0].mxu0 %v4072
        %v4286 = vpop.f32.mrb[0].mxu0
        %v4287 = vadd.f32 %v4058, %v4286
        %v4288 = vpop.f32.mrb[0].mxu0
        %v4289 = vpop.f32.mrb[0].mxu0
        %v4290 = vadd.f32 %v4058, %v4289
        %v4291 = vpop.f32.mrb[0].mxu0
        %4292 = vmatprep.mubr.bf16.mxu0 %v4105
        %4293 = vmatmul.mubr.bf16.gmra.mrb[0].mxu0 %v4073
        %v4294 = vpop.f32.mrb[0].mxu0
        %v4295 = vadd.f32 %v4058, %v4294
        %v4296 = vpop.f32.mrb[0].mxu0
        %v4297 = vpop.f32.mrb[0].mxu0
        %v4298 = vadd.f32 %v4058, %v4297
        %v4299 = vpop.f32.mrb[0].mxu0
        %4300 = vmatprep.mubr.bf16.mxu0 %v4106
        %4301 = vmatmul.mubr.bf16.gmra.mrb[0].mxu0 %v4074
        %v4302 = vpop.f32.mrb[0].mxu0
        %v4303 = vadd.f32 %v4058, %v4302
        %v4304 = vpop.f32.mrb[0].mxu0
        %v4305 = vpop.f32.mrb[0].mxu0
        %v4306 = vadd.f32 %v4058, %v4305
        %v4307 = vpop.f32.mrb[0].mxu0
        %4308 = vmatprep.mubr.bf16.mxu0 %v4107
        %4309 = vmatmul.mubr.bf16.gmra.mrb[0].mxu0 %v4075
        %v4310 = vpop.f32.mrb[0].mxu0
        %v4311 = vadd.f32 %v4058, %v4310
        %v4312 = vpop.f32.mrb[0].mxu0
        %v4313 = vpop.f32.mrb[0].mxu0
        %v4314 = vadd.f32 %v4058, %v4313
        %v4315 = vpop.f32.mrb[0].mxu0
        %4316 = vmatprep.mubr.bf16.mxu0 %v4116
        %4317 = vmatmul.mubr.bf16.gmra.mrb[0].mxu0 %v4084
        %v4318 = vpop.f32.mrb[0].mxu0
        %v4319 = vadd.f32 %v4058, %v4318
        %v4320 = vpop.f32.mrb[0].mxu0
        %v4321 = vpop.f32.mrb[0].mxu0
        %v4322 = vadd.f32 %v4058, %v4321
        %v4323 = vpop.f32.mrb[0].mxu0
        %4324 = vmatprep.mubr.bf16.mxu0 %v4117
        %4325 = vmatmul.mubr.bf16.gmra.mrb[0].mxu0 %v4085
        %v4326 = vpop.f32.mrb[0].mxu0
        %v4327 = vadd.f32 %v4058, %v4326
        %v4328 = vpop.f32.mrb[0].mxu0
        %v4329 = vpop.f32.mrb[0].mxu0
        %v4330 = vadd.f32 %v4058, %v4329
        %v4331 = vpop.f32.mrb[0].mxu0
        %4332 = vmatprep.mubr.bf16.mxu0 %v4118
        %4333 = vmatmul.mubr.bf16.gmra.mrb[0].mxu0 %v4086
        %v4334 = vpop.f32.mrb[0].mxu0
        %v4335 = vadd.f32 %v4058, %v4334
        %v4336 = vpop.f32.mrb[0].mxu0
        %v4337 = vpop.f32.mrb[0].mxu0
        %v4338 = vadd.f32 %v4058, %v4337
        %v4339 = vpop.f32.mrb[0].mxu0
        %4340 = vmatprep.mubr.bf16.mxu0 %v4119
        %4341 = vmatmul.mubr.bf16.gmra.mrb[0].mxu0 %v4087
        %v4342 = vpop.f32.mrb[0].mxu0
        %v4343 = vadd.f32 %v4058, %v4342
        %v4344 = vpop.f32.mrb[0].mxu0
        %v4345 = vpop.f32.mrb[0].mxu0
        %v4346 = vadd.f32 %v4058, %v4345
        %v4347 = vpop.f32.mrb[0].mxu0
        %4348 = vmatprep.mubr.bf16.mxu0 %v4120
        %4349 = vmatmul.mubr.bf16.gmra.mrb[0].mxu0 %v4088
        %v4350 = vpop.f32.mrb[0].mxu0
        %v4351 = vadd.f32 %v4058, %v4350
        %v4352 = vpop.f32.mrb[0].mxu0
        %v4353 = vpop.f32.mrb[0].mxu0
        %v4354 = vadd.f32 %v4058, %v4353
        %v4355 = vpop.f32.mrb[0].mxu0
        %4356 = vmatprep.mubr.bf16.mxu0 %v4121
        %4357 = vmatmul.mubr.bf16.gmra.mrb[0].mxu0 %v4089
        %v4358 = vpop.f32.mrb[0].mxu0
        %v4359 = vadd.f32 %v4058, %v4358
        %v4360 = vpop.f32.mrb[0].mxu0
        %v4361 = vpop.f32.mrb[0].mxu0
        %v4362 = vadd.f32 %v4058, %v4361
        %v4363 = vpop.f32.mrb[0].mxu0
        %4364 = vmatprep.mubr.bf16.mxu0 %v4122
        %4365 = vmatmul.mubr.bf16.gmra.mrb[0].mxu0 %v4090
        %v4366 = vpop.f32.mrb[0].mxu0
        %v4367 = vadd.f32 %v4058, %v4366
        %v4368 = vpop.f32.mrb[0].mxu0
        %v4369 = vpop.f32.mrb[0].mxu0
        %v4370 = vadd.f32 %v4058, %v4369
        %v4371 = vpop.f32.mrb[0].mxu0
        %4372 = vmatprep.mubr.bf16.mxu0 %v4123
        %4373 = vmatmul.mubr.bf16.gmra.mrb[0].mxu0 %v4091
        %v4374 = vpop.f32.mrb[0].mxu0
        %v4375 = vadd.f32 %v4058, %v4374
        %v4376 = vpop.f32.mrb[0].mxu0
        %v4377 = vpop.f32.mrb[0].mxu0
        %v4378 = vadd.f32 %v4058, %v4377
        %v4379 = vpop.f32.mrb[0].mxu0
        %4380 = vdwg.mxu0
        %v4381 = vmax.f32 %v4255, 0.0
        %v4382 = vmax.f32 %v4258, 0.0
        %v4383 = vmax.f32 %v4263, 0.0
        %v4384 = vmax.f32 %v4266, 0.0
        %v4385 = vmax.f32 %v4271, 0.0
        %v4386 = vmax.f32 %v4274, 0.0
        %v4387 = vmax.f32 %v4279, 0.0
        %v4388 = vmax.f32 %v4282, 0.0
        %v4389 = vmax.f32 %v4287, 0.0
        %v4390 = vmax.f32 %v4290, 0.0
        %v4391 = vmax.f32 %v4295, 0.0
        %v4392 = vmax.f32 %v4298, 0.0
        %v4393 = vmax.f32 %v4303, 0.0
        %v4394 = vmax.f32 %v4306, 0.0
        %v4395 = vmax.f32 %v4311, 0.0
        %v4396 = vmax.f32 %v4314, 0.0
        %v4397 = vmax.f32 %v4319, 0.0
        %v4398 = vmax.f32 %v4322, 0.0
        %v4399 = vmax.f32 %v4327, 0.0
        %v4400 = vmax.f32 %v4330, 0.0
        %v4401 = vmax.f32 %v4335, 0.0
        %v4402 = vmax.f32 %v4338, 0.0
        %v4403 = vmax.f32 %v4343, 0.0
        %v4404 = vmax.f32 %v4346, 0.0
        %v4405 = vmax.f32 %v4351, 0.0
        %v4406 = vmax.f32 %v4354, 0.0
        %v4407 = vmax.f32 %v4359, 0.0
        %v4408 = vmax.f32 %v4362, 0.0
        %v4409 = vmax.f32 %v4367, 0.0
        %v4410 = vmax.f32 %v4370, 0.0
        %v4411 = vmax.f32 %v4375, 0.0
        %v4412 = vmax.f32 %v4378, 0.0
        %v4413 = vadd.f32 %v4381, %v4382
        %v4414 = vadd.f32 %v4413, %v4383
        %v4415 = vadd.f32 %v4414, %v4384
        %v4416 = vadd.f32 %v4415, %v4385
        %v4417 = vadd.f32 %v4416, %v4386
        %v4418 = vadd.f32 %v4417, %v4387
        %v4419 = vadd.f32 %v4418, %v4388
        %v4420 = vadd.f32 %v4419, %v4389
        %v4421 = vadd.f32 %v4420, %v4390
        %v4422 = vadd.f32 %v4421, %v4391
        %v4423 = vadd.f32 %v4422, %v4392
        %v4424 = vadd.f32 %v4423, %v4393
        %v4425 = vadd.f32 %v4424, %v4394
        %v4426 = vadd.f32 %v4425, %v4395
        %v4427 = vadd.f32 %v4426, %v4396
        %v4428 = vadd.f32 %v4427, %v4397
        %v4429 = vadd.f32 %v4428, %v4398
        %v4430 = vadd.f32 %v4429, %v4399
        %v4431 = vadd.f32 %v4430, %v4400
        %v4432 = vadd.f32 %v4431, %v4401
        %v4433 = vadd.f32 %v4432, %v4402
        %v4434 = vadd.f32 %v4433, %v4403
        %v4435 = vadd.f32 %v4434, %v4404
        %v4436 = vadd.f32 %v4435, %v4405
        %v4437 = vadd.f32 %v4436, %v4406
        %v4438 = vadd.f32 %v4437, %v4407
        %v4439 = vadd.f32 %v4438, %v4408
        %v4440 = vadd.f32 %v4439, %v4409
        %v4441 = vadd.f32 %v4440, %v4410
        %v4442 = vadd.f32 %v4441, %v4411
        %v4443 = vadd.f32 %v4442, %v4412
        %v4444 = vrot.slane %v4443, 4
        %v4445 = vadd.f32 %v4443, %v4444
        %v4446 = vrot.slane %v4445, 2
        %v4447 = vadd.f32 %v4445, %v4446
        %v4448 = vrot.slane %v4447, 1
        %v4449 = vadd.f32 %v4447, %v4448
        %v4450 = vmul.f32 %v4449, 0.00390625
        %4451 = vst [vmem:[#allocation2 + $0x7] sm:$0x1] %v4450
        %v4452 = vld [vmem:[#allocation2] sm:$0xff]
        %v4453 = vld [vmem:[%s3] sm:$0xff]
        %v4454 = vld [vmem:[%s3 + $0x8] sm:$0xff]
        %v4455 = vld [vmem:[%s3 + $0x10] sm:$0xff]
        %v4456 = vld [vmem:[%s3 + $0x18] sm:$0xff]
        %v4457 = vld [vmem:[%s3 + $0x20] sm:$0xff]
        %v4458 = vld [vmem:[%s3 + $0x28] sm:$0xff]
        %v4459 = vld [vmem:[%s3 + $0x30] sm:$0xff]
        %v4460 = vld [vmem:[%s3 + $0x38] sm:$0xff]
        %v4461 = vld [vmem:[%s3 + $0x40] sm:$0xff]
        %v4462 = vld [vmem:[%s3 + $0x48] sm:$0xff]
        %v4463 = vld [vmem:[%s3 + $0x50] sm:$0xff]
        %v4464 = vld [vmem:[%s3 + $0x58] sm:$0xff]
        %v4465 = vld [vmem:[%s3 + $0x60] sm:$0xff]
        %v4466 = vld [vmem:[%s3 + $0x68] sm:$0xff]
        %v4467 = vld [vmem:[%s3 + $0x70] sm:$0xff]
        %v4468 = vld [vmem:[%s3 + $0x78] sm:$0xff]
        %v4469 = vld [vmem:[%s4] sm:$0x1]
        %v4471 = vlaneseq
        %v4472 = vshrl.u32 %v4471, 7
        %v4473 = vsub.s32 0, %v4472
        %v4474 = vrot.slane %v4469, %v4473
        %4476 = vmatprep.subr.mxu0 0.0
        %4477 = vmatpush1.msra.mxu0 %v4453
        %4478 = vmatprep.subr.mxu0 0.0
        %4479 = vmatpush1.msra.mxu0 %v4454
        %4480 = vmatprep.subr.mxu0 0.0
        %4481 = vmatpush1.msra.mxu0 %v4455
        %4482 = vmatprep.subr.mxu0 0.0
        %4483 = vmatpush1.msra.mxu0 %v4456
        %4484 = vmatprep.subr.mxu0 0.0
        %4485 = vmatpush1.msra.mxu0 %v4457
        %4486 = vmatprep.subr.mxu0 0.0
        %4487 = vmatpush1.msra.mxu0 %v4458
        %4488 = vmatprep.subr.mxu0 0.0
        %4489 = vmatpush1.msra.mxu0 %v4459
        %4490 = vmatprep.subr.mxu0 0.0
        %4491 = vmatpush1.msra.mxu0 %v4460
        %4492 = vmatprep.subr.mxu0 0.0
        %4493 = vmatpush1.msra.mxu0 %v4461
        %4494 = vmatprep.subr.mxu0 0.0
        %4495 = vmatpush1.msra.mxu0 %v4462
        %4496 = vmatprep.subr.mxu0 0.0
        %4497 = vmatpush1.msra.mxu0 %v4463
        %4498 = vmatprep.subr.mxu0 0.0
        %4499 = vmatpush1.msra.mxu0 %v4464
        %4500 = vmatprep.subr.mxu0 0.0
        %4501 = vmatpush1.msra.mxu0 %v4465
        %4502 = vmatprep.subr.mxu0 0.0
        %4503 = vmatpush1.msra.mxu0 %v4466
        %4504 = vmatprep.subr.mxu0 0.0
        %4505 = vmatpush1.msra.mxu0 %v4467
        %4506 = vmatprep.subr.mxu0 0.0
        %4507 = vmatpush1.msra.mxu0 %v4468
        %4508 = vmatprep.subr.mxu0 0.0
        %4509 = vmatpush1.msra.mxu0 0.0
        %4510 = vmatprep.subr.mxu0 0.0
        %4511 = vmatpush1.msra.mxu0 0.0
        %4512 = vmatprep.subr.mxu0 0.0
        %4513 = vmatpush1.msra.mxu0 0.0
        %4514 = vmatprep.subr.mxu0 0.0
        %4515 = vmatpush1.msra.mxu0 0.0
        %4516 = vmatprep.subr.mxu0 0.0
        %4517 = vmatpush1.msra.mxu0 0.0
        %4518 = vmatprep.subr.mxu0 0.0
        %4519 = vmatpush1.msra.mxu0 0.0
        %4520 = vmatprep.subr.mxu0 0.0
        %4521 = vmatpush1.msra.mxu0 0.0
        %4522 = vmatprep.subr.mxu0 0.0
        %4523 = vmatpush1.msra.mxu0 0.0
        %4524 = vmatprep.subr.mxu0 0.0
        %4525 = vmatpush1.msra.mxu0 0.0
        %4526 = vmatprep.subr.mxu0 0.0
        %4527 = vmatpush1.msra.mxu0 0.0
        %4528 = vmatprep.subr.mxu0 0.0
        %4529 = vmatpush1.msra.mxu0 0.0
        %4530 = vmatprep.subr.mxu0 0.0
        %4531 = vmatpush1.msra.mxu0 0.0
        %4532 = vmatprep.subr.mxu0 0.0
        %4533 = vmatpush1.msra.mxu0 0.0
        %4534 = vmatprep.subr.mxu0 0.0
        %4535 = vmatpush1.msra.mxu0 0.0
        %4536 = vmatprep.subr.mxu0 0.0
        %4537 = vmatpush1.msra.mxu0 0.0
        %4538 = vmatprep.subr.mxu0 0.0
        %4539 = vmatpush1.msra.mxu0 0.0
        %4540 = vmatprep.mubr.f32.mxu0 0.0
        %4541 = vmatmul.mubr.f32.gmra.mrb[0].mxu0 %v4452
        %v4542 = vpop.f32.mrb[0].mxu0
        %v4543 = vadd.f32 %v4474, %v4542
        %v4544 = vpop.f32.mrb[0].mxu0
        %4545 = vdwg.mxu0
        %4546 = vst [vmem:[%s220] sm:$0xff] %v4543
        %s4547 = sand.u32 %s137, 1
        %s4548 = scalar_lea.sflag [#allocation4], %s4547
        %s4549 = sand.u32 %s137, 1
        %s4550 = smul.addr %s4549, 8
        %s4551 = scalar_lea.vmem [#allocation3], %s4550
        // Predicated region
        $region41: #{birdnet_forward.1} parent=39 // pred_check
          %p4552 = pneg %p147
        $region42: #{birdnet_forward.1} parent=39 // pred_check_branch
          %4554 = sbr.rel (%p4552) target = $region44
        $region43: #{birdnet_forward.1} parent=39 // pred_region
          %s4556 = ssub.s32 128, 128
          %4557 = vsyncadd %s4548, %s4556
          %s4558 = smul.addr %s19, 128
          %s4559 = scalar_lea.hbm %s5, %s4558
          %s4561 = sshll.u32 %s4551, 4
          %s4562 = int_to_ptr.vmem [resolvable:$true] %s4561
          %4564 = dma.vmem_to_hbm [thread:$0]  %s4562, 128, %s4559, %s4548
        $region44: #{birdnet_forward.1} parent=39 // pred_fallthru
          _
      $region40: #{birdnet_forward.1} parent=5 // pred_fallthru
        _
      %p4565 = scmp.le.s32.totalorder 2, %s14
      // Predicated region
      $region45: #{birdnet_forward.1} parent=5 // pred_check
        %p4566 = pneg %p4565
      $region46: #{birdnet_forward.1} parent=5 // pred_check_branch
        %4568 = sbr.rel (%p4566) target = $region48
      $region47: #{birdnet_forward.1} parent=5 // pred_region
        %s4569 = ssub.s32 %s14, 2
        // Predicated region
        $region49: #{birdnet_forward.1} parent=47 // pred_check
          %p4570 = pneg %p153
        $region50: #{birdnet_forward.1} parent=47 // pred_check_branch
          %4572 = sbr.rel (%p4570) target = $region52
        $region51: #{birdnet_forward.1} parent=47 // pred_region
          %s4573 = sand.u32 %s138, 1
          %s4574 = scalar_lea.sflag [#allocation4], %s4573
          %s4575 = sand.u32 %s138, 1
          %s4576 = smul.addr %s4575, 8
          %s4577 = scalar_lea.vmem [#allocation3], %s4576
          %4578 = dma.done %s4574, 128
        $region52: #{birdnet_forward.1} parent=47 // pred_fallthru
          _
      $region48: #{birdnet_forward.1} parent=5 // pred_fallthru
        _
    $region6: #{birdnet_forward.1} parent=1 // loop_footer
      %s18 = sadd.s32 1, %s14
    $region7: #{birdnet_forward.1} parent=1 // loop_footer_branch
      %13 = sbr.rel target = $region3
    $region8: #{birdnet_forward.1} parent=1 // loop_exit
      _
    %4579 = vsyncpa [#allocation4], 1
    %s4580 = scalar_lea.sflag [#allocation4], 1
    %4581 = vsyncpa %s4580, 1

</llo_original>
